<compile_context>
chip_gen: v6e
topology: v6e:2x2x1
jax: 0.10.0
libtpu: 0.0.40
codegen_flags: <defaults>
</compile_context>

<pallas_src>
import functools

import jax
import jax.numpy as jnp
from jax import lax
from jax.experimental import pallas as pl
from jax.experimental.pallas import tpu as pltpu


# ----------------------------- Pallas kernel --------------------------------

def _conv_bn_relu_kernel(x_ref, w_ref, shift_ref, o_ref, *,
                         kh, kw, stride, wp, oh, ow, relu):
    # x_ref:     (Cin, L)            padded image, flat spatial (row pitch wp)
    # w_ref:     (KH*KW, Cout, Cin)  per-tap weights, BN scale already folded
    # shift_ref: (Cout, 1)           folded BN shift = beta - mean * scale
    # o_ref:     (Cout, OH, OW)      NCHW output block (batch dim squeezed)
    cout = o_ref.shape[0]
    n_lanes = oh * wp                       # padded-pitch accumulator width

    # Accumulate in f32; Cout on sublanes, spatial on lanes (lane-dense).
    acc = jnp.zeros((cout, n_lanes), dtype=jnp.float32)
    for dh in range(kh):                    # static unroll over kernel taps
        for dw in range(kw):
            off = dh * wp + dw
            if stride == 1:
                patch = x_ref[:, pl.ds(off, n_lanes)]            # (Cin, OH*Wp)
            else:
                patch = x_ref[:, pl.ds(off, n_lanes, stride)]    # strided lanes
            acc += jnp.dot(w_ref[dh * kw + dw], patch,
                           preferred_element_type=jnp.float32)

    y = acc + shift_ref[...]                # inference BN shift (scale folded)
    if relu:
        y = jnp.maximum(y, 0.0)
    y = y.astype(o_ref.dtype)

    # Compact the padded-pitch accumulator (row pitch wp) into the dense
    # (Cout, OH, OW) output block; per-row static slices + stores (no HBM
    # round trip, lane-dense rows).
    for oy in range(oh):
        o_ref[:, oy, :] = y[:, oy * wp:oy * wp + ow]


# ------------------------------- wrappers ------------------------------------

def prepare_params(torch_params, eps=1e-5, compute_dtype=jnp.float32):
    """One-time weight re-layout + BN folding (outside the hot path)."""
    w = torch_params["conv_weight"]                       # (Cout, Cin, KH, KW)
    cout, cin, kh, kw = w.shape
    scale = torch_params["bn_weight"] / jnp.sqrt(torch_params["bn_running_var"] + eps)
    shift = torch_params["bn_bias"] - torch_params["bn_running_mean"] * scale
    # Fold BN scale into the conv weights (in f32, cast afterwards).
    w_folded = w.astype(jnp.float32) * scale[:, None, None, None]
    # (Cout, Cin, KH, KW) -> (KH*KW, Cout, Cin): one (Cout, Cin) matrix per tap.
    w_taps = jnp.transpose(w_folded, (2, 3, 0, 1)).reshape(kh * kw, cout, cin)
    return {
        "weight_taps": w_taps.astype(compute_dtype),      # (KH*KW, Cout, Cin)
        "bn_shift": shift.reshape(cout, 1).astype(jnp.float32),
        "kernel_size": kh,
    }


def conv2d_bn_relu(x, params, *, kernel_size, stride=1, padding=0, relu=True,
                   dilation=1, groups=1, vmem_limit_bytes=None):
    assert dilation == 1, "TODO(synk): dilation not supported"
    assert groups == 1, "TODO(synk): grouped conv not supported"
    assert stride >= 1 and padding >= 0

    N, Cin, H, W = x.shape
    KH = KW = kernel_size
    w_taps = params["weight_taps"]                        # (KH*KW, Cout, Cin)
    assert w_taps.shape[0] == KH * KW and w_taps.shape[2] == Cin
    Cout = w_taps.shape[1]

    OH = (H + 2 * padding - KH) // stride + 1
    OW = (W + 2 * padding - KW) // stride + 1
    Wp = W + 2 * padding
    # `stride` extra zero rows at the bottom let every tap read a uniform
    # (Cin, OH*Wp) slice without ever indexing past the end of the buffer.
    Hp = H + 2 * padding + stride
    L = Hp * Wp

    # Single fused zero-pad (one HBM pass, no transposes); flat reshape is free.
    xp = jnp.pad(x, ((0, 0), (0, 0),
                     (padding, padding + stride), (padding, padding)))
    x_flat = xp.reshape(N, Cin, L).astype(w_taps.dtype)

    kernel = functools.partial(_conv_bn_relu_kernel, kh=KH, kw=KW,
                               stride=stride, wp=Wp, oh=OH, ow=OW, relu=relu)

    cp_kwargs = dict(dimension_semantics=("parallel",))
    if vmem_limit_bytes is not None:
        cp_kwargs["vmem_limit_bytes"] = vmem_limit_bytes

    # TODO(synk): add a second grid axis over output-row tiles (with halo rows
    # brought in by a manual DMA from a pl.ANY input) before running full-size
    # MVS feature maps — a whole image per step will not fit v7x VMEM.
    out = pl.pallas_call(
        kernel,
        out_shape=jax.ShapeDtypeStruct((N, Cout, OH, OW), jnp.float32),
        grid_spec=pltpu.PrefetchScalarGridSpec(
            num_scalar_prefetch=0,
            grid=(N,),
            in_specs=[
                pl.BlockSpec((None, Cin, L), lambda n: (n, 0, 0)),
                pl.BlockSpec((KH * KW, Cout, Cin), lambda n: (0, 0, 0)),
                pl.BlockSpec((Cout, 1), lambda n: (0, 0)),
            ],
            out_specs=pl.BlockSpec((None, Cout, OH, OW), lambda n: (n, 0, 0, 0)),
        ),
        compiler_params=pltpu.CompilerParams(**cp_kwargs),
    )(x_flat, w_taps, params["bn_shift"])
    return out                                            # NCHW, no transpose


# ------------------------------ reference ------------------------------------

def reference(x, torch_params, *, stride, padding, relu, eps=1e-5):
    w = torch_params["conv_weight"]                       # (Cout, Cin, KH, KW)
    y = lax.conv_general_dilated(
        x, w, window_strides=(stride, stride),
        padding=[(padding, padding), (padding, padding)],
        dimension_numbers=("NCHW", "OIHW", "NCHW"))
    gamma = torch_params["bn_weight"][None, :, None, None]
    beta = torch_params["bn_bias"][None, :, None, None]
    mean = torch_params["bn_running_mean"][None, :, None, None]
    var = torch_params["bn_running_var"][None, :, None, None]
    y = (y - mean) / jnp.sqrt(var + eps) * gamma + beta
    if relu:
        y = jnp.maximum(y, 0.0)
    return y


# --------------------------------- main ---------------------------------------

if __name__ == "__main__":
    # Conv2d(in_channels=4, out_channels=16, kernel_size=3, stride=1, padding=1)
    N, Cin, H, W = 2, 4, 16, 16
    Cout, K = 16, 3

    key = jax.random.PRNGKey(0)
    kx, kw_, kg, kb, km, kv = jax.random.split(key, 6)
    x = jax.random.normal(kx, (N, Cin, H, W), dtype=jnp.float32)
    torch_params = {
        "conv_weight": jax.random.normal(kw_, (Cout, Cin, K, K), jnp.float32) * 0.1,
        "bn_weight": jax.random.uniform(kg, (Cout,), jnp.float32, 0.5, 1.5),
        "bn_bias": jax.random.normal(kb, (Cout,), jnp.float32) * 0.1,
        "bn_running_mean": jax.random.normal(km, (Cout,), jnp.float32) * 0.1,
        "bn_running_var": jax.random.uniform(kv, (Cout,), jnp.float32, 0.5, 1.5),
    }

    params = prepare_params(torch_params)     # one-time relayout + BN folding

    # Case 1: stride=1, padding=1, relu=True (the common MVS config).
    out = conv2d_bn_relu(x, params, kernel_size=K, stride=1, padding=1, relu=True)
    out = jax.block_until_ready(out)
    ref = reference(x, torch_params, stride=1, padding=1, relu=True)
    assert out.shape == (N, Cout, H, W), out.shape
    assert jnp.allclose(out, ref, rtol=1e-3, atol=1e-3), \
        float(jnp.max(jnp.abs(out - ref)))

    # Case 2: padding=0, relu=False (exercises the no-pad / no-ReLU path).
    out2 = conv2d_bn_relu(x, params, kernel_size=K, stride=1, padding=0, relu=False)
    out2 = jax.block_until_ready(out2)
    ref2 = reference(x, torch_params, stride=1, padding=0, relu=False)
    assert out2.shape == (N, Cout, H - K + 1, W - K + 1), out2.shape
    assert jnp.allclose(out2, ref2, rtol=1e-3, atol=1e-3), \
        float(jnp.max(jnp.abs(out2 - ref2)))

    print("KERNEL_OK")
</pallas_src>

<mosaic_0001>
module attributes {stable_mosaic.version = 11 : i64} {
  func.func @_conv_bn_relu_kernel(%arg0: i32, %arg1: memref<1x4x342xf32, #tpu.memory_space<vmem>>, %arg2: memref<9x16x4xf32, #tpu.memory_space<vmem>>, %arg3: memref<16x1xf32, #tpu.memory_space<vmem>>, %arg4: memref<1x16x16x16xf32, #tpu.memory_space<vmem>>) attributes {dimension_semantics = [#tpu.dimension_semantics<parallel>], iteration_bounds = array<i64: 2>, scalar_prefetch = 0 : i64, scratch_operands = 0 : i64, tpu.core_type = #tpu.core_type<tc>, window_params = [{transform_indices = @transform_0, window_bounds = array<i64: 1, 4, 342>}, {pipeline_mode = #tpu.pipeline_mode<synchronous>, transform_indices = @transform_1, window_bounds = array<i64: 9, 16, 4>}, {pipeline_mode = #tpu.pipeline_mode<synchronous>, transform_indices = @transform_2, window_bounds = array<i64: 16, 1>}, {transform_indices = @transform_3, window_bounds = array<i64: 1, 16, 16, 16>}]} {
    %cst = arith.constant 0.000000e+00 : f32
    %0 = vector.broadcast %cst : f32 to vector<16x288xf32>
    %c0 = arith.constant 0 : index
    %c0_0 = arith.constant 0 : index
    %c0_1 = arith.constant 0 : index
    %1 = vector.load %arg1[%c0, %c0_0, %c0_1] : memref<1x4x342xf32, #tpu.memory_space<vmem>>, vector<1x4x288xf32>
    %2 = vector.shape_cast %1 : vector<1x4x288xf32> to vector<4x288xf32>
    %c0_2 = arith.constant 0 : index
    %c0_3 = arith.constant 0 : index
    %c0_4 = arith.constant 0 : index
    %3 = vector.load %arg2[%c0_2, %c0_3, %c0_4] : memref<9x16x4xf32, #tpu.memory_space<vmem>>, vector<1x16x4xf32>
    %4 = vector.shape_cast %3 : vector<1x16x4xf32> to vector<16x4xf32>
    %cst_5 = arith.constant dense<0.000000e+00> : vector<16x288xf32>
    %5 = tpu.matmul %4, %2, %cst_5 {dimension_numbers = #tpu.dot_dimension_numbers<[1], [0], [0], [1], [0, 0, 1, 1], [], []>} : vector<16x4xf32>, vector<4x288xf32>, vector<16x288xf32> -> vector<16x288xf32>
    %6 = arith.addf %0, %5 : vector<16x288xf32>
    %c0_6 = arith.constant 0 : index
    %c0_7 = arith.constant 0 : index
    %c1 = arith.constant 1 : index
    %7 = vector.load %arg1[%c0_6, %c0_7, %c1] : memref<1x4x342xf32, #tpu.memory_space<vmem>>, vector<1x4x288xf32>
    %8 = vector.shape_cast %7 : vector<1x4x288xf32> to vector<4x288xf32>
    %c1_8 = arith.constant 1 : index
    %c0_9 = arith.constant 0 : index
    %c0_10 = arith.constant 0 : index
    %9 = vector.load %arg2[%c1_8, %c0_9, %c0_10] : memref<9x16x4xf32, #tpu.memory_space<vmem>>, vector<1x16x4xf32>
    %10 = vector.shape_cast %9 : vector<1x16x4xf32> to vector<16x4xf32>
    %cst_11 = arith.constant dense<0.000000e+00> : vector<16x288xf32>
    %11 = tpu.matmul %10, %8, %cst_11 {dimension_numbers = #tpu.dot_dimension_numbers<[1], [0], [0], [1], [0, 0, 1, 1], [], []>} : vector<16x4xf32>, vector<4x288xf32>, vector<16x288xf32> -> vector<16x288xf32>
    %12 = arith.addf %6, %11 : vector<16x288xf32>
    %c0_12 = arith.constant 0 : index
    %c0_13 = arith.constant 0 : index
    %c2 = arith.constant 2 : index
    %13 = vector.load %arg1[%c0_12, %c0_13, %c2] : memref<1x4x342xf32, #tpu.memory_space<vmem>>, vector<1x4x288xf32>
    %14 = vector.shape_cast %13 : vector<1x4x288xf32> to vector<4x288xf32>
    %c2_14 = arith.constant 2 : index
    %c0_15 = arith.constant 0 : index
    %c0_16 = arith.constant 0 : index
    %15 = vector.load %arg2[%c2_14, %c0_15, %c0_16] : memref<9x16x4xf32, #tpu.memory_space<vmem>>, vector<1x16x4xf32>
    %16 = vector.shape_cast %15 : vector<1x16x4xf32> to vector<16x4xf32>
    %cst_17 = arith.constant dense<0.000000e+00> : vector<16x288xf32>
    %17 = tpu.matmul %16, %14, %cst_17 {dimension_numbers = #tpu.dot_dimension_numbers<[1], [0], [0], [1], [0, 0, 1, 1], [], []>} : vector<16x4xf32>, vector<4x288xf32>, vector<16x288xf32> -> vector<16x288xf32>
    %18 = arith.addf %12, %17 : vector<16x288xf32>
    %c0_18 = arith.constant 0 : index
    %c0_19 = arith.constant 0 : index
    %c18 = arith.constant 18 : index
    %19 = vector.load %arg1[%c0_18, %c0_19, %c18] : memref<1x4x342xf32, #tpu.memory_space<vmem>>, vector<1x4x288xf32>
    %20 = vector.shape_cast %19 : vector<1x4x288xf32> to vector<4x288xf32>
    %c3 = arith.constant 3 : index
    %c0_20 = arith.constant 0 : index
    %c0_21 = arith.constant 0 : index
    %21 = vector.load %arg2[%c3, %c0_20, %c0_21] : memref<9x16x4xf32, #tpu.memory_space<vmem>>, vector<1x16x4xf32>
    %22 = vector.shape_cast %21 : vector<1x16x4xf32> to vector<16x4xf32>
    %cst_22 = arith.constant dense<0.000000e+00> : vector<16x288xf32>
    %23 = tpu.matmul %22, %20, %cst_22 {dimension_numbers = #tpu.dot_dimension_numbers<[1], [0], [0], [1], [0, 0, 1, 1], [], []>} : vector<16x4xf32>, vector<4x288xf32>, vector<16x288xf32> -> vector<16x288xf32>
    %24 = arith.addf %18, %23 : vector<16x288xf32>
    %c0_23 = arith.constant 0 : index
    %c0_24 = arith.constant 0 : index
    %c19 = arith.constant 19 : index
    %25 = vector.load %arg1[%c0_23, %c0_24, %c19] : memref<1x4x342xf32, #tpu.memory_space<vmem>>, vector<1x4x288xf32>
    %26 = vector.shape_cast %25 : vector<1x4x288xf32> to vector<4x288xf32>
    %c4 = arith.constant 4 : index
    %c0_25 = arith.constant 0 : index
    %c0_26 = arith.constant 0 : index
    %27 = vector.load %arg2[%c4, %c0_25, %c0_26] : memref<9x16x4xf32, #tpu.memory_space<vmem>>, vector<1x16x4xf32>
    %28 = vector.shape_cast %27 : vector<1x16x4xf32> to vector<16x4xf32>
    %cst_27 = arith.constant dense<0.000000e+00> : vector<16x288xf32>
    %29 = tpu.matmul %28, %26, %cst_27 {dimension_numbers = #tpu.dot_dimension_numbers<[1], [0], [0], [1], [0, 0, 1, 1], [], []>} : vector<16x4xf32>, vector<4x288xf32>, vector<16x288xf32> -> vector<16x288xf32>
    %30 = arith.addf %24, %29 : vector<16x288xf32>
    %c0_28 = arith.constant 0 : index
    %c0_29 = arith.constant 0 : index
    %c20 = arith.constant 20 : index
    %31 = vector.load %arg1[%c0_28, %c0_29, %c20] : memref<1x4x342xf32, #tpu.memory_space<vmem>>, vector<1x4x288xf32>
    %32 = vector.shape_cast %31 : vector<1x4x288xf32> to vector<4x288xf32>
    %c5 = arith.constant 5 : index
    %c0_30 = arith.constant 0 : index
    %c0_31 = arith.constant 0 : index
    %33 = vector.load %arg2[%c5, %c0_30, %c0_31] : memref<9x16x4xf32, #tpu.memory_space<vmem>>, vector<1x16x4xf32>
    %34 = vector.shape_cast %33 : vector<1x16x4xf32> to vector<16x4xf32>
    %cst_32 = arith.constant dense<0.000000e+00> : vector<16x288xf32>
    %35 = tpu.matmul %34, %32, %cst_32 {dimension_numbers = #tpu.dot_dimension_numbers<[1], [0], [0], [1], [0, 0, 1, 1], [], []>} : vector<16x4xf32>, vector<4x288xf32>, vector<16x288xf32> -> vector<16x288xf32>
    %36 = arith.addf %30, %35 : vector<16x288xf32>
    %c0_33 = arith.constant 0 : index
    %c0_34 = arith.constant 0 : index
    %c36 = arith.constant 36 : index
    %37 = vector.load %arg1[%c0_33, %c0_34, %c36] : memref<1x4x342xf32, #tpu.memory_space<vmem>>, vector<1x4x288xf32>
    %38 = vector.shape_cast %37 : vector<1x4x288xf32> to vector<4x288xf32>
    %c6 = arith.constant 6 : index
    %c0_35 = arith.constant 0 : index
    %c0_36 = arith.constant 0 : index
    %39 = vector.load %arg2[%c6, %c0_35, %c0_36] : memref<9x16x4xf32, #tpu.memory_space<vmem>>, vector<1x16x4xf32>
    %40 = vector.shape_cast %39 : vector<1x16x4xf32> to vector<16x4xf32>
    %cst_37 = arith.constant dense<0.000000e+00> : vector<16x288xf32>
    %41 = tpu.matmul %40, %38, %cst_37 {dimension_numbers = #tpu.dot_dimension_numbers<[1], [0], [0], [1], [0, 0, 1, 1], [], []>} : vector<16x4xf32>, vector<4x288xf32>, vector<16x288xf32> -> vector<16x288xf32>
    %42 = arith.addf %36, %41 : vector<16x288xf32>
    %c0_38 = arith.constant 0 : index
    %c0_39 = arith.constant 0 : index
    %c37 = arith.constant 37 : index
    %43 = vector.load %arg1[%c0_38, %c0_39, %c37] : memref<1x4x342xf32, #tpu.memory_space<vmem>>, vector<1x4x288xf32>
    %44 = vector.shape_cast %43 : vector<1x4x288xf32> to vector<4x288xf32>
    %c7 = arith.constant 7 : index
    %c0_40 = arith.constant 0 : index
    %c0_41 = arith.constant 0 : index
    %45 = vector.load %arg2[%c7, %c0_40, %c0_41] : memref<9x16x4xf32, #tpu.memory_space<vmem>>, vector<1x16x4xf32>
    %46 = vector.shape_cast %45 : vector<1x16x4xf32> to vector<16x4xf32>
    %cst_42 = arith.constant dense<0.000000e+00> : vector<16x288xf32>
    %47 = tpu.matmul %46, %44, %cst_42 {dimension_numbers = #tpu.dot_dimension_numbers<[1], [0], [0], [1], [0, 0, 1, 1], [], []>} : vector<16x4xf32>, vector<4x288xf32>, vector<16x288xf32> -> vector<16x288xf32>
    %48 = arith.addf %42, %47 : vector<16x288xf32>
    %c0_43 = arith.constant 0 : index
    %c0_44 = arith.constant 0 : index
    %c38 = arith.constant 38 : index
    %49 = vector.load %arg1[%c0_43, %c0_44, %c38] : memref<1x4x342xf32, #tpu.memory_space<vmem>>, vector<1x4x288xf32>
    %50 = vector.shape_cast %49 : vector<1x4x288xf32> to vector<4x288xf32>
    %c8 = arith.constant 8 : index
    %c0_45 = arith.constant 0 : index
    %c0_46 = arith.constant 0 : index
    %51 = vector.load %arg2[%c8, %c0_45, %c0_46] : memref<9x16x4xf32, #tpu.memory_space<vmem>>, vector<1x16x4xf32>
    %52 = vector.shape_cast %51 : vector<1x16x4xf32> to vector<16x4xf32>
    %cst_47 = arith.constant dense<0.000000e+00> : vector<16x288xf32>
    %53 = tpu.matmul %52, %50, %cst_47 {dimension_numbers = #tpu.dot_dimension_numbers<[1], [0], [0], [1], [0, 0, 1, 1], [], []>} : vector<16x4xf32>, vector<4x288xf32>, vector<16x288xf32> -> vector<16x288xf32>
    %54 = arith.addf %48, %53 : vector<16x288xf32>
    %c0_48 = arith.constant 0 : index
    %c0_49 = arith.constant 0 : index
    %55 = vector.load %arg3[%c0_48, %c0_49] : memref<16x1xf32, #tpu.memory_space<vmem>>, vector<16x1xf32>
    %56 = vector.broadcast %55 : vector<16x1xf32> to vector<16x288xf32>
    %57 = arith.addf %54, %56 : vector<16x288xf32>
    %cst_50 = arith.constant 0.000000e+00 : f32
    %58 = vector.broadcast %cst_50 : f32 to vector<16x288xf32>
    %59 = arith.maximumf %57, %58 : vector<16x288xf32>
    %60 = vector.extract_strided_slice %59 {offsets = [0, 0], sizes = [16, 16], strides = [1, 1]} : vector<16x288xf32> to vector<16x16xf32>
    %c0_51 = arith.constant 0 : index
    %c0_52 = arith.constant 0 : index
    %c0_53 = arith.constant 0 : index
    %c0_54 = arith.constant 0 : index
    %61 = vector.load %arg4[%c0_51, %c0_52, %c0_53, %c0_54] : memref<1x16x16x16xf32, #tpu.memory_space<vmem>>, vector<1x16x1x16xf32>
    %62 = vector.shape_cast %61 : vector<1x16x1x16xf32> to vector<16x16xf32>
    %63 = vector.shape_cast %60 : vector<16x16xf32> to vector<1x16x1x16xf32>
    tpu.vector_store %arg4[%c0_51, %c0_52, %c0_53, %c0_54], %63 {strides = array<i32>} : memref<1x16x16x16xf32, #tpu.memory_space<vmem>>, vector<1x16x1x16xf32>,
    %64 = vector.extract_strided_slice %59 {offsets = [0, 18], sizes = [16, 16], strides = [1, 1]} : vector<16x288xf32> to vector<16x16xf32>
    %c0_55 = arith.constant 0 : index
    %c0_56 = arith.constant 0 : index
    %c1_57 = arith.constant 1 : index
    %c0_58 = arith.constant 0 : index
    %65 = vector.load %arg4[%c0_55, %c0_56, %c1_57, %c0_58] : memref<1x16x16x16xf32, #tpu.memory_space<vmem>>, vector<1x16x1x16xf32>
    %66 = vector.shape_cast %65 : vector<1x16x1x16xf32> to vector<16x16xf32>
    %67 = vector.shape_cast %64 : vector<16x16xf32> to vector<1x16x1x16xf32>
    tpu.vector_store %arg4[%c0_55, %c0_56, %c1_57, %c0_58], %67 {strides = array<i32>} : memref<1x16x16x16xf32, #tpu.memory_space<vmem>>, vector<1x16x1x16xf32>,
    %68 = vector.extract_strided_slice %59 {offsets = [0, 36], sizes = [16, 16], strides = [1, 1]} : vector<16x288xf32> to vector<16x16xf32>
    %c0_59 = arith.constant 0 : index
    %c0_60 = arith.constant 0 : index
    %c2_61 = arith.constant 2 : index
    %c0_62 = arith.constant 0 : index
    %69 = vector.load %arg4[%c0_59, %c0_60, %c2_61, %c0_62] : memref<1x16x16x16xf32, #tpu.memory_space<vmem>>, vector<1x16x1x16xf32>
    %70 = vector.shape_cast %69 : vector<1x16x1x16xf32> to vector<16x16xf32>
    %71 = vector.shape_cast %68 : vector<16x16xf32> to vector<1x16x1x16xf32>
    tpu.vector_store %arg4[%c0_59, %c0_60, %c2_61, %c0_62], %71 {strides = array<i32>} : memref<1x16x16x16xf32, #tpu.memory_space<vmem>>, vector<1x16x1x16xf32>,
    %72 = vector.extract_strided_slice %59 {offsets = [0, 54], sizes = [16, 16], strides = [1, 1]} : vector<16x288xf32> to vector<16x16xf32>
    %c0_63 = arith.constant 0 : index
    %c0_64 = arith.constant 0 : index
    %c3_65 = arith.constant 3 : index
    %c0_66 = arith.constant 0 : index
    %73 = vector.load %arg4[%c0_63, %c0_64, %c3_65, %c0_66] : memref<1x16x16x16xf32, #tpu.memory_space<vmem>>, vector<1x16x1x16xf32>
    %74 = vector.shape_cast %73 : vector<1x16x1x16xf32> to vector<16x16xf32>
    %75 = vector.shape_cast %72 : vector<16x16xf32> to vector<1x16x1x16xf32>
    tpu.vector_store %arg4[%c0_63, %c0_64, %c3_65, %c0_66], %75 {strides = array<i32>} : memref<1x16x16x16xf32, #tpu.memory_space<vmem>>, vector<1x16x1x16xf32>,
    %76 = vector.extract_strided_slice %59 {offsets = [0, 72], sizes = [16, 16], strides = [1, 1]} : vector<16x288xf32> to vector<16x16xf32>
    %c0_67 = arith.constant 0 : index
    %c0_68 = arith.constant 0 : index
    %c4_69 = arith.constant 4 : index
    %c0_70 = arith.constant 0 : index
    %77 = vector.load %arg4[%c0_67, %c0_68, %c4_69, %c0_70] : memref<1x16x16x16xf32, #tpu.memory_space<vmem>>, vector<1x16x1x16xf32>
    %78 = vector.shape_cast %77 : vector<1x16x1x16xf32> to vector<16x16xf32>
    %79 = vector.shape_cast %76 : vector<16x16xf32> to vector<1x16x1x16xf32>
    tpu.vector_store %arg4[%c0_67, %c0_68, %c4_69, %c0_70], %79 {strides = array<i32>} : memref<1x16x16x16xf32, #tpu.memory_space<vmem>>, vector<1x16x1x16xf32>,
    %80 = vector.extract_strided_slice %59 {offsets = [0, 90], sizes = [16, 16], strides = [1, 1]} : vector<16x288xf32> to vector<16x16xf32>
    %c0_71 = arith.constant 0 : index
    %c0_72 = arith.constant 0 : index
    %c5_73 = arith.constant 5 : index
    %c0_74 = arith.constant 0 : index
    %81 = vector.load %arg4[%c0_71, %c0_72, %c5_73, %c0_74] : memref<1x16x16x16xf32, #tpu.memory_space<vmem>>, vector<1x16x1x16xf32>
    %82 = vector.shape_cast %81 : vector<1x16x1x16xf32> to vector<16x16xf32>
    %83 = vector.shape_cast %80 : vector<16x16xf32> to vector<1x16x1x16xf32>
    tpu.vector_store %arg4[%c0_71, %c0_72, %c5_73, %c0_74], %83 {strides = array<i32>} : memref<1x16x16x16xf32, #tpu.memory_space<vmem>>, vector<1x16x1x16xf32>,
    %84 = vector.extract_strided_slice %59 {offsets = [0, 108], sizes = [16, 16], strides = [1, 1]} : vector<16x288xf32> to vector<16x16xf32>
    %c0_75 = arith.constant 0 : index
    %c0_76 = arith.constant 0 : index
    %c6_77 = arith.constant 6 : index
    %c0_78 = arith.constant 0 : index
    %85 = vector.load %arg4[%c0_75, %c0_76, %c6_77, %c0_78] : memref<1x16x16x16xf32, #tpu.memory_space<vmem>>, vector<1x16x1x16xf32>
    %86 = vector.shape_cast %85 : vector<1x16x1x16xf32> to vector<16x16xf32>
    %87 = vector.shape_cast %84 : vector<16x16xf32> to vector<1x16x1x16xf32>
    tpu.vector_store %arg4[%c0_75, %c0_76, %c6_77, %c0_78], %87 {strides = array<i32>} : memref<1x16x16x16xf32, #tpu.memory_space<vmem>>, vector<1x16x1x16xf32>,
    %88 = vector.extract_strided_slice %59 {offsets = [0, 126], sizes = [16, 16], strides = [1, 1]} : vector<16x288xf32> to vector<16x16xf32>
    %c0_79 = arith.constant 0 : index
    %c0_80 = arith.constant 0 : index
    %c7_81 = arith.constant 7 : index
    %c0_82 = arith.constant 0 : index
    %89 = vector.load %arg4[%c0_79, %c0_80, %c7_81, %c0_82] : memref<1x16x16x16xf32, #tpu.memory_space<vmem>>, vector<1x16x1x16xf32>
    %90 = vector.shape_cast %89 : vector<1x16x1x16xf32> to vector<16x16xf32>
    %91 = vector.shape_cast %88 : vector<16x16xf32> to vector<1x16x1x16xf32>
    tpu.vector_store %arg4[%c0_79, %c0_80, %c7_81, %c0_82], %91 {strides = array<i32>} : memref<1x16x16x16xf32, #tpu.memory_space<vmem>>, vector<1x16x1x16xf32>,
    %92 = vector.extract_strided_slice %59 {offsets = [0, 144], sizes = [16, 16], strides = [1, 1]} : vector<16x288xf32> to vector<16x16xf32>
    %c0_83 = arith.constant 0 : index
    %c0_84 = arith.constant 0 : index
    %c8_85 = arith.constant 8 : index
    %c0_86 = arith.constant 0 : index
    %93 = vector.load %arg4[%c0_83, %c0_84, %c8_85, %c0_86] : memref<1x16x16x16xf32, #tpu.memory_space<vmem>>, vector<1x16x1x16xf32>
    %94 = vector.shape_cast %93 : vector<1x16x1x16xf32> to vector<16x16xf32>
    %95 = vector.shape_cast %92 : vector<16x16xf32> to vector<1x16x1x16xf32>
    tpu.vector_store %arg4[%c0_83, %c0_84, %c8_85, %c0_86], %95 {strides = array<i32>} : memref<1x16x16x16xf32, #tpu.memory_space<vmem>>, vector<1x16x1x16xf32>,
    %96 = vector.extract_strided_slice %59 {offsets = [0, 162], sizes = [16, 16], strides = [1, 1]} : vector<16x288xf32> to vector<16x16xf32>
    %c0_87 = arith.constant 0 : index
    %c0_88 = arith.constant 0 : index
    %c9 = arith.constant 9 : index
    %c0_89 = arith.constant 0 : index
    %97 = vector.load %arg4[%c0_87, %c0_88, %c9, %c0_89] : memref<1x16x16x16xf32, #tpu.memory_space<vmem>>, vector<1x16x1x16xf32>
    %98 = vector.shape_cast %97 : vector<1x16x1x16xf32> to vector<16x16xf32>
    %99 = vector.shape_cast %96 : vector<16x16xf32> to vector<1x16x1x16xf32>
    tpu.vector_store %arg4[%c0_87, %c0_88, %c9, %c0_89], %99 {strides = array<i32>} : memref<1x16x16x16xf32, #tpu.memory_space<vmem>>, vector<1x16x1x16xf32>,
    %100 = vector.extract_strided_slice %59 {offsets = [0, 180], sizes = [16, 16], strides = [1, 1]} : vector<16x288xf32> to vector<16x16xf32>
    %c0_90 = arith.constant 0 : index
    %c0_91 = arith.constant 0 : index
    %c10 = arith.constant 10 : index
    %c0_92 = arith.constant 0 : index
    %101 = vector.load %arg4[%c0_90, %c0_91, %c10, %c0_92] : memref<1x16x16x16xf32, #tpu.memory_space<vmem>>, vector<1x16x1x16xf32>
    %102 = vector.shape_cast %101 : vector<1x16x1x16xf32> to vector<16x16xf32>
    %103 = vector.shape_cast %100 : vector<16x16xf32> to vector<1x16x1x16xf32>
    tpu.vector_store %arg4[%c0_90, %c0_91, %c10, %c0_92], %103 {strides = array<i32>} : memref<1x16x16x16xf32, #tpu.memory_space<vmem>>, vector<1x16x1x16xf32>,
    %104 = vector.extract_strided_slice %59 {offsets = [0, 198], sizes = [16, 16], strides = [1, 1]} : vector<16x288xf32> to vector<16x16xf32>
    %c0_93 = arith.constant 0 : index
    %c0_94 = arith.constant 0 : index
    %c11 = arith.constant 11 : index
    %c0_95 = arith.constant 0 : index
    %105 = vector.load %arg4[%c0_93, %c0_94, %c11, %c0_95] : memref<1x16x16x16xf32, #tpu.memory_space<vmem>>, vector<1x16x1x16xf32>
    %106 = vector.shape_cast %105 : vector<1x16x1x16xf32> to vector<16x16xf32>
    %107 = vector.shape_cast %104 : vector<16x16xf32> to vector<1x16x1x16xf32>
    tpu.vector_store %arg4[%c0_93, %c0_94, %c11, %c0_95], %107 {strides = array<i32>} : memref<1x16x16x16xf32, #tpu.memory_space<vmem>>, vector<1x16x1x16xf32>,
    %108 = vector.extract_strided_slice %59 {offsets = [0, 216], sizes = [16, 16], strides = [1, 1]} : vector<16x288xf32> to vector<16x16xf32>
    %c0_96 = arith.constant 0 : index
    %c0_97 = arith.constant 0 : index
    %c12 = arith.constant 12 : index
    %c0_98 = arith.constant 0 : index
    %109 = vector.load %arg4[%c0_96, %c0_97, %c12, %c0_98] : memref<1x16x16x16xf32, #tpu.memory_space<vmem>>, vector<1x16x1x16xf32>
    %110 = vector.shape_cast %109 : vector<1x16x1x16xf32> to vector<16x16xf32>
    %111 = vector.shape_cast %108 : vector<16x16xf32> to vector<1x16x1x16xf32>
    tpu.vector_store %arg4[%c0_96, %c0_97, %c12, %c0_98], %111 {strides = array<i32>} : memref<1x16x16x16xf32, #tpu.memory_space<vmem>>, vector<1x16x1x16xf32>,
    %112 = vector.extract_strided_slice %59 {offsets = [0, 234], sizes = [16, 16], strides = [1, 1]} : vector<16x288xf32> to vector<16x16xf32>
    %c0_99 = arith.constant 0 : index
    %c0_100 = arith.constant 0 : index
    %c13 = arith.constant 13 : index
    %c0_101 = arith.constant 0 : index
    %113 = vector.load %arg4[%c0_99, %c0_100, %c13, %c0_101] : memref<1x16x16x16xf32, #tpu.memory_space<vmem>>, vector<1x16x1x16xf32>
    %114 = vector.shape_cast %113 : vector<1x16x1x16xf32> to vector<16x16xf32>
    %115 = vector.shape_cast %112 : vector<16x16xf32> to vector<1x16x1x16xf32>
    tpu.vector_store %arg4[%c0_99, %c0_100, %c13, %c0_101], %115 {strides = array<i32>} : memref<1x16x16x16xf32, #tpu.memory_space<vmem>>, vector<1x16x1x16xf32>,
    %116 = vector.extract_strided_slice %59 {offsets = [0, 252], sizes = [16, 16], strides = [1, 1]} : vector<16x288xf32> to vector<16x16xf32>
    %c0_102 = arith.constant 0 : index
    %c0_103 = arith.constant 0 : index
    %c14 = arith.constant 14 : index
    %c0_104 = arith.constant 0 : index
    %117 = vector.load %arg4[%c0_102, %c0_103, %c14, %c0_104] : memref<1x16x16x16xf32, #tpu.memory_space<vmem>>, vector<1x16x1x16xf32>
    %118 = vector.shape_cast %117 : vector<1x16x1x16xf32> to vector<16x16xf32>
    %119 = vector.shape_cast %116 : vector<16x16xf32> to vector<1x16x1x16xf32>
    tpu.vector_store %arg4[%c0_102, %c0_103, %c14, %c0_104], %119 {strides = array<i32>} : memref<1x16x16x16xf32, #tpu.memory_space<vmem>>, vector<1x16x1x16xf32>,
    %120 = vector.extract_strided_slice %59 {offsets = [0, 270], sizes = [16, 16], strides = [1, 1]} : vector<16x288xf32> to vector<16x16xf32>
    %c0_105 = arith.constant 0 : index
    %c0_106 = arith.constant 0 : index
    %c15 = arith.constant 15 : index
    %c0_107 = arith.constant 0 : index
    %121 = vector.load %arg4[%c0_105, %c0_106, %c15, %c0_107] : memref<1x16x16x16xf32, #tpu.memory_space<vmem>>, vector<1x16x1x16xf32>
    %122 = vector.shape_cast %121 : vector<1x16x1x16xf32> to vector<16x16xf32>
    %123 = vector.shape_cast %120 : vector<16x16xf32> to vector<1x16x1x16xf32>
    tpu.vector_store %arg4[%c0_105, %c0_106, %c15, %c0_107], %123 {strides = array<i32>} : memref<1x16x16x16xf32, #tpu.memory_space<vmem>>, vector<1x16x1x16xf32>,
    return
  }
  func.func @transform_0(%arg0: i32) -> (i32, i32, i32) {
    %c0_i32 = arith.constant 0 : i32
    %c0_i32_0 = arith.constant 0 : i32
    %c0_i32_1 = arith.constant 0 : i32
    return %arg0, %c0_i32, %c0_i32_0 : i32, i32, i32
  }
  func.func @transform_1(%arg0: i32) -> (i32, i32, i32) {
    %c0_i32 = arith.constant 0 : i32
    %c0_i32_0 = arith.constant 0 : i32
    %c0_i32_1 = arith.constant 0 : i32
    %c0_i32_2 = arith.constant 0 : i32
    return %c0_i32, %c0_i32_0, %c0_i32_1 : i32, i32, i32
  }
  func.func @transform_2(%arg0: i32) -> (i32, i32) {
    %c0_i32 = arith.constant 0 : i32
    %c0_i32_0 = arith.constant 0 : i32
    %c0_i32_1 = arith.constant 0 : i32
    return %c0_i32, %c0_i32_0 : i32, i32
  }
  func.func @transform_3(%arg0: i32) -> (i32, i32, i32, i32) {
    %c0_i32 = arith.constant 0 : i32
    %c0_i32_0 = arith.constant 0 : i32
    %c0_i32_1 = arith.constant 0 : i32
    %c0_i32_2 = arith.constant 0 : i32
    return %arg0, %c0_i32, %c0_i32_0, %c0_i32_1 : i32, i32, i32, i32
  }
}

</mosaic_0001>

<llo_original>
// kernel: tpu_custom_call.1
$region0: #{tpu_custom_call.1}
  #allocation0 [shape = 'u32[]', space=smem, size = 0x4, offset = 0x4, fixed_abs, tag = 'smem constant byte address 0x4 - core index']
  #allocation1 [shape = 'u32[144,128]{1,0:T(1,128)}', space=vmem, size = 0x12000, scoped, tag = 'internal scratch']
  %s0 = inlined_call_operand.vmem [shape: f32[2,4,342], index: 0, kind: input, shape index: {}]
  %s1 = inlined_call_operand.vmem [shape: f32[9,16,4], index: 1, kind: input, shape index: {}]
  %s2 = inlined_call_operand.vmem [shape: f32[16,1], index: 2, kind: input, shape index: {}]
  %s3 = inlined_call_operand.hbm [shape: f32[2,16,16,16], index: 3, kind: output, shape index: {}]
  %s4 = sld [smem:[#allocation0]]
  $region45: #{tpu_custom_call.1} parent=0
    _
  %s6 = ssub.s32 1, %s4
  %s7 = scalar_select 0, %s6, %s4
  $region1: #{tpu_custom_call.1} parent=0
    #allocation2 [shape = 'u8[262144]{0}', space=vmem, size = 0x40000, scoped, tag = 'output window, operand 0']
    #allocation3 [shape = 's32[2]{0}', space=sflag, size = 0x8, scoped, tag = 'scoped memory for tpu_custom_call.1']
    %8 = vsyncpa [#allocation3], 0
    %s9 = scalar_lea.sflag [#allocation3], 1
    %10 = vsyncpa %s9, 0
    loop: start=0, step=1, limit=4
    $region2: #{tpu_custom_call.1} parent=1 // loop_pre_header
      _
    $region3: #{tpu_custom_call.1} parent=1 // loop_header
      %s12 = sphi 0, %s16
      %p13 = scmp.ge.s32.totalorder %s12, 4
      %s22 = sphi 0, %s24
      %s25 = sphi 0, %s22
      %s26 = sphi 0, %s25
      %s42 = sphi 0, %s26
      %s46 = sphi 0, %s46
      %s48 = sphi 0, %s46
      %s49 = sphi 0, %s48
      %s63 = sphi 0, %s49
      %s67 = sphi 0, %s67
      %s69 = sphi 0, %s67
      %s70 = sphi 0, %s69
      %s84 = sphi 0, %s70
      %s90 = sphi 0, %s92
      %s93 = sphi 0, %s90
      %s94 = sphi 0, %s93
      %s110 = sphi 0, %s94
    $region4: #{tpu_custom_call.1} parent=1 // loop_header_branch
      %15 = sbr.rel (%p13) target = $region8
    $region5: #{tpu_custom_call.1} parent=1 // loop_body
      %s17 = ssub.s32 %s12, 1
      %s18 = ssub.s32 %s12, 2
      %s19 = sadd.s32 %s12, 1
      %s20 = ssub.s32 %s12, %s19
      %p21 = scmp.eq.s32.totalorder %s20, 0
      %s23 = sadd.s32 %s22, 1
      %s24 = scalar_select %p21, %s22, %s23
      %p27 = pneg %p21
      %p28 = scmp.eq.s32.totalorder %s12, 1
      %p29 = por %p27, %p28
      %p30 = scmp.ne.s32.totalorder %s22, %s25
      %p31 = scmp.eq.s32.totalorder %s12, 0
      %p32 = por %p30, %p31
      %p33 = scmp.ne.s32.totalorder %s22, %s25
      %p34 = scmp.eq.s32.totalorder %s17, 1
      %p35 = por %p33, %p34
      %p36 = scmp.ne.s32.totalorder %s25, %s26
      %p37 = scmp.eq.s32.totalorder %s17, 0
      %p38 = por %p36, %p37
      %p39 = scmp.ne.s32.totalorder %s25, %s26
      %p40 = scmp.eq.s32.totalorder %s18, 1
      %p41 = por %p39, %p40
      %p43 = scmp.ne.s32.totalorder %s26, %s42
      %p44 = scmp.eq.s32.totalorder %s18, 0
      %p45 = por %p43, %p44
      %s47 = sadd.s32 %s46, 1
      %p50 = scmp.eq.s32.totalorder %s12, 1
      %p51 = scmp.ne.s32.totalorder %s46, %s48
      %p52 = scmp.eq.s32.totalorder %s12, 0
      %p53 = por %p51, %p52
      %p54 = scmp.ne.s32.totalorder %s46, %s48
      %p55 = scmp.eq.s32.totalorder %s17, 1
      %p56 = por %p54, %p55
      %p57 = scmp.ne.s32.totalorder %s48, %s49
      %p58 = scmp.eq.s32.totalorder %s17, 0
      %p59 = por %p57, %p58
      %p60 = scmp.ne.s32.totalorder %s48, %s49
      %p61 = scmp.eq.s32.totalorder %s18, 1
      %p62 = por %p60, %p61
      %p64 = scmp.ne.s32.totalorder %s49, %s63
      %p65 = scmp.eq.s32.totalorder %s18, 0
      %p66 = por %p64, %p65
      %s68 = sadd.s32 %s67, 1
      %p71 = scmp.eq.s32.totalorder %s12, 1
      %p72 = scmp.ne.s32.totalorder %s67, %s69
      %p73 = scmp.eq.s32.totalorder %s12, 0
      %p74 = por %p72, %p73
      %p75 = scmp.ne.s32.totalorder %s67, %s69
      %p76 = scmp.eq.s32.totalorder %s17, 1
      %p77 = por %p75, %p76
      %p78 = scmp.ne.s32.totalorder %s69, %s70
      %p79 = scmp.eq.s32.totalorder %s17, 0
      %p80 = por %p78, %p79
      %p81 = scmp.ne.s32.totalorder %s69, %s70
      %p82 = scmp.eq.s32.totalorder %s18, 1
      %p83 = por %p81, %p82
      %p85 = scmp.ne.s32.totalorder %s70, %s84
      %p86 = scmp.eq.s32.totalorder %s18, 0
      %p87 = por %p85, %p86
      %s88 = ssub.s32 %s12, %s19
      %p89 = scmp.eq.s32.totalorder %s88, 0
      %s91 = sadd.s32 %s90, 1
      %s92 = scalar_select %p89, %s90, %s91
      %p95 = pneg %p89
      %p96 = scmp.eq.s32.totalorder %s12, 1
      %p97 = por %p95, %p96
      %p98 = scmp.ne.s32.totalorder %s90, %s93
      %p99 = scmp.eq.s32.totalorder %s12, 0
      %p100 = por %p98, %p99
      %p101 = scmp.ne.s32.totalorder %s90, %s93
      %p102 = scmp.eq.s32.totalorder %s17, 1
      %p103 = por %p101, %p102
      %p104 = scmp.ne.s32.totalorder %s93, %s94
      %p105 = scmp.eq.s32.totalorder %s17, 0
      %p106 = por %p104, %p105
      %p107 = scmp.ne.s32.totalorder %s93, %s94
      %p108 = scmp.eq.s32.totalorder %s18, 1
      %p109 = por %p107, %p108
      %p111 = scmp.ne.s32.totalorder %s94, %s110
      %p112 = scmp.eq.s32.totalorder %s18, 0
      %p113 = por %p111, %p112
      %p114 = scmp.le.s32.totalorder 1, %s12
      %p115 = scmp.lt.s32.totalorder %s12, 3
      %p116 = pnand %p114, %p115
      %p117 = pneg %p116
      // Predicated region
      $region9: #{tpu_custom_call.1} parent=5 // pred_check
        _
      $region10: #{tpu_custom_call.1} parent=5 // pred_check_branch
        %119 = sbr.rel (%p116) target = $region12
      $region11: #{tpu_custom_call.1} parent=5 // pred_region
        %s120 = ssub.s32 %s12, 1
        // Predicated region
        $region13: #{tpu_custom_call.1} parent=11 // pred_check
          %p121 = pneg %p59
        $region14: #{tpu_custom_call.1} parent=11 // pred_check_branch
          %123 = sbr.rel (%p121) target = $region16
        $region15: #{tpu_custom_call.1} parent=11 // pred_region
          _
        $region16: #{tpu_custom_call.1} parent=11 // pred_fallthru
          _
        // Predicated region
        $region17: #{tpu_custom_call.1} parent=11 // pred_check
          %p124 = pneg %p80
        $region18: #{tpu_custom_call.1} parent=11 // pred_check_branch
          %126 = sbr.rel (%p124) target = $region20
        $region19: #{tpu_custom_call.1} parent=11 // pred_region
          _
        $region20: #{tpu_custom_call.1} parent=11 // pred_fallthru
          _
      $region12: #{tpu_custom_call.1} parent=5 // pred_fallthru
        _
      %p127 = scmp.lt.s32.totalorder %s12, 2
      // Predicated region
      $region21: #{tpu_custom_call.1} parent=5 // pred_check
        %p128 = pneg %p127
      $region22: #{tpu_custom_call.1} parent=5 // pred_check_branch
        %130 = sbr.rel (%p128) target = $region24
      $region23: #{tpu_custom_call.1} parent=5 // pred_region
        // Predicated region
        $region25: #{tpu_custom_call.1} parent=23 // pred_check
          %p131 = pneg %p32
        $region26: #{tpu_custom_call.1} parent=23 // pred_check_branch
          %133 = sbr.rel (%p131) target = $region28
        $region27: #{tpu_custom_call.1} parent=23 // pred_region
          %p134 = scmp.lt.s32.totalorder %s12, 1
          %s135 = scalar_select %p134, %s12, 1
          %s136 = smul.addr %s135, 3
          %s137 = smul.addr %s136, 4
          %s138 = scalar_lea.vmem %s0, %s137
        $region28: #{tpu_custom_call.1} parent=23 // pred_fallthru
          _
      $region24: #{tpu_custom_call.1} parent=5 // pred_fallthru
        _
      %p139 = scmp.le.s32.totalorder 1, %s12
      %p140 = scmp.lt.s32.totalorder %s12, 3
      %p141 = pnand %p139, %p140
      %p142 = pneg %p141
      // Predicated region
      $region29: #{tpu_custom_call.1} parent=5 // pred_check
        _
      $region30: #{tpu_custom_call.1} parent=5 // pred_check_branch
        %144 = sbr.rel (%p141) target = $region32
      $region31: #{tpu_custom_call.1} parent=5 // pred_region
        %s145 = ssub.s32 %s12, 1
        %p146 = scmp.lt.s32.totalorder %s17, 1
        %s147 = scalar_select %p146, %s17, 1
        %s148 = smul.addr %s147, 3
        %s149 = smul.addr %s148, 4
        %s150 = scalar_lea.vmem %s0, %s149
        %p151 = pneg %p38
        %p152 = pneg %p35
        %p153 = pneg %p59
        %p154 = pneg %p56
        %p155 = pneg %p80
        %p156 = pneg %p77
        %p157 = pneg %p106
        %p158 = pneg %p103
        %s159 = sand.u32 %s93, 1
        %s160 = scalar_lea.sflag [#allocation3], %s159
        %s161 = sand.u32 %s93, 1
        %s162 = smul.addr %s161, 256
        %s163 = scalar_lea.vmem [#allocation2], %s162
        %p164 = scmp.lt.s32.totalorder %s17, 1
        %s165 = scalar_select %p164, %s17, 1
        %s166 = smul.addr %s165, 3
        %s167 = smul.addr %s166, 4
        %s168 = scalar_lea.vmem %s0, %s167
        %v169 = vld [vmem:[%s168] sm:$0xff]
        %v170 = vld [vmem:[%s168 + $0x8] sm:$0xf]
        %v171 = vld [vmem:[%s1] sm:$0xff]
        %v172 = vld [vmem:[%s1 + $0x8] sm:$0xff]
        %s173 = scalar_lea.vmem %s1, 16
        %v174 = vld [vmem:[%s173] sm:$0xff]
        %v175 = vld [vmem:[%s173 + $0x8] sm:$0xff]
        %v178 = vcombine.high %v169, %v169
        %179 = vrot.lane.b32.xlu0 %v169, 127
        %v180 = vpop.permute.xlu0 %179
        %181 = vrot.lane.b32.xlu0 %v178, 127
        %v182 = vpop.permute.xlu0 %181
        %183 = vrot.lane.b32.xlu0 %v170, 127
        %v184 = vpop.permute.xlu0 %183
        %vm185 = vcmask 1039360
        %v186 = vsel %vm185, %v180, %v182
        %v187 = vsel %vm185, %v182, %v184
        %vm188 = vcmask 31744
        %v190 = vsel %vm188, %v174, 0
        %v193 = vsel %vm188, %v175, 0
        %vm195 = vcmask 1043456
        %v196 = vsel %vm195, %v186, 0
        %v198 = vsel %vm195, %v187, 0
        %v200 = vsel %vm195, %v184, 0
        %202 = vmatprep.subr.mxu0 0.0
        %203 = vmatpush1.msra.mxu0 0.0
        %204 = vmatprep.subr.mxu0 0.0
        %205 = vmatpush1.msra.mxu0 0.0
        %206 = vmatprep.subr.mxu0 0.0
        %207 = vmatpush1.msra.mxu0 0.0
        %208 = vmatprep.subr.mxu0 0.0
        %209 = vmatpush1.msra.mxu0 0.0
        %210 = vmatprep.subr.mxu0 0.0
        %211 = vmatpush1.msra.mxu0 0.0
        %212 = vmatprep.subr.mxu0 0.0
        %213 = vmatpush1.msra.mxu0 0.0
        %214 = vmatprep.subr.mxu0 0.0
        %215 = vmatpush1.msra.mxu0 0.0
        %216 = vmatprep.subr.mxu0 0.0
        %217 = vmatpush1.msra.mxu0 0.0
        %218 = vmatprep.subr.mxu0 0.0
        %219 = vmatpush1.msra.mxu0 0.0
        %220 = vmatprep.subr.mxu0 0.0
        %221 = vmatpush1.msra.mxu0 0.0
        %222 = vmatprep.subr.mxu0 0.0
        %223 = vmatpush1.msra.mxu0 0.0
        %224 = vmatprep.subr.mxu0 0.0
        %225 = vmatpush1.msra.mxu0 0.0
        %226 = vmatprep.subr.mxu0 0.0
        %227 = vmatpush1.msra.mxu0 0.0
        %228 = vmatprep.subr.mxu0 0.0
        %229 = vmatpush1.msra.mxu0 0.0
        %230 = vmatprep.subr.mxu0 0.0
        %231 = vmatpush1.msra.mxu0 0.0
        %232 = vmatprep.subr.mxu0 %v198
        %233 = vmatpush1.msra.mxu0 %v196
        %234 = vmatprep.subr.mxu0 0.0
        %235 = vmatpush2.msra.mxu0 0.0
        %236 = vmatprep.subr.mxu0 0.0
        %237 = vmatpush2.msra.mxu0 0.0
        %238 = vmatprep.subr.mxu0 0.0
        %239 = vmatpush2.msra.mxu0 0.0
        %240 = vmatprep.subr.mxu0 0.0
        %241 = vmatpush2.msra.mxu0 0.0
        %242 = vmatprep.subr.mxu0 0.0
        %243 = vmatpush2.msra.mxu0 0.0
        %244 = vmatprep.subr.mxu0 0.0
        %245 = vmatpush2.msra.mxu0 0.0
        %246 = vmatprep.subr.mxu0 0.0
        %247 = vmatpush2.msra.mxu0 0.0
        %248 = vmatprep.subr.mxu0 0.0
        %249 = vmatpush2.msra.mxu0 0.0
        %250 = vmatprep.subr.mxu0 0.0
        %251 = vmatpush2.msra.mxu0 0.0
        %252 = vmatprep.subr.mxu0 0.0
        %253 = vmatpush2.msra.mxu0 0.0
        %254 = vmatprep.subr.mxu0 0.0
        %255 = vmatpush2.msra.mxu0 0.0
        %256 = vmatprep.subr.mxu0 0.0
        %257 = vmatpush2.msra.mxu0 0.0
        %258 = vmatprep.subr.mxu0 0.0
        %259 = vmatpush2.msra.mxu0 0.0
        %260 = vmatprep.subr.mxu0 0.0
        %261 = vmatpush2.msra.mxu0 0.0
        %262 = vmatprep.subr.mxu0 0.0
        %263 = vmatpush2.msra.mxu0 0.0
        %264 = vmatprep.subr.mxu0 0.0
        %265 = vmatpush2.msra.mxu0 0.0
        %266 = vmatprep.mubr.f32.mxu0 0.0
        %267 = vmatmul.mubr.f32.gmra.mxu0 %v190
        %v268 = vpop.f32.mrf.mxu0
        %v269 = vadd.f32 0.0, %v268
        %v270 = vpop.f32.mrf.mxu0
        %v271 = vadd.f32 0.0, %v270
        %272 = vmatprep.mubr.f32.mxu0 0.0
        %273 = vmatmul.mubr.f32.gmra.mxu0 %v193
        %v274 = vpop.f32.mrf.mxu0
        %v275 = vadd.f32 0.0, %v274
        %v276 = vpop.f32.mrf.mxu0
        %v277 = vadd.f32 0.0, %v276
        %278 = vdwg.mxu0
        %279 = vmatprep.subr.mxu0 0.0
        %280 = vmatpush1.msra.mxu0 0.0
        %281 = vmatprep.subr.mxu0 0.0
        %282 = vmatpush1.msra.mxu0 0.0
        %283 = vmatprep.subr.mxu0 0.0
        %284 = vmatpush1.msra.mxu0 0.0
        %285 = vmatprep.subr.mxu0 0.0
        %286 = vmatpush1.msra.mxu0 0.0
        %287 = vmatprep.subr.mxu0 0.0
        %288 = vmatpush1.msra.mxu0 0.0
        %289 = vmatprep.subr.mxu0 0.0
        %290 = vmatpush1.msra.mxu0 0.0
        %291 = vmatprep.subr.mxu0 0.0
        %292 = vmatpush1.msra.mxu0 0.0
        %293 = vmatprep.subr.mxu0 0.0
        %294 = vmatpush1.msra.mxu0 0.0
        %295 = vmatprep.subr.mxu0 0.0
        %296 = vmatpush1.msra.mxu0 0.0
        %297 = vmatprep.subr.mxu0 0.0
        %298 = vmatpush1.msra.mxu0 0.0
        %299 = vmatprep.subr.mxu0 0.0
        %300 = vmatpush1.msra.mxu0 0.0
        %301 = vmatprep.subr.mxu0 0.0
        %302 = vmatpush1.msra.mxu0 0.0
        %303 = vmatprep.subr.mxu0 0.0
        %304 = vmatpush1.msra.mxu0 0.0
        %305 = vmatprep.subr.mxu0 0.0
        %306 = vmatpush1.msra.mxu0 0.0
        %307 = vmatprep.subr.mxu0 0.0
        %308 = vmatpush1.msra.mxu0 0.0
        %309 = vmatprep.subr.mxu0 0.0
        %310 = vmatpush1.msra.mxu0 %v200
        %311 = vmatprep.subr.mxu0 0.0
        %312 = vmatpush2.msra.mxu0 0.0
        %313 = vmatprep.subr.mxu0 0.0
        %314 = vmatpush2.msra.mxu0 0.0
        %315 = vmatprep.subr.mxu0 0.0
        %316 = vmatpush2.msra.mxu0 0.0
        %317 = vmatprep.subr.mxu0 0.0
        %318 = vmatpush2.msra.mxu0 0.0
        %319 = vmatprep.subr.mxu0 0.0
        %320 = vmatpush2.msra.mxu0 0.0
        %321 = vmatprep.subr.mxu0 0.0
        %322 = vmatpush2.msra.mxu0 0.0
        %323 = vmatprep.subr.mxu0 0.0
        %324 = vmatpush2.msra.mxu0 0.0
        %325 = vmatprep.subr.mxu0 0.0
        %326 = vmatpush2.msra.mxu0 0.0
        %327 = vmatprep.subr.mxu0 0.0
        %328 = vmatpush2.msra.mxu0 0.0
        %329 = vmatprep.subr.mxu0 0.0
        %330 = vmatpush2.msra.mxu0 0.0
        %331 = vmatprep.subr.mxu0 0.0
        %332 = vmatpush2.msra.mxu0 0.0
        %333 = vmatprep.subr.mxu0 0.0
        %334 = vmatpush2.msra.mxu0 0.0
        %335 = vmatprep.subr.mxu0 0.0
        %336 = vmatpush2.msra.mxu0 0.0
        %337 = vmatprep.subr.mxu0 0.0
        %338 = vmatpush2.msra.mxu0 0.0
        %339 = vmatprep.subr.mxu0 0.0
        %340 = vmatpush2.msra.mxu0 0.0
        %341 = vmatprep.subr.mxu0 0.0
        %342 = vmatpush2.msra.mxu0 0.0
        %343 = vmatprep.mubr.f32.mxu0 0.0
        %344 = vmatmul.mubr.f32.gmra.mxu0 %v190
        %v345 = vpop.f32.mrf.mxu0
        %v346 = vadd.f32 0.0, %v345
        %v347 = vpop.f32.mrf.mxu0
        %348 = vmatprep.mubr.f32.mxu0 0.0
        %349 = vmatmul.mubr.f32.gmra.mxu0 %v193
        %v350 = vpop.f32.mrf.mxu0
        %v351 = vadd.f32 0.0, %v350
        %v352 = vpop.f32.mrf.mxu0
        %353 = vdwg.mxu0
        %v355 = vsel %vm188, %v171, 0
        %v358 = vsel %vm188, %v172, 0
        %v360 = vsel %vm195, %v169, 0
        %v362 = vsel %vm195, %v178, 0
        %v364 = vsel %vm195, %v170, 0
        %366 = vmatprep.subr.mxu0 0.0
        %367 = vmatpush1.msra.mxu0 0.0
        %368 = vmatprep.subr.mxu0 0.0
        %369 = vmatpush1.msra.mxu0 0.0
        %370 = vmatprep.subr.mxu0 0.0
        %371 = vmatpush1.msra.mxu0 0.0
        %372 = vmatprep.subr.mxu0 0.0
        %373 = vmatpush1.msra.mxu0 0.0
        %374 = vmatprep.subr.mxu0 0.0
        %375 = vmatpush1.msra.mxu0 0.0
        %376 = vmatprep.subr.mxu0 0.0
        %377 = vmatpush1.msra.mxu0 0.0
        %378 = vmatprep.subr.mxu0 0.0
        %379 = vmatpush1.msra.mxu0 0.0
        %380 = vmatprep.subr.mxu0 0.0
        %381 = vmatpush1.msra.mxu0 0.0
        %382 = vmatprep.subr.mxu0 0.0
        %383 = vmatpush1.msra.mxu0 0.0
        %384 = vmatprep.subr.mxu0 0.0
        %385 = vmatpush1.msra.mxu0 0.0
        %386 = vmatprep.subr.mxu0 0.0
        %387 = vmatpush1.msra.mxu0 0.0
        %388 = vmatprep.subr.mxu0 0.0
        %389 = vmatpush1.msra.mxu0 0.0
        %390 = vmatprep.subr.mxu0 0.0
        %391 = vmatpush1.msra.mxu0 0.0
        %392 = vmatprep.subr.mxu0 0.0
        %393 = vmatpush1.msra.mxu0 0.0
        %394 = vmatprep.subr.mxu0 0.0
        %395 = vmatpush1.msra.mxu0 0.0
        %396 = vmatprep.subr.mxu0 %v362
        %397 = vmatpush1.msra.mxu0 %v360
        %398 = vmatprep.subr.mxu0 0.0
        %399 = vmatpush2.msra.mxu0 0.0
        %400 = vmatprep.subr.mxu0 0.0
        %401 = vmatpush2.msra.mxu0 0.0
        %402 = vmatprep.subr.mxu0 0.0
        %403 = vmatpush2.msra.mxu0 0.0
        %404 = vmatprep.subr.mxu0 0.0
        %405 = vmatpush2.msra.mxu0 0.0
        %406 = vmatprep.subr.mxu0 0.0
        %407 = vmatpush2.msra.mxu0 0.0
        %408 = vmatprep.subr.mxu0 0.0
        %409 = vmatpush2.msra.mxu0 0.0
        %410 = vmatprep.subr.mxu0 0.0
        %411 = vmatpush2.msra.mxu0 0.0
        %412 = vmatprep.subr.mxu0 0.0
        %413 = vmatpush2.msra.mxu0 0.0
        %414 = vmatprep.subr.mxu0 0.0
        %415 = vmatpush2.msra.mxu0 0.0
        %416 = vmatprep.subr.mxu0 0.0
        %417 = vmatpush2.msra.mxu0 0.0
        %418 = vmatprep.subr.mxu0 0.0
        %419 = vmatpush2.msra.mxu0 0.0
        %420 = vmatprep.subr.mxu0 0.0
        %421 = vmatpush2.msra.mxu0 0.0
        %422 = vmatprep.subr.mxu0 0.0
        %423 = vmatpush2.msra.mxu0 0.0
        %424 = vmatprep.subr.mxu0 0.0
        %425 = vmatpush2.msra.mxu0 0.0
        %426 = vmatprep.subr.mxu0 0.0
        %427 = vmatpush2.msra.mxu0 0.0
        %428 = vmatprep.subr.mxu0 0.0
        %429 = vmatpush2.msra.mxu0 0.0
        %430 = vmatprep.mubr.f32.mxu0 0.0
        %431 = vmatmul.mubr.f32.gmra.mxu0 %v355
        %v432 = vpop.f32.mrf.mxu0
        %v433 = vadd.f32 %v269, %v432
        %v434 = vpop.f32.mrf.mxu0
        %v435 = vadd.f32 %v271, %v434
        %436 = vmatprep.mubr.f32.mxu0 0.0
        %437 = vmatmul.mubr.f32.gmra.mxu0 %v358
        %v438 = vpop.f32.mrf.mxu0
        %v439 = vadd.f32 %v275, %v438
        %v440 = vpop.f32.mrf.mxu0
        %v441 = vadd.f32 %v277, %v440
        %442 = vdwg.mxu0
        %443 = vmatprep.subr.mxu0 0.0
        %444 = vmatpush1.msra.mxu0 0.0
        %445 = vmatprep.subr.mxu0 0.0
        %446 = vmatpush1.msra.mxu0 0.0
        %447 = vmatprep.subr.mxu0 0.0
        %448 = vmatpush1.msra.mxu0 0.0
        %449 = vmatprep.subr.mxu0 0.0
        %450 = vmatpush1.msra.mxu0 0.0
        %451 = vmatprep.subr.mxu0 0.0
        %452 = vmatpush1.msra.mxu0 0.0
        %453 = vmatprep.subr.mxu0 0.0
        %454 = vmatpush1.msra.mxu0 0.0
        %455 = vmatprep.subr.mxu0 0.0
        %456 = vmatpush1.msra.mxu0 0.0
        %457 = vmatprep.subr.mxu0 0.0
        %458 = vmatpush1.msra.mxu0 0.0
        %459 = vmatprep.subr.mxu0 0.0
        %460 = vmatpush1.msra.mxu0 0.0
        %461 = vmatprep.subr.mxu0 0.0
        %462 = vmatpush1.msra.mxu0 0.0
        %463 = vmatprep.subr.mxu0 0.0
        %464 = vmatpush1.msra.mxu0 0.0
        %465 = vmatprep.subr.mxu0 0.0
        %466 = vmatpush1.msra.mxu0 0.0
        %467 = vmatprep.subr.mxu0 0.0
        %468 = vmatpush1.msra.mxu0 0.0
        %469 = vmatprep.subr.mxu0 0.0
        %470 = vmatpush1.msra.mxu0 0.0
        %471 = vmatprep.subr.mxu0 0.0
        %472 = vmatpush1.msra.mxu0 0.0
        %473 = vmatprep.subr.mxu0 0.0
        %474 = vmatpush1.msra.mxu0 %v364
        %475 = vmatprep.subr.mxu0 0.0
        %476 = vmatpush2.msra.mxu0 0.0
        %477 = vmatprep.subr.mxu0 0.0
        %478 = vmatpush2.msra.mxu0 0.0
        %479 = vmatprep.subr.mxu0 0.0
        %480 = vmatpush2.msra.mxu0 0.0
        %481 = vmatprep.subr.mxu0 0.0
        %482 = vmatpush2.msra.mxu0 0.0
        %483 = vmatprep.subr.mxu0 0.0
        %484 = vmatpush2.msra.mxu0 0.0
        %485 = vmatprep.subr.mxu0 0.0
        %486 = vmatpush2.msra.mxu0 0.0
        %487 = vmatprep.subr.mxu0 0.0
        %488 = vmatpush2.msra.mxu0 0.0
        %489 = vmatprep.subr.mxu0 0.0
        %490 = vmatpush2.msra.mxu0 0.0
        %491 = vmatprep.subr.mxu0 0.0
        %492 = vmatpush2.msra.mxu0 0.0
        %493 = vmatprep.subr.mxu0 0.0
        %494 = vmatpush2.msra.mxu0 0.0
        %495 = vmatprep.subr.mxu0 0.0
        %496 = vmatpush2.msra.mxu0 0.0
        %497 = vmatprep.subr.mxu0 0.0
        %498 = vmatpush2.msra.mxu0 0.0
        %499 = vmatprep.subr.mxu0 0.0
        %500 = vmatpush2.msra.mxu0 0.0
        %501 = vmatprep.subr.mxu0 0.0
        %502 = vmatpush2.msra.mxu0 0.0
        %503 = vmatprep.subr.mxu0 0.0
        %504 = vmatpush2.msra.mxu0 0.0
        %505 = vmatprep.subr.mxu0 0.0
        %506 = vmatpush2.msra.mxu0 0.0
        %507 = vmatprep.mubr.f32.mxu0 0.0
        %508 = vmatmul.mubr.f32.gmra.mxu0 %v355
        %v509 = vpop.f32.mrf.mxu0
        %v510 = vadd.f32 %v346, %v509
        %v511 = vpop.f32.mrf.mxu0
        %512 = vmatprep.mubr.f32.mxu0 0.0
        %513 = vmatmul.mubr.f32.gmra.mxu0 %v358
        %v514 = vpop.f32.mrf.mxu0
        %v515 = vadd.f32 %v351, %v514
        %v516 = vpop.f32.mrf.mxu0
        %517 = vdwg.mxu0
        %v518 = vld [vmem:[%s168] sm:$0xff]
        %v519 = vld [vmem:[%s168 + $0x8] sm:$0xf]
        %s520 = scalar_lea.vmem %s1, 32
        %v521 = vld [vmem:[%s520] sm:$0xff]
        %v522 = vld [vmem:[%s520 + $0x8] sm:$0xff]
        %v525 = vcombine.high %v518, %v518
        %526 = vrot.lane.b32.xlu0 %v518, 126
        %v527 = vpop.permute.xlu0 %526
        %528 = vrot.lane.b32.xlu0 %v525, 126
        %v529 = vpop.permute.xlu0 %528
        %530 = vrot.lane.b32.xlu0 %v519, 126
        %v531 = vpop.permute.xlu0 %530
        %vm532 = vcmask 1031168
        %v533 = vsel %vm532, %v527, %v529
        %v534 = vsel %vm532, %v529, %v531
        %v536 = vsel %vm188, %v521, 0
        %v539 = vsel %vm188, %v522, 0
        %v541 = vsel %vm195, %v533, 0
        %v543 = vsel %vm195, %v534, 0
        %v545 = vsel %vm195, %v531, 0
        %547 = vmatprep.subr.mxu0 0.0
        %548 = vmatpush1.msra.mxu0 0.0
        %549 = vmatprep.subr.mxu0 0.0
        %550 = vmatpush1.msra.mxu0 0.0
        %551 = vmatprep.subr.mxu0 0.0
        %552 = vmatpush1.msra.mxu0 0.0
        %553 = vmatprep.subr.mxu0 0.0
        %554 = vmatpush1.msra.mxu0 0.0
        %555 = vmatprep.subr.mxu0 0.0
        %556 = vmatpush1.msra.mxu0 0.0
        %557 = vmatprep.subr.mxu0 0.0
        %558 = vmatpush1.msra.mxu0 0.0
        %559 = vmatprep.subr.mxu0 0.0
        %560 = vmatpush1.msra.mxu0 0.0
        %561 = vmatprep.subr.mxu0 0.0
        %562 = vmatpush1.msra.mxu0 0.0
        %563 = vmatprep.subr.mxu0 0.0
        %564 = vmatpush1.msra.mxu0 0.0
        %565 = vmatprep.subr.mxu0 0.0
        %566 = vmatpush1.msra.mxu0 0.0
        %567 = vmatprep.subr.mxu0 0.0
        %568 = vmatpush1.msra.mxu0 0.0
        %569 = vmatprep.subr.mxu0 0.0
        %570 = vmatpush1.msra.mxu0 0.0
        %571 = vmatprep.subr.mxu0 0.0
        %572 = vmatpush1.msra.mxu0 0.0
        %573 = vmatprep.subr.mxu0 0.0
        %574 = vmatpush1.msra.mxu0 0.0
        %575 = vmatprep.subr.mxu0 0.0
        %576 = vmatpush1.msra.mxu0 0.0
        %577 = vmatprep.subr.mxu0 %v543
        %578 = vmatpush1.msra.mxu0 %v541
        %579 = vmatprep.subr.mxu0 0.0
        %580 = vmatpush2.msra.mxu0 0.0
        %581 = vmatprep.subr.mxu0 0.0
        %582 = vmatpush2.msra.mxu0 0.0
        %583 = vmatprep.subr.mxu0 0.0
        %584 = vmatpush2.msra.mxu0 0.0
        %585 = vmatprep.subr.mxu0 0.0
        %586 = vmatpush2.msra.mxu0 0.0
        %587 = vmatprep.subr.mxu0 0.0
        %588 = vmatpush2.msra.mxu0 0.0
        %589 = vmatprep.subr.mxu0 0.0
        %590 = vmatpush2.msra.mxu0 0.0
        %591 = vmatprep.subr.mxu0 0.0
        %592 = vmatpush2.msra.mxu0 0.0
        %593 = vmatprep.subr.mxu0 0.0
        %594 = vmatpush2.msra.mxu0 0.0
        %595 = vmatprep.subr.mxu0 0.0
        %596 = vmatpush2.msra.mxu0 0.0
        %597 = vmatprep.subr.mxu0 0.0
        %598 = vmatpush2.msra.mxu0 0.0
        %599 = vmatprep.subr.mxu0 0.0
        %600 = vmatpush2.msra.mxu0 0.0
        %601 = vmatprep.subr.mxu0 0.0
        %602 = vmatpush2.msra.mxu0 0.0
        %603 = vmatprep.subr.mxu0 0.0
        %604 = vmatpush2.msra.mxu0 0.0
        %605 = vmatprep.subr.mxu0 0.0
        %606 = vmatpush2.msra.mxu0 0.0
        %607 = vmatprep.subr.mxu0 0.0
        %608 = vmatpush2.msra.mxu0 0.0
        %609 = vmatprep.subr.mxu0 0.0
        %610 = vmatpush2.msra.mxu0 0.0
        %611 = vmatprep.mubr.f32.mxu0 0.0
        %612 = vmatmul.mubr.f32.gmra.mxu0 %v536
        %v613 = vpop.f32.mrf.mxu0
        %v614 = vadd.f32 0.0, %v613
        %v615 = vpop.f32.mrf.mxu0
        %v616 = vadd.f32 0.0, %v615
        %617 = vmatprep.mubr.f32.mxu0 0.0
        %618 = vmatmul.mubr.f32.gmra.mxu0 %v539
        %v619 = vpop.f32.mrf.mxu0
        %v620 = vadd.f32 0.0, %v619
        %v621 = vpop.f32.mrf.mxu0
        %v622 = vadd.f32 0.0, %v621
        %623 = vdwg.mxu0
        %624 = vmatprep.subr.mxu0 0.0
        %625 = vmatpush1.msra.mxu0 0.0
        %626 = vmatprep.subr.mxu0 0.0
        %627 = vmatpush1.msra.mxu0 0.0
        %628 = vmatprep.subr.mxu0 0.0
        %629 = vmatpush1.msra.mxu0 0.0
        %630 = vmatprep.subr.mxu0 0.0
        %631 = vmatpush1.msra.mxu0 0.0
        %632 = vmatprep.subr.mxu0 0.0
        %633 = vmatpush1.msra.mxu0 0.0
        %634 = vmatprep.subr.mxu0 0.0
        %635 = vmatpush1.msra.mxu0 0.0
        %636 = vmatprep.subr.mxu0 0.0
        %637 = vmatpush1.msra.mxu0 0.0
        %638 = vmatprep.subr.mxu0 0.0
        %639 = vmatpush1.msra.mxu0 0.0
        %640 = vmatprep.subr.mxu0 0.0
        %641 = vmatpush1.msra.mxu0 0.0
        %642 = vmatprep.subr.mxu0 0.0
        %643 = vmatpush1.msra.mxu0 0.0
        %644 = vmatprep.subr.mxu0 0.0
        %645 = vmatpush1.msra.mxu0 0.0
        %646 = vmatprep.subr.mxu0 0.0
        %647 = vmatpush1.msra.mxu0 0.0
        %648 = vmatprep.subr.mxu0 0.0
        %649 = vmatpush1.msra.mxu0 0.0
        %650 = vmatprep.subr.mxu0 0.0
        %651 = vmatpush1.msra.mxu0 0.0
        %652 = vmatprep.subr.mxu0 0.0
        %653 = vmatpush1.msra.mxu0 0.0
        %654 = vmatprep.subr.mxu0 0.0
        %655 = vmatpush1.msra.mxu0 %v545
        %656 = vmatprep.subr.mxu0 0.0
        %657 = vmatpush2.msra.mxu0 0.0
        %658 = vmatprep.subr.mxu0 0.0
        %659 = vmatpush2.msra.mxu0 0.0
        %660 = vmatprep.subr.mxu0 0.0
        %661 = vmatpush2.msra.mxu0 0.0
        %662 = vmatprep.subr.mxu0 0.0
        %663 = vmatpush2.msra.mxu0 0.0
        %664 = vmatprep.subr.mxu0 0.0
        %665 = vmatpush2.msra.mxu0 0.0
        %666 = vmatprep.subr.mxu0 0.0
        %667 = vmatpush2.msra.mxu0 0.0
        %668 = vmatprep.subr.mxu0 0.0
        %669 = vmatpush2.msra.mxu0 0.0
        %670 = vmatprep.subr.mxu0 0.0
        %671 = vmatpush2.msra.mxu0 0.0
        %672 = vmatprep.subr.mxu0 0.0
        %673 = vmatpush2.msra.mxu0 0.0
        %674 = vmatprep.subr.mxu0 0.0
        %675 = vmatpush2.msra.mxu0 0.0
        %676 = vmatprep.subr.mxu0 0.0
        %677 = vmatpush2.msra.mxu0 0.0
        %678 = vmatprep.subr.mxu0 0.0
        %679 = vmatpush2.msra.mxu0 0.0
        %680 = vmatprep.subr.mxu0 0.0
        %681 = vmatpush2.msra.mxu0 0.0
        %682 = vmatprep.subr.mxu0 0.0
        %683 = vmatpush2.msra.mxu0 0.0
        %684 = vmatprep.subr.mxu0 0.0
        %685 = vmatpush2.msra.mxu0 0.0
        %686 = vmatprep.subr.mxu0 0.0
        %687 = vmatpush2.msra.mxu0 0.0
        %688 = vmatprep.mubr.f32.mxu0 0.0
        %689 = vmatmul.mubr.f32.gmra.mxu0 %v536
        %v690 = vpop.f32.mrf.mxu0
        %v691 = vadd.f32 0.0, %v690
        %v692 = vpop.f32.mrf.mxu0
        %693 = vmatprep.mubr.f32.mxu0 0.0
        %694 = vmatmul.mubr.f32.gmra.mxu0 %v539
        %v695 = vpop.f32.mrf.mxu0
        %v696 = vadd.f32 0.0, %v695
        %v697 = vpop.f32.mrf.mxu0
        %698 = vdwg.mxu0
        %v699 = vadd.f32 %v433, %v614
        %v700 = vadd.f32 %v435, %v616
        %v701 = vadd.f32 %v510, %v691
        %v702 = vadd.f32 %v439, %v620
        %v703 = vadd.f32 %v441, %v622
        %v704 = vadd.f32 %v515, %v696
        %v705 = vld [vmem:[%s168] sm:$0xff]
        %v706 = vld [vmem:[%s168 + $0x8] sm:$0xf]
        %s707 = scalar_lea.vmem %s1, 48
        %v708 = vld [vmem:[%s707] sm:$0xff]
        %v709 = vld [vmem:[%s707 + $0x8] sm:$0xff]
        %v712 = vcombine.high %v705, %v705
        %713 = vrot.lane.b32.xlu0 %v705, 110
        %v714 = vpop.permute.xlu0 %713
        %715 = vrot.lane.b32.xlu0 %v712, 110
        %v716 = vpop.permute.xlu0 %715
        %717 = vrot.lane.b32.xlu0 %v706, 110
        %v718 = vpop.permute.xlu0 %717
        %vm719 = vcmask 900096
        %v720 = vsel %vm719, %v714, %v716
        %v721 = vsel %vm719, %v716, %v718
        %v723 = vsel %vm188, %v708, 0
        %v726 = vsel %vm188, %v709, 0
        %v728 = vsel %vm195, %v720, 0
        %v730 = vsel %vm195, %v721, 0
        %v732 = vsel %vm195, %v718, 0
        %734 = vmatprep.subr.mxu0 0.0
        %735 = vmatpush1.msra.mxu0 0.0
        %736 = vmatprep.subr.mxu0 0.0
        %737 = vmatpush1.msra.mxu0 0.0
        %738 = vmatprep.subr.mxu0 0.0
        %739 = vmatpush1.msra.mxu0 0.0
        %740 = vmatprep.subr.mxu0 0.0
        %741 = vmatpush1.msra.mxu0 0.0
        %742 = vmatprep.subr.mxu0 0.0
        %743 = vmatpush1.msra.mxu0 0.0
        %744 = vmatprep.subr.mxu0 0.0
        %745 = vmatpush1.msra.mxu0 0.0
        %746 = vmatprep.subr.mxu0 0.0
        %747 = vmatpush1.msra.mxu0 0.0
        %748 = vmatprep.subr.mxu0 0.0
        %749 = vmatpush1.msra.mxu0 0.0
        %750 = vmatprep.subr.mxu0 0.0
        %751 = vmatpush1.msra.mxu0 0.0
        %752 = vmatprep.subr.mxu0 0.0
        %753 = vmatpush1.msra.mxu0 0.0
        %754 = vmatprep.subr.mxu0 0.0
        %755 = vmatpush1.msra.mxu0 0.0
        %756 = vmatprep.subr.mxu0 0.0
        %757 = vmatpush1.msra.mxu0 0.0
        %758 = vmatprep.subr.mxu0 0.0
        %759 = vmatpush1.msra.mxu0 0.0
        %760 = vmatprep.subr.mxu0 0.0
        %761 = vmatpush1.msra.mxu0 0.0
        %762 = vmatprep.subr.mxu0 0.0
        %763 = vmatpush1.msra.mxu0 0.0
        %764 = vmatprep.subr.mxu0 %v730
        %765 = vmatpush1.msra.mxu0 %v728
        %766 = vmatprep.subr.mxu0 0.0
        %767 = vmatpush2.msra.mxu0 0.0
        %768 = vmatprep.subr.mxu0 0.0
        %769 = vmatpush2.msra.mxu0 0.0
        %770 = vmatprep.subr.mxu0 0.0
        %771 = vmatpush2.msra.mxu0 0.0
        %772 = vmatprep.subr.mxu0 0.0
        %773 = vmatpush2.msra.mxu0 0.0
        %774 = vmatprep.subr.mxu0 0.0
        %775 = vmatpush2.msra.mxu0 0.0
        %776 = vmatprep.subr.mxu0 0.0
        %777 = vmatpush2.msra.mxu0 0.0
        %778 = vmatprep.subr.mxu0 0.0
        %779 = vmatpush2.msra.mxu0 0.0
        %780 = vmatprep.subr.mxu0 0.0
        %781 = vmatpush2.msra.mxu0 0.0
        %782 = vmatprep.subr.mxu0 0.0
        %783 = vmatpush2.msra.mxu0 0.0
        %784 = vmatprep.subr.mxu0 0.0
        %785 = vmatpush2.msra.mxu0 0.0
        %786 = vmatprep.subr.mxu0 0.0
        %787 = vmatpush2.msra.mxu0 0.0
        %788 = vmatprep.subr.mxu0 0.0
        %789 = vmatpush2.msra.mxu0 0.0
        %790 = vmatprep.subr.mxu0 0.0
        %791 = vmatpush2.msra.mxu0 0.0
        %792 = vmatprep.subr.mxu0 0.0
        %793 = vmatpush2.msra.mxu0 0.0
        %794 = vmatprep.subr.mxu0 0.0
        %795 = vmatpush2.msra.mxu0 0.0
        %796 = vmatprep.subr.mxu0 0.0
        %797 = vmatpush2.msra.mxu0 0.0
        %798 = vmatprep.mubr.f32.mxu0 0.0
        %799 = vmatmul.mubr.f32.gmra.mxu0 %v723
        %v800 = vpop.f32.mrf.mxu0
        %v801 = vadd.f32 0.0, %v800
        %v802 = vpop.f32.mrf.mxu0
        %v803 = vadd.f32 0.0, %v802
        %804 = vmatprep.mubr.f32.mxu0 0.0
        %805 = vmatmul.mubr.f32.gmra.mxu0 %v726
        %v806 = vpop.f32.mrf.mxu0
        %v807 = vadd.f32 0.0, %v806
        %v808 = vpop.f32.mrf.mxu0
        %v809 = vadd.f32 0.0, %v808
        %810 = vdwg.mxu0
        %811 = vmatprep.subr.mxu0 0.0
        %812 = vmatpush1.msra.mxu0 0.0
        %813 = vmatprep.subr.mxu0 0.0
        %814 = vmatpush1.msra.mxu0 0.0
        %815 = vmatprep.subr.mxu0 0.0
        %816 = vmatpush1.msra.mxu0 0.0
        %817 = vmatprep.subr.mxu0 0.0
        %818 = vmatpush1.msra.mxu0 0.0
        %819 = vmatprep.subr.mxu0 0.0
        %820 = vmatpush1.msra.mxu0 0.0
        %821 = vmatprep.subr.mxu0 0.0
        %822 = vmatpush1.msra.mxu0 0.0
        %823 = vmatprep.subr.mxu0 0.0
        %824 = vmatpush1.msra.mxu0 0.0
        %825 = vmatprep.subr.mxu0 0.0
        %826 = vmatpush1.msra.mxu0 0.0
        %827 = vmatprep.subr.mxu0 0.0
        %828 = vmatpush1.msra.mxu0 0.0
        %829 = vmatprep.subr.mxu0 0.0
        %830 = vmatpush1.msra.mxu0 0.0
        %831 = vmatprep.subr.mxu0 0.0
        %832 = vmatpush1.msra.mxu0 0.0
        %833 = vmatprep.subr.mxu0 0.0
        %834 = vmatpush1.msra.mxu0 0.0
        %835 = vmatprep.subr.mxu0 0.0
        %836 = vmatpush1.msra.mxu0 0.0
        %837 = vmatprep.subr.mxu0 0.0
        %838 = vmatpush1.msra.mxu0 0.0
        %839 = vmatprep.subr.mxu0 0.0
        %840 = vmatpush1.msra.mxu0 0.0
        %841 = vmatprep.subr.mxu0 0.0
        %842 = vmatpush1.msra.mxu0 %v732
        %843 = vmatprep.subr.mxu0 0.0
        %844 = vmatpush2.msra.mxu0 0.0
        %845 = vmatprep.subr.mxu0 0.0
        %846 = vmatpush2.msra.mxu0 0.0
        %847 = vmatprep.subr.mxu0 0.0
        %848 = vmatpush2.msra.mxu0 0.0
        %849 = vmatprep.subr.mxu0 0.0
        %850 = vmatpush2.msra.mxu0 0.0
        %851 = vmatprep.subr.mxu0 0.0
        %852 = vmatpush2.msra.mxu0 0.0
        %853 = vmatprep.subr.mxu0 0.0
        %854 = vmatpush2.msra.mxu0 0.0
        %855 = vmatprep.subr.mxu0 0.0
        %856 = vmatpush2.msra.mxu0 0.0
        %857 = vmatprep.subr.mxu0 0.0
        %858 = vmatpush2.msra.mxu0 0.0
        %859 = vmatprep.subr.mxu0 0.0
        %860 = vmatpush2.msra.mxu0 0.0
        %861 = vmatprep.subr.mxu0 0.0
        %862 = vmatpush2.msra.mxu0 0.0
        %863 = vmatprep.subr.mxu0 0.0
        %864 = vmatpush2.msra.mxu0 0.0
        %865 = vmatprep.subr.mxu0 0.0
        %866 = vmatpush2.msra.mxu0 0.0
        %867 = vmatprep.subr.mxu0 0.0
        %868 = vmatpush2.msra.mxu0 0.0
        %869 = vmatprep.subr.mxu0 0.0
        %870 = vmatpush2.msra.mxu0 0.0
        %871 = vmatprep.subr.mxu0 0.0
        %872 = vmatpush2.msra.mxu0 0.0
        %873 = vmatprep.subr.mxu0 0.0
        %874 = vmatpush2.msra.mxu0 0.0
        %875 = vmatprep.mubr.f32.mxu0 0.0
        %876 = vmatmul.mubr.f32.gmra.mxu0 %v723
        %v877 = vpop.f32.mrf.mxu0
        %v878 = vadd.f32 0.0, %v877
        %v879 = vpop.f32.mrf.mxu0
        %880 = vmatprep.mubr.f32.mxu0 0.0
        %881 = vmatmul.mubr.f32.gmra.mxu0 %v726
        %v882 = vpop.f32.mrf.mxu0
        %v883 = vadd.f32 0.0, %v882
        %v884 = vpop.f32.mrf.mxu0
        %885 = vdwg.mxu0
        %v886 = vadd.f32 %v699, %v801
        %v887 = vadd.f32 %v700, %v803
        %v888 = vadd.f32 %v701, %v878
        %v889 = vadd.f32 %v702, %v807
        %v890 = vadd.f32 %v703, %v809
        %v891 = vadd.f32 %v704, %v883
        %v892 = vld [vmem:[%s168] sm:$0xff]
        %v893 = vld [vmem:[%s168 + $0x8] sm:$0xf]
        %s894 = scalar_lea.vmem %s1, 64
        %v895 = vld [vmem:[%s894] sm:$0xff]
        %v896 = vld [vmem:[%s894 + $0x8] sm:$0xff]
        %v899 = vcombine.high %v892, %v892
        %900 = vrot.lane.b32.xlu0 %v892, 109
        %v901 = vpop.permute.xlu0 %900
        %902 = vrot.lane.b32.xlu0 %v899, 109
        %v903 = vpop.permute.xlu0 %902
        %904 = vrot.lane.b32.xlu0 %v893, 109
        %v905 = vpop.permute.xlu0 %904
        %vm906 = vcmask 891904
        %v907 = vsel %vm906, %v901, %v903
        %v908 = vsel %vm906, %v903, %v905
        %v910 = vsel %vm188, %v895, 0
        %v913 = vsel %vm188, %v896, 0
        %v915 = vsel %vm195, %v907, 0
        %v917 = vsel %vm195, %v908, 0
        %v919 = vsel %vm195, %v905, 0
        %921 = vmatprep.subr.mxu0 0.0
        %922 = vmatpush1.msra.mxu0 0.0
        %923 = vmatprep.subr.mxu0 0.0
        %924 = vmatpush1.msra.mxu0 0.0
        %925 = vmatprep.subr.mxu0 0.0
        %926 = vmatpush1.msra.mxu0 0.0
        %927 = vmatprep.subr.mxu0 0.0
        %928 = vmatpush1.msra.mxu0 0.0
        %929 = vmatprep.subr.mxu0 0.0
        %930 = vmatpush1.msra.mxu0 0.0
        %931 = vmatprep.subr.mxu0 0.0
        %932 = vmatpush1.msra.mxu0 0.0
        %933 = vmatprep.subr.mxu0 0.0
        %934 = vmatpush1.msra.mxu0 0.0
        %935 = vmatprep.subr.mxu0 0.0
        %936 = vmatpush1.msra.mxu0 0.0
        %937 = vmatprep.subr.mxu0 0.0
        %938 = vmatpush1.msra.mxu0 0.0
        %939 = vmatprep.subr.mxu0 0.0
        %940 = vmatpush1.msra.mxu0 0.0
        %941 = vmatprep.subr.mxu0 0.0
        %942 = vmatpush1.msra.mxu0 0.0
        %943 = vmatprep.subr.mxu0 0.0
        %944 = vmatpush1.msra.mxu0 0.0
        %945 = vmatprep.subr.mxu0 0.0
        %946 = vmatpush1.msra.mxu0 0.0
        %947 = vmatprep.subr.mxu0 0.0
        %948 = vmatpush1.msra.mxu0 0.0
        %949 = vmatprep.subr.mxu0 0.0
        %950 = vmatpush1.msra.mxu0 0.0
        %951 = vmatprep.subr.mxu0 %v917
        %952 = vmatpush1.msra.mxu0 %v915
        %953 = vmatprep.subr.mxu0 0.0
        %954 = vmatpush2.msra.mxu0 0.0
        %955 = vmatprep.subr.mxu0 0.0
        %956 = vmatpush2.msra.mxu0 0.0
        %957 = vmatprep.subr.mxu0 0.0
        %958 = vmatpush2.msra.mxu0 0.0
        %959 = vmatprep.subr.mxu0 0.0
        %960 = vmatpush2.msra.mxu0 0.0
        %961 = vmatprep.subr.mxu0 0.0
        %962 = vmatpush2.msra.mxu0 0.0
        %963 = vmatprep.subr.mxu0 0.0
        %964 = vmatpush2.msra.mxu0 0.0
        %965 = vmatprep.subr.mxu0 0.0
        %966 = vmatpush2.msra.mxu0 0.0
        %967 = vmatprep.subr.mxu0 0.0
        %968 = vmatpush2.msra.mxu0 0.0
        %969 = vmatprep.subr.mxu0 0.0
        %970 = vmatpush2.msra.mxu0 0.0
        %971 = vmatprep.subr.mxu0 0.0
        %972 = vmatpush2.msra.mxu0 0.0
        %973 = vmatprep.subr.mxu0 0.0
        %974 = vmatpush2.msra.mxu0 0.0
        %975 = vmatprep.subr.mxu0 0.0
        %976 = vmatpush2.msra.mxu0 0.0
        %977 = vmatprep.subr.mxu0 0.0
        %978 = vmatpush2.msra.mxu0 0.0
        %979 = vmatprep.subr.mxu0 0.0
        %980 = vmatpush2.msra.mxu0 0.0
        %981 = vmatprep.subr.mxu0 0.0
        %982 = vmatpush2.msra.mxu0 0.0
        %983 = vmatprep.subr.mxu0 0.0
        %984 = vmatpush2.msra.mxu0 0.0
        %985 = vmatprep.mubr.f32.mxu0 0.0
        %986 = vmatmul.mubr.f32.gmra.mxu0 %v910
        %v987 = vpop.f32.mrf.mxu0
        %v988 = vadd.f32 0.0, %v987
        %v989 = vpop.f32.mrf.mxu0
        %v990 = vadd.f32 0.0, %v989
        %991 = vmatprep.mubr.f32.mxu0 0.0
        %992 = vmatmul.mubr.f32.gmra.mxu0 %v913
        %v993 = vpop.f32.mrf.mxu0
        %v994 = vadd.f32 0.0, %v993
        %v995 = vpop.f32.mrf.mxu0
        %v996 = vadd.f32 0.0, %v995
        %997 = vdwg.mxu0
        %998 = vmatprep.subr.mxu0 0.0
        %999 = vmatpush1.msra.mxu0 0.0
        %1000 = vmatprep.subr.mxu0 0.0
        %1001 = vmatpush1.msra.mxu0 0.0
        %1002 = vmatprep.subr.mxu0 0.0
        %1003 = vmatpush1.msra.mxu0 0.0
        %1004 = vmatprep.subr.mxu0 0.0
        %1005 = vmatpush1.msra.mxu0 0.0
        %1006 = vmatprep.subr.mxu0 0.0
        %1007 = vmatpush1.msra.mxu0 0.0
        %1008 = vmatprep.subr.mxu0 0.0
        %1009 = vmatpush1.msra.mxu0 0.0
        %1010 = vmatprep.subr.mxu0 0.0
        %1011 = vmatpush1.msra.mxu0 0.0
        %1012 = vmatprep.subr.mxu0 0.0
        %1013 = vmatpush1.msra.mxu0 0.0
        %1014 = vmatprep.subr.mxu0 0.0
        %1015 = vmatpush1.msra.mxu0 0.0
        %1016 = vmatprep.subr.mxu0 0.0
        %1017 = vmatpush1.msra.mxu0 0.0
        %1018 = vmatprep.subr.mxu0 0.0
        %1019 = vmatpush1.msra.mxu0 0.0
        %1020 = vmatprep.subr.mxu0 0.0
        %1021 = vmatpush1.msra.mxu0 0.0
        %1022 = vmatprep.subr.mxu0 0.0
        %1023 = vmatpush1.msra.mxu0 0.0
        %1024 = vmatprep.subr.mxu0 0.0
        %1025 = vmatpush1.msra.mxu0 0.0
        %1026 = vmatprep.subr.mxu0 0.0
        %1027 = vmatpush1.msra.mxu0 0.0
        %1028 = vmatprep.subr.mxu0 0.0
        %1029 = vmatpush1.msra.mxu0 %v919
        %1030 = vmatprep.subr.mxu0 0.0
        %1031 = vmatpush2.msra.mxu0 0.0
        %1032 = vmatprep.subr.mxu0 0.0
        %1033 = vmatpush2.msra.mxu0 0.0
        %1034 = vmatprep.subr.mxu0 0.0
        %1035 = vmatpush2.msra.mxu0 0.0
        %1036 = vmatprep.subr.mxu0 0.0
        %1037 = vmatpush2.msra.mxu0 0.0
        %1038 = vmatprep.subr.mxu0 0.0
        %1039 = vmatpush2.msra.mxu0 0.0
        %1040 = vmatprep.subr.mxu0 0.0
        %1041 = vmatpush2.msra.mxu0 0.0
        %1042 = vmatprep.subr.mxu0 0.0
        %1043 = vmatpush2.msra.mxu0 0.0
        %1044 = vmatprep.subr.mxu0 0.0
        %1045 = vmatpush2.msra.mxu0 0.0
        %1046 = vmatprep.subr.mxu0 0.0
        %1047 = vmatpush2.msra.mxu0 0.0
        %1048 = vmatprep.subr.mxu0 0.0
        %1049 = vmatpush2.msra.mxu0 0.0
        %1050 = vmatprep.subr.mxu0 0.0
        %1051 = vmatpush2.msra.mxu0 0.0
        %1052 = vmatprep.subr.mxu0 0.0
        %1053 = vmatpush2.msra.mxu0 0.0
        %1054 = vmatprep.subr.mxu0 0.0
        %1055 = vmatpush2.msra.mxu0 0.0
        %1056 = vmatprep.subr.mxu0 0.0
        %1057 = vmatpush2.msra.mxu0 0.0
        %1058 = vmatprep.subr.mxu0 0.0
        %1059 = vmatpush2.msra.mxu0 0.0
        %1060 = vmatprep.subr.mxu0 0.0
        %1061 = vmatpush2.msra.mxu0 0.0
        %1062 = vmatprep.mubr.f32.mxu0 0.0
        %1063 = vmatmul.mubr.f32.gmra.mxu0 %v910
        %v1064 = vpop.f32.mrf.mxu0
        %v1065 = vadd.f32 0.0, %v1064
        %v1066 = vpop.f32.mrf.mxu0
        %1067 = vmatprep.mubr.f32.mxu0 0.0
        %1068 = vmatmul.mubr.f32.gmra.mxu0 %v913
        %v1069 = vpop.f32.mrf.mxu0
        %v1070 = vadd.f32 0.0, %v1069
        %v1071 = vpop.f32.mrf.mxu0
        %1072 = vdwg.mxu0
        %v1073 = vadd.f32 %v886, %v988
        %v1074 = vadd.f32 %v887, %v990
        %v1075 = vadd.f32 %v888, %v1065
        %v1076 = vadd.f32 %v889, %v994
        %v1077 = vadd.f32 %v890, %v996
        %v1078 = vadd.f32 %v891, %v1070
        %v1079 = vld [vmem:[%s168] sm:$0xff]
        %v1080 = vld [vmem:[%s168 + $0x8] sm:$0xf]
        %s1081 = scalar_lea.vmem %s1, 80
        %v1082 = vld [vmem:[%s1081] sm:$0xff]
        %v1083 = vld [vmem:[%s1081 + $0x8] sm:$0xff]
        %v1086 = vcombine.high %v1079, %v1079
        %1087 = vrot.lane.b32.xlu0 %v1079, 108
        %v1088 = vpop.permute.xlu0 %1087
        %1089 = vrot.lane.b32.xlu0 %v1086, 108
        %v1090 = vpop.permute.xlu0 %1089
        %1091 = vrot.lane.b32.xlu0 %v1080, 108
        %v1092 = vpop.permute.xlu0 %1091
        %vm1093 = vcmask 883712
        %v1094 = vsel %vm1093, %v1088, %v1090
        %v1095 = vsel %vm1093, %v1090, %v1092
        %v1097 = vsel %vm188, %v1082, 0
        %v1100 = vsel %vm188, %v1083, 0
        %v1102 = vsel %vm195, %v1094, 0
        %v1104 = vsel %vm195, %v1095, 0
        %v1106 = vsel %vm195, %v1092, 0
        %1108 = vmatprep.subr.mxu0 0.0
        %1109 = vmatpush1.msra.mxu0 0.0
        %1110 = vmatprep.subr.mxu0 0.0
        %1111 = vmatpush1.msra.mxu0 0.0
        %1112 = vmatprep.subr.mxu0 0.0
        %1113 = vmatpush1.msra.mxu0 0.0
        %1114 = vmatprep.subr.mxu0 0.0
        %1115 = vmatpush1.msra.mxu0 0.0
        %1116 = vmatprep.subr.mxu0 0.0
        %1117 = vmatpush1.msra.mxu0 0.0
        %1118 = vmatprep.subr.mxu0 0.0
        %1119 = vmatpush1.msra.mxu0 0.0
        %1120 = vmatprep.subr.mxu0 0.0
        %1121 = vmatpush1.msra.mxu0 0.0
        %1122 = vmatprep.subr.mxu0 0.0
        %1123 = vmatpush1.msra.mxu0 0.0
        %1124 = vmatprep.subr.mxu0 0.0
        %1125 = vmatpush1.msra.mxu0 0.0
        %1126 = vmatprep.subr.mxu0 0.0
        %1127 = vmatpush1.msra.mxu0 0.0
        %1128 = vmatprep.subr.mxu0 0.0
        %1129 = vmatpush1.msra.mxu0 0.0
        %1130 = vmatprep.subr.mxu0 0.0
        %1131 = vmatpush1.msra.mxu0 0.0
        %1132 = vmatprep.subr.mxu0 0.0
        %1133 = vmatpush1.msra.mxu0 0.0
        %1134 = vmatprep.subr.mxu0 0.0
        %1135 = vmatpush1.msra.mxu0 0.0
        %1136 = vmatprep.subr.mxu0 0.0
        %1137 = vmatpush1.msra.mxu0 0.0
        %1138 = vmatprep.subr.mxu0 %v1104
        %1139 = vmatpush1.msra.mxu0 %v1102
        %1140 = vmatprep.subr.mxu0 0.0
        %1141 = vmatpush2.msra.mxu0 0.0
        %1142 = vmatprep.subr.mxu0 0.0
        %1143 = vmatpush2.msra.mxu0 0.0
        %1144 = vmatprep.subr.mxu0 0.0
        %1145 = vmatpush2.msra.mxu0 0.0
        %1146 = vmatprep.subr.mxu0 0.0
        %1147 = vmatpush2.msra.mxu0 0.0
        %1148 = vmatprep.subr.mxu0 0.0
        %1149 = vmatpush2.msra.mxu0 0.0
        %1150 = vmatprep.subr.mxu0 0.0
        %1151 = vmatpush2.msra.mxu0 0.0
        %1152 = vmatprep.subr.mxu0 0.0
        %1153 = vmatpush2.msra.mxu0 0.0
        %1154 = vmatprep.subr.mxu0 0.0
        %1155 = vmatpush2.msra.mxu0 0.0
        %1156 = vmatprep.subr.mxu0 0.0
        %1157 = vmatpush2.msra.mxu0 0.0
        %1158 = vmatprep.subr.mxu0 0.0
        %1159 = vmatpush2.msra.mxu0 0.0
        %1160 = vmatprep.subr.mxu0 0.0
        %1161 = vmatpush2.msra.mxu0 0.0
        %1162 = vmatprep.subr.mxu0 0.0
        %1163 = vmatpush2.msra.mxu0 0.0
        %1164 = vmatprep.subr.mxu0 0.0
        %1165 = vmatpush2.msra.mxu0 0.0
        %1166 = vmatprep.subr.mxu0 0.0
        %1167 = vmatpush2.msra.mxu0 0.0
        %1168 = vmatprep.subr.mxu0 0.0
        %1169 = vmatpush2.msra.mxu0 0.0
        %1170 = vmatprep.subr.mxu0 0.0
        %1171 = vmatpush2.msra.mxu0 0.0
        %1172 = vmatprep.mubr.f32.mxu0 0.0
        %1173 = vmatmul.mubr.f32.gmra.mxu0 %v1097
        %v1174 = vpop.f32.mrf.mxu0
        %v1175 = vadd.f32 0.0, %v1174
        %v1176 = vpop.f32.mrf.mxu0
        %v1177 = vadd.f32 0.0, %v1176
        %1178 = vmatprep.mubr.f32.mxu0 0.0
        %1179 = vmatmul.mubr.f32.gmra.mxu0 %v1100
        %v1180 = vpop.f32.mrf.mxu0
        %v1181 = vadd.f32 0.0, %v1180
        %v1182 = vpop.f32.mrf.mxu0
        %v1183 = vadd.f32 0.0, %v1182
        %1184 = vdwg.mxu0
        %1185 = vmatprep.subr.mxu0 0.0
        %1186 = vmatpush1.msra.mxu0 0.0
        %1187 = vmatprep.subr.mxu0 0.0
        %1188 = vmatpush1.msra.mxu0 0.0
        %1189 = vmatprep.subr.mxu0 0.0
        %1190 = vmatpush1.msra.mxu0 0.0
        %1191 = vmatprep.subr.mxu0 0.0
        %1192 = vmatpush1.msra.mxu0 0.0
        %1193 = vmatprep.subr.mxu0 0.0
        %1194 = vmatpush1.msra.mxu0 0.0
        %1195 = vmatprep.subr.mxu0 0.0
        %1196 = vmatpush1.msra.mxu0 0.0
        %1197 = vmatprep.subr.mxu0 0.0
        %1198 = vmatpush1.msra.mxu0 0.0
        %1199 = vmatprep.subr.mxu0 0.0
        %1200 = vmatpush1.msra.mxu0 0.0
        %1201 = vmatprep.subr.mxu0 0.0
        %1202 = vmatpush1.msra.mxu0 0.0
        %1203 = vmatprep.subr.mxu0 0.0
        %1204 = vmatpush1.msra.mxu0 0.0
        %1205 = vmatprep.subr.mxu0 0.0
        %1206 = vmatpush1.msra.mxu0 0.0
        %1207 = vmatprep.subr.mxu0 0.0
        %1208 = vmatpush1.msra.mxu0 0.0
        %1209 = vmatprep.subr.mxu0 0.0
        %1210 = vmatpush1.msra.mxu0 0.0
        %1211 = vmatprep.subr.mxu0 0.0
        %1212 = vmatpush1.msra.mxu0 0.0
        %1213 = vmatprep.subr.mxu0 0.0
        %1214 = vmatpush1.msra.mxu0 0.0
        %1215 = vmatprep.subr.mxu0 0.0
        %1216 = vmatpush1.msra.mxu0 %v1106
        %1217 = vmatprep.subr.mxu0 0.0
        %1218 = vmatpush2.msra.mxu0 0.0
        %1219 = vmatprep.subr.mxu0 0.0
        %1220 = vmatpush2.msra.mxu0 0.0
        %1221 = vmatprep.subr.mxu0 0.0
        %1222 = vmatpush2.msra.mxu0 0.0
        %1223 = vmatprep.subr.mxu0 0.0
        %1224 = vmatpush2.msra.mxu0 0.0
        %1225 = vmatprep.subr.mxu0 0.0
        %1226 = vmatpush2.msra.mxu0 0.0
        %1227 = vmatprep.subr.mxu0 0.0
        %1228 = vmatpush2.msra.mxu0 0.0
        %1229 = vmatprep.subr.mxu0 0.0
        %1230 = vmatpush2.msra.mxu0 0.0
        %1231 = vmatprep.subr.mxu0 0.0
        %1232 = vmatpush2.msra.mxu0 0.0
        %1233 = vmatprep.subr.mxu0 0.0
        %1234 = vmatpush2.msra.mxu0 0.0
        %1235 = vmatprep.subr.mxu0 0.0
        %1236 = vmatpush2.msra.mxu0 0.0
        %1237 = vmatprep.subr.mxu0 0.0
        %1238 = vmatpush2.msra.mxu0 0.0
        %1239 = vmatprep.subr.mxu0 0.0
        %1240 = vmatpush2.msra.mxu0 0.0
        %1241 = vmatprep.subr.mxu0 0.0
        %1242 = vmatpush2.msra.mxu0 0.0
        %1243 = vmatprep.subr.mxu0 0.0
        %1244 = vmatpush2.msra.mxu0 0.0
        %1245 = vmatprep.subr.mxu0 0.0
        %1246 = vmatpush2.msra.mxu0 0.0
        %1247 = vmatprep.subr.mxu0 0.0
        %1248 = vmatpush2.msra.mxu0 0.0
        %1249 = vmatprep.mubr.f32.mxu0 0.0
        %1250 = vmatmul.mubr.f32.gmra.mxu0 %v1097
        %v1251 = vpop.f32.mrf.mxu0
        %v1252 = vadd.f32 0.0, %v1251
        %v1253 = vpop.f32.mrf.mxu0
        %1254 = vmatprep.mubr.f32.mxu0 0.0
        %1255 = vmatmul.mubr.f32.gmra.mxu0 %v1100
        %v1256 = vpop.f32.mrf.mxu0
        %v1257 = vadd.f32 0.0, %v1256
        %v1258 = vpop.f32.mrf.mxu0
        %1259 = vdwg.mxu0
        %v1260 = vadd.f32 %v1073, %v1175
        %v1261 = vadd.f32 %v1074, %v1177
        %v1262 = vadd.f32 %v1075, %v1252
        %v1263 = vadd.f32 %v1076, %v1181
        %v1264 = vadd.f32 %v1077, %v1183
        %v1265 = vadd.f32 %v1078, %v1257
        %v1266 = vld [vmem:[%s168] sm:$0xff]
        %v1267 = vld [vmem:[%s168 + $0x8] sm:$0xf]
        %s1268 = scalar_lea.vmem %s1, 96
        %v1269 = vld [vmem:[%s1268] sm:$0xff]
        %v1270 = vld [vmem:[%s1268 + $0x8] sm:$0xff]
        %v1273 = vcombine.high %v1266, %v1266
        %1274 = vrot.lane.b32.xlu0 %v1266, 92
        %v1275 = vpop.permute.xlu0 %1274
        %1276 = vrot.lane.b32.xlu0 %v1273, 92
        %v1277 = vpop.permute.xlu0 %1276
        %1278 = vrot.lane.b32.xlu0 %v1267, 92
        %v1279 = vpop.permute.xlu0 %1278
        %vm1280 = vcmask 752640
        %v1281 = vsel %vm1280, %v1275, %v1277
        %v1282 = vsel %vm1280, %v1277, %v1279
        %v1284 = vsel %vm188, %v1269, 0
        %v1287 = vsel %vm188, %v1270, 0
        %v1289 = vsel %vm195, %v1281, 0
        %v1291 = vsel %vm195, %v1282, 0
        %v1293 = vsel %vm195, %v1279, 0
        %1295 = vmatprep.subr.mxu0 0.0
        %1296 = vmatpush1.msra.mxu0 0.0
        %1297 = vmatprep.subr.mxu0 0.0
        %1298 = vmatpush1.msra.mxu0 0.0
        %1299 = vmatprep.subr.mxu0 0.0
        %1300 = vmatpush1.msra.mxu0 0.0
        %1301 = vmatprep.subr.mxu0 0.0
        %1302 = vmatpush1.msra.mxu0 0.0
        %1303 = vmatprep.subr.mxu0 0.0
        %1304 = vmatpush1.msra.mxu0 0.0
        %1305 = vmatprep.subr.mxu0 0.0
        %1306 = vmatpush1.msra.mxu0 0.0
        %1307 = vmatprep.subr.mxu0 0.0
        %1308 = vmatpush1.msra.mxu0 0.0
        %1309 = vmatprep.subr.mxu0 0.0
        %1310 = vmatpush1.msra.mxu0 0.0
        %1311 = vmatprep.subr.mxu0 0.0
        %1312 = vmatpush1.msra.mxu0 0.0
        %1313 = vmatprep.subr.mxu0 0.0
        %1314 = vmatpush1.msra.mxu0 0.0
        %1315 = vmatprep.subr.mxu0 0.0
        %1316 = vmatpush1.msra.mxu0 0.0
        %1317 = vmatprep.subr.mxu0 0.0
        %1318 = vmatpush1.msra.mxu0 0.0
        %1319 = vmatprep.subr.mxu0 0.0
        %1320 = vmatpush1.msra.mxu0 0.0
        %1321 = vmatprep.subr.mxu0 0.0
        %1322 = vmatpush1.msra.mxu0 0.0
        %1323 = vmatprep.subr.mxu0 0.0
        %1324 = vmatpush1.msra.mxu0 0.0
        %1325 = vmatprep.subr.mxu0 %v1291
        %1326 = vmatpush1.msra.mxu0 %v1289
        %1327 = vmatprep.subr.mxu0 0.0
        %1328 = vmatpush2.msra.mxu0 0.0
        %1329 = vmatprep.subr.mxu0 0.0
        %1330 = vmatpush2.msra.mxu0 0.0
        %1331 = vmatprep.subr.mxu0 0.0
        %1332 = vmatpush2.msra.mxu0 0.0
        %1333 = vmatprep.subr.mxu0 0.0
        %1334 = vmatpush2.msra.mxu0 0.0
        %1335 = vmatprep.subr.mxu0 0.0
        %1336 = vmatpush2.msra.mxu0 0.0
        %1337 = vmatprep.subr.mxu0 0.0
        %1338 = vmatpush2.msra.mxu0 0.0
        %1339 = vmatprep.subr.mxu0 0.0
        %1340 = vmatpush2.msra.mxu0 0.0
        %1341 = vmatprep.subr.mxu0 0.0
        %1342 = vmatpush2.msra.mxu0 0.0
        %1343 = vmatprep.subr.mxu0 0.0
        %1344 = vmatpush2.msra.mxu0 0.0
        %1345 = vmatprep.subr.mxu0 0.0
        %1346 = vmatpush2.msra.mxu0 0.0
        %1347 = vmatprep.subr.mxu0 0.0
        %1348 = vmatpush2.msra.mxu0 0.0
        %1349 = vmatprep.subr.mxu0 0.0
        %1350 = vmatpush2.msra.mxu0 0.0
        %1351 = vmatprep.subr.mxu0 0.0
        %1352 = vmatpush2.msra.mxu0 0.0
        %1353 = vmatprep.subr.mxu0 0.0
        %1354 = vmatpush2.msra.mxu0 0.0
        %1355 = vmatprep.subr.mxu0 0.0
        %1356 = vmatpush2.msra.mxu0 0.0
        %1357 = vmatprep.subr.mxu0 0.0
        %1358 = vmatpush2.msra.mxu0 0.0
        %1359 = vmatprep.mubr.f32.mxu0 0.0
        %1360 = vmatmul.mubr.f32.gmra.mxu0 %v1284
        %v1361 = vpop.f32.mrf.mxu0
        %v1362 = vadd.f32 0.0, %v1361
        %v1363 = vpop.f32.mrf.mxu0
        %v1364 = vadd.f32 0.0, %v1363
        %1365 = vmatprep.mubr.f32.mxu0 0.0
        %1366 = vmatmul.mubr.f32.gmra.mxu0 %v1287
        %v1367 = vpop.f32.mrf.mxu0
        %v1368 = vadd.f32 0.0, %v1367
        %v1369 = vpop.f32.mrf.mxu0
        %v1370 = vadd.f32 0.0, %v1369
        %1371 = vdwg.mxu0
        %1372 = vmatprep.subr.mxu0 0.0
        %1373 = vmatpush1.msra.mxu0 0.0
        %1374 = vmatprep.subr.mxu0 0.0
        %1375 = vmatpush1.msra.mxu0 0.0
        %1376 = vmatprep.subr.mxu0 0.0
        %1377 = vmatpush1.msra.mxu0 0.0
        %1378 = vmatprep.subr.mxu0 0.0
        %1379 = vmatpush1.msra.mxu0 0.0
        %1380 = vmatprep.subr.mxu0 0.0
        %1381 = vmatpush1.msra.mxu0 0.0
        %1382 = vmatprep.subr.mxu0 0.0
        %1383 = vmatpush1.msra.mxu0 0.0
        %1384 = vmatprep.subr.mxu0 0.0
        %1385 = vmatpush1.msra.mxu0 0.0
        %1386 = vmatprep.subr.mxu0 0.0
        %1387 = vmatpush1.msra.mxu0 0.0
        %1388 = vmatprep.subr.mxu0 0.0
        %1389 = vmatpush1.msra.mxu0 0.0
        %1390 = vmatprep.subr.mxu0 0.0
        %1391 = vmatpush1.msra.mxu0 0.0
        %1392 = vmatprep.subr.mxu0 0.0
        %1393 = vmatpush1.msra.mxu0 0.0
        %1394 = vmatprep.subr.mxu0 0.0
        %1395 = vmatpush1.msra.mxu0 0.0
        %1396 = vmatprep.subr.mxu0 0.0
        %1397 = vmatpush1.msra.mxu0 0.0
        %1398 = vmatprep.subr.mxu0 0.0
        %1399 = vmatpush1.msra.mxu0 0.0
        %1400 = vmatprep.subr.mxu0 0.0
        %1401 = vmatpush1.msra.mxu0 0.0
        %1402 = vmatprep.subr.mxu0 0.0
        %1403 = vmatpush1.msra.mxu0 %v1293
        %1404 = vmatprep.subr.mxu0 0.0
        %1405 = vmatpush2.msra.mxu0 0.0
        %1406 = vmatprep.subr.mxu0 0.0
        %1407 = vmatpush2.msra.mxu0 0.0
        %1408 = vmatprep.subr.mxu0 0.0
        %1409 = vmatpush2.msra.mxu0 0.0
        %1410 = vmatprep.subr.mxu0 0.0
        %1411 = vmatpush2.msra.mxu0 0.0
        %1412 = vmatprep.subr.mxu0 0.0
        %1413 = vmatpush2.msra.mxu0 0.0
        %1414 = vmatprep.subr.mxu0 0.0
        %1415 = vmatpush2.msra.mxu0 0.0
        %1416 = vmatprep.subr.mxu0 0.0
        %1417 = vmatpush2.msra.mxu0 0.0
        %1418 = vmatprep.subr.mxu0 0.0
        %1419 = vmatpush2.msra.mxu0 0.0
        %1420 = vmatprep.subr.mxu0 0.0
        %1421 = vmatpush2.msra.mxu0 0.0
        %1422 = vmatprep.subr.mxu0 0.0
        %1423 = vmatpush2.msra.mxu0 0.0
        %1424 = vmatprep.subr.mxu0 0.0
        %1425 = vmatpush2.msra.mxu0 0.0
        %1426 = vmatprep.subr.mxu0 0.0
        %1427 = vmatpush2.msra.mxu0 0.0
        %1428 = vmatprep.subr.mxu0 0.0
        %1429 = vmatpush2.msra.mxu0 0.0
        %1430 = vmatprep.subr.mxu0 0.0
        %1431 = vmatpush2.msra.mxu0 0.0
        %1432 = vmatprep.subr.mxu0 0.0
        %1433 = vmatpush2.msra.mxu0 0.0
        %1434 = vmatprep.subr.mxu0 0.0
        %1435 = vmatpush2.msra.mxu0 0.0
        %1436 = vmatprep.mubr.f32.mxu0 0.0
        %1437 = vmatmul.mubr.f32.gmra.mxu0 %v1284
        %v1438 = vpop.f32.mrf.mxu0
        %v1439 = vadd.f32 0.0, %v1438
        %v1440 = vpop.f32.mrf.mxu0
        %1441 = vmatprep.mubr.f32.mxu0 0.0
        %1442 = vmatmul.mubr.f32.gmra.mxu0 %v1287
        %v1443 = vpop.f32.mrf.mxu0
        %v1444 = vadd.f32 0.0, %v1443
        %v1445 = vpop.f32.mrf.mxu0
        %1446 = vdwg.mxu0
        %v1447 = vadd.f32 %v1260, %v1362
        %v1448 = vadd.f32 %v1261, %v1364
        %v1449 = vadd.f32 %v1262, %v1439
        %v1450 = vadd.f32 %v1263, %v1368
        %v1451 = vadd.f32 %v1264, %v1370
        %v1452 = vadd.f32 %v1265, %v1444
        %v1453 = vld [vmem:[%s168] sm:$0xff]
        %v1454 = vld [vmem:[%s168 + $0x8] sm:$0xf]
        %s1455 = scalar_lea.vmem %s1, 112
        %v1456 = vld [vmem:[%s1455] sm:$0xff]
        %v1457 = vld [vmem:[%s1455 + $0x8] sm:$0xff]
        %v1460 = vcombine.high %v1453, %v1453
        %1461 = vrot.lane.b32.xlu0 %v1453, 91
        %v1462 = vpop.permute.xlu0 %1461
        %1463 = vrot.lane.b32.xlu0 %v1460, 91
        %v1464 = vpop.permute.xlu0 %1463
        %1465 = vrot.lane.b32.xlu0 %v1454, 91
        %v1466 = vpop.permute.xlu0 %1465
        %vm1467 = vcmask 744448
        %v1468 = vsel %vm1467, %v1462, %v1464
        %v1469 = vsel %vm1467, %v1464, %v1466
        %v1471 = vsel %vm188, %v1456, 0
        %v1474 = vsel %vm188, %v1457, 0
        %v1476 = vsel %vm195, %v1468, 0
        %v1478 = vsel %vm195, %v1469, 0
        %v1480 = vsel %vm195, %v1466, 0
        %1482 = vmatprep.subr.mxu0 0.0
        %1483 = vmatpush1.msra.mxu0 0.0
        %1484 = vmatprep.subr.mxu0 0.0
        %1485 = vmatpush1.msra.mxu0 0.0
        %1486 = vmatprep.subr.mxu0 0.0
        %1487 = vmatpush1.msra.mxu0 0.0
        %1488 = vmatprep.subr.mxu0 0.0
        %1489 = vmatpush1.msra.mxu0 0.0
        %1490 = vmatprep.subr.mxu0 0.0
        %1491 = vmatpush1.msra.mxu0 0.0
        %1492 = vmatprep.subr.mxu0 0.0
        %1493 = vmatpush1.msra.mxu0 0.0
        %1494 = vmatprep.subr.mxu0 0.0
        %1495 = vmatpush1.msra.mxu0 0.0
        %1496 = vmatprep.subr.mxu0 0.0
        %1497 = vmatpush1.msra.mxu0 0.0
        %1498 = vmatprep.subr.mxu0 0.0
        %1499 = vmatpush1.msra.mxu0 0.0
        %1500 = vmatprep.subr.mxu0 0.0
        %1501 = vmatpush1.msra.mxu0 0.0
        %1502 = vmatprep.subr.mxu0 0.0
        %1503 = vmatpush1.msra.mxu0 0.0
        %1504 = vmatprep.subr.mxu0 0.0
        %1505 = vmatpush1.msra.mxu0 0.0
        %1506 = vmatprep.subr.mxu0 0.0
        %1507 = vmatpush1.msra.mxu0 0.0
        %1508 = vmatprep.subr.mxu0 0.0
        %1509 = vmatpush1.msra.mxu0 0.0
        %1510 = vmatprep.subr.mxu0 0.0
        %1511 = vmatpush1.msra.mxu0 0.0
        %1512 = vmatprep.subr.mxu0 %v1478
        %1513 = vmatpush1.msra.mxu0 %v1476
        %1514 = vmatprep.subr.mxu0 0.0
        %1515 = vmatpush2.msra.mxu0 0.0
        %1516 = vmatprep.subr.mxu0 0.0
        %1517 = vmatpush2.msra.mxu0 0.0
        %1518 = vmatprep.subr.mxu0 0.0
        %1519 = vmatpush2.msra.mxu0 0.0
        %1520 = vmatprep.subr.mxu0 0.0
        %1521 = vmatpush2.msra.mxu0 0.0
        %1522 = vmatprep.subr.mxu0 0.0
        %1523 = vmatpush2.msra.mxu0 0.0
        %1524 = vmatprep.subr.mxu0 0.0
        %1525 = vmatpush2.msra.mxu0 0.0
        %1526 = vmatprep.subr.mxu0 0.0
        %1527 = vmatpush2.msra.mxu0 0.0
        %1528 = vmatprep.subr.mxu0 0.0
        %1529 = vmatpush2.msra.mxu0 0.0
        %1530 = vmatprep.subr.mxu0 0.0
        %1531 = vmatpush2.msra.mxu0 0.0
        %1532 = vmatprep.subr.mxu0 0.0
        %1533 = vmatpush2.msra.mxu0 0.0
        %1534 = vmatprep.subr.mxu0 0.0
        %1535 = vmatpush2.msra.mxu0 0.0
        %1536 = vmatprep.subr.mxu0 0.0
        %1537 = vmatpush2.msra.mxu0 0.0
        %1538 = vmatprep.subr.mxu0 0.0
        %1539 = vmatpush2.msra.mxu0 0.0
        %1540 = vmatprep.subr.mxu0 0.0
        %1541 = vmatpush2.msra.mxu0 0.0
        %1542 = vmatprep.subr.mxu0 0.0
        %1543 = vmatpush2.msra.mxu0 0.0
        %1544 = vmatprep.subr.mxu0 0.0
        %1545 = vmatpush2.msra.mxu0 0.0
        %1546 = vmatprep.mubr.f32.mxu0 0.0
        %1547 = vmatmul.mubr.f32.gmra.mxu0 %v1471
        %v1548 = vpop.f32.mrf.mxu0
        %v1549 = vadd.f32 0.0, %v1548
        %v1550 = vpop.f32.mrf.mxu0
        %v1551 = vadd.f32 0.0, %v1550
        %1552 = vmatprep.mubr.f32.mxu0 0.0
        %1553 = vmatmul.mubr.f32.gmra.mxu0 %v1474
        %v1554 = vpop.f32.mrf.mxu0
        %v1555 = vadd.f32 0.0, %v1554
        %v1556 = vpop.f32.mrf.mxu0
        %v1557 = vadd.f32 0.0, %v1556
        %1558 = vdwg.mxu0
        %1559 = vmatprep.subr.mxu0 0.0
        %1560 = vmatpush1.msra.mxu0 0.0
        %1561 = vmatprep.subr.mxu0 0.0
        %1562 = vmatpush1.msra.mxu0 0.0
        %1563 = vmatprep.subr.mxu0 0.0
        %1564 = vmatpush1.msra.mxu0 0.0
        %1565 = vmatprep.subr.mxu0 0.0
        %1566 = vmatpush1.msra.mxu0 0.0
        %1567 = vmatprep.subr.mxu0 0.0
        %1568 = vmatpush1.msra.mxu0 0.0
        %1569 = vmatprep.subr.mxu0 0.0
        %1570 = vmatpush1.msra.mxu0 0.0
        %1571 = vmatprep.subr.mxu0 0.0
        %1572 = vmatpush1.msra.mxu0 0.0
        %1573 = vmatprep.subr.mxu0 0.0
        %1574 = vmatpush1.msra.mxu0 0.0
        %1575 = vmatprep.subr.mxu0 0.0
        %1576 = vmatpush1.msra.mxu0 0.0
        %1577 = vmatprep.subr.mxu0 0.0
        %1578 = vmatpush1.msra.mxu0 0.0
        %1579 = vmatprep.subr.mxu0 0.0
        %1580 = vmatpush1.msra.mxu0 0.0
        %1581 = vmatprep.subr.mxu0 0.0
        %1582 = vmatpush1.msra.mxu0 0.0
        %1583 = vmatprep.subr.mxu0 0.0
        %1584 = vmatpush1.msra.mxu0 0.0
        %1585 = vmatprep.subr.mxu0 0.0
        %1586 = vmatpush1.msra.mxu0 0.0
        %1587 = vmatprep.subr.mxu0 0.0
        %1588 = vmatpush1.msra.mxu0 0.0
        %1589 = vmatprep.subr.mxu0 0.0
        %1590 = vmatpush1.msra.mxu0 %v1480
        %1591 = vmatprep.subr.mxu0 0.0
        %1592 = vmatpush2.msra.mxu0 0.0
        %1593 = vmatprep.subr.mxu0 0.0
        %1594 = vmatpush2.msra.mxu0 0.0
        %1595 = vmatprep.subr.mxu0 0.0
        %1596 = vmatpush2.msra.mxu0 0.0
        %1597 = vmatprep.subr.mxu0 0.0
        %1598 = vmatpush2.msra.mxu0 0.0
        %1599 = vmatprep.subr.mxu0 0.0
        %1600 = vmatpush2.msra.mxu0 0.0
        %1601 = vmatprep.subr.mxu0 0.0
        %1602 = vmatpush2.msra.mxu0 0.0
        %1603 = vmatprep.subr.mxu0 0.0
        %1604 = vmatpush2.msra.mxu0 0.0
        %1605 = vmatprep.subr.mxu0 0.0
        %1606 = vmatpush2.msra.mxu0 0.0
        %1607 = vmatprep.subr.mxu0 0.0
        %1608 = vmatpush2.msra.mxu0 0.0
        %1609 = vmatprep.subr.mxu0 0.0
        %1610 = vmatpush2.msra.mxu0 0.0
        %1611 = vmatprep.subr.mxu0 0.0
        %1612 = vmatpush2.msra.mxu0 0.0
        %1613 = vmatprep.subr.mxu0 0.0
        %1614 = vmatpush2.msra.mxu0 0.0
        %1615 = vmatprep.subr.mxu0 0.0
        %1616 = vmatpush2.msra.mxu0 0.0
        %1617 = vmatprep.subr.mxu0 0.0
        %1618 = vmatpush2.msra.mxu0 0.0
        %1619 = vmatprep.subr.mxu0 0.0
        %1620 = vmatpush2.msra.mxu0 0.0
        %1621 = vmatprep.subr.mxu0 0.0
        %1622 = vmatpush2.msra.mxu0 0.0
        %1623 = vmatprep.mubr.f32.mxu0 0.0
        %1624 = vmatmul.mubr.f32.gmra.mxu0 %v1471
        %v1625 = vpop.f32.mrf.mxu0
        %v1626 = vadd.f32 0.0, %v1625
        %v1627 = vpop.f32.mrf.mxu0
        %1628 = vmatprep.mubr.f32.mxu0 0.0
        %1629 = vmatmul.mubr.f32.gmra.mxu0 %v1474
        %v1630 = vpop.f32.mrf.mxu0
        %v1631 = vadd.f32 0.0, %v1630
        %v1632 = vpop.f32.mrf.mxu0
        %1633 = vdwg.mxu0
        %v1634 = vadd.f32 %v1447, %v1549
        %v1635 = vadd.f32 %v1448, %v1551
        %v1636 = vadd.f32 %v1449, %v1626
        %v1637 = vadd.f32 %v1450, %v1555
        %v1638 = vadd.f32 %v1451, %v1557
        %v1639 = vadd.f32 %v1452, %v1631
        %v1640 = vld [vmem:[%s168] sm:$0xff]
        %v1641 = vld [vmem:[%s168 + $0x8] sm:$0xf]
        %s1642 = scalar_lea.vmem %s1, 128
        %v1643 = vld [vmem:[%s1642] sm:$0xff]
        %v1644 = vld [vmem:[%s1642 + $0x8] sm:$0xff]
        %v1647 = vcombine.high %v1640, %v1640
        %1648 = vrot.lane.b32.xlu0 %v1640, 90
        %v1649 = vpop.permute.xlu0 %1648
        %1650 = vrot.lane.b32.xlu0 %v1647, 90
        %v1651 = vpop.permute.xlu0 %1650
        %1652 = vrot.lane.b32.xlu0 %v1641, 90
        %v1653 = vpop.permute.xlu0 %1652
        %vm1654 = vcmask 736256
        %v1655 = vsel %vm1654, %v1649, %v1651
        %v1656 = vsel %vm1654, %v1651, %v1653
        %v1658 = vsel %vm188, %v1643, 0
        %v1661 = vsel %vm188, %v1644, 0
        %v1663 = vsel %vm195, %v1655, 0
        %v1665 = vsel %vm195, %v1656, 0
        %v1667 = vsel %vm195, %v1653, 0
        %1669 = vmatprep.subr.mxu0 0.0
        %1670 = vmatpush1.msra.mxu0 0.0
        %1671 = vmatprep.subr.mxu0 0.0
        %1672 = vmatpush1.msra.mxu0 0.0
        %1673 = vmatprep.subr.mxu0 0.0
        %1674 = vmatpush1.msra.mxu0 0.0
        %1675 = vmatprep.subr.mxu0 0.0
        %1676 = vmatpush1.msra.mxu0 0.0
        %1677 = vmatprep.subr.mxu0 0.0
        %1678 = vmatpush1.msra.mxu0 0.0
        %1679 = vmatprep.subr.mxu0 0.0
        %1680 = vmatpush1.msra.mxu0 0.0
        %1681 = vmatprep.subr.mxu0 0.0
        %1682 = vmatpush1.msra.mxu0 0.0
        %1683 = vmatprep.subr.mxu0 0.0
        %1684 = vmatpush1.msra.mxu0 0.0
        %1685 = vmatprep.subr.mxu0 0.0
        %1686 = vmatpush1.msra.mxu0 0.0
        %1687 = vmatprep.subr.mxu0 0.0
        %1688 = vmatpush1.msra.mxu0 0.0
        %1689 = vmatprep.subr.mxu0 0.0
        %1690 = vmatpush1.msra.mxu0 0.0
        %1691 = vmatprep.subr.mxu0 0.0
        %1692 = vmatpush1.msra.mxu0 0.0
        %1693 = vmatprep.subr.mxu0 0.0
        %1694 = vmatpush1.msra.mxu0 0.0
        %1695 = vmatprep.subr.mxu0 0.0
        %1696 = vmatpush1.msra.mxu0 0.0
        %1697 = vmatprep.subr.mxu0 0.0
        %1698 = vmatpush1.msra.mxu0 0.0
        %1699 = vmatprep.subr.mxu0 %v1665
        %1700 = vmatpush1.msra.mxu0 %v1663
        %1701 = vmatprep.subr.mxu0 0.0
        %1702 = vmatpush2.msra.mxu0 0.0
        %1703 = vmatprep.subr.mxu0 0.0
        %1704 = vmatpush2.msra.mxu0 0.0
        %1705 = vmatprep.subr.mxu0 0.0
        %1706 = vmatpush2.msra.mxu0 0.0
        %1707 = vmatprep.subr.mxu0 0.0
        %1708 = vmatpush2.msra.mxu0 0.0
        %1709 = vmatprep.subr.mxu0 0.0
        %1710 = vmatpush2.msra.mxu0 0.0
        %1711 = vmatprep.subr.mxu0 0.0
        %1712 = vmatpush2.msra.mxu0 0.0
        %1713 = vmatprep.subr.mxu0 0.0
        %1714 = vmatpush2.msra.mxu0 0.0
        %1715 = vmatprep.subr.mxu0 0.0
        %1716 = vmatpush2.msra.mxu0 0.0
        %1717 = vmatprep.subr.mxu0 0.0
        %1718 = vmatpush2.msra.mxu0 0.0
        %1719 = vmatprep.subr.mxu0 0.0
        %1720 = vmatpush2.msra.mxu0 0.0
        %1721 = vmatprep.subr.mxu0 0.0
        %1722 = vmatpush2.msra.mxu0 0.0
        %1723 = vmatprep.subr.mxu0 0.0
        %1724 = vmatpush2.msra.mxu0 0.0
        %1725 = vmatprep.subr.mxu0 0.0
        %1726 = vmatpush2.msra.mxu0 0.0
        %1727 = vmatprep.subr.mxu0 0.0
        %1728 = vmatpush2.msra.mxu0 0.0
        %1729 = vmatprep.subr.mxu0 0.0
        %1730 = vmatpush2.msra.mxu0 0.0
        %1731 = vmatprep.subr.mxu0 0.0
        %1732 = vmatpush2.msra.mxu0 0.0
        %1733 = vmatprep.mubr.f32.mxu0 0.0
        %1734 = vmatmul.mubr.f32.gmra.mxu0 %v1658
        %v1735 = vpop.f32.mrf.mxu0
        %v1736 = vadd.f32 0.0, %v1735
        %v1737 = vpop.f32.mrf.mxu0
        %v1738 = vadd.f32 0.0, %v1737
        %1739 = vmatprep.mubr.f32.mxu0 0.0
        %1740 = vmatmul.mubr.f32.gmra.mxu0 %v1661
        %v1741 = vpop.f32.mrf.mxu0
        %v1742 = vadd.f32 0.0, %v1741
        %v1743 = vpop.f32.mrf.mxu0
        %v1744 = vadd.f32 0.0, %v1743
        %1745 = vdwg.mxu0
        %1746 = vmatprep.subr.mxu0 0.0
        %1747 = vmatpush1.msra.mxu0 0.0
        %1748 = vmatprep.subr.mxu0 0.0
        %1749 = vmatpush1.msra.mxu0 0.0
        %1750 = vmatprep.subr.mxu0 0.0
        %1751 = vmatpush1.msra.mxu0 0.0
        %1752 = vmatprep.subr.mxu0 0.0
        %1753 = vmatpush1.msra.mxu0 0.0
        %1754 = vmatprep.subr.mxu0 0.0
        %1755 = vmatpush1.msra.mxu0 0.0
        %1756 = vmatprep.subr.mxu0 0.0
        %1757 = vmatpush1.msra.mxu0 0.0
        %1758 = vmatprep.subr.mxu0 0.0
        %1759 = vmatpush1.msra.mxu0 0.0
        %1760 = vmatprep.subr.mxu0 0.0
        %1761 = vmatpush1.msra.mxu0 0.0
        %1762 = vmatprep.subr.mxu0 0.0
        %1763 = vmatpush1.msra.mxu0 0.0
        %1764 = vmatprep.subr.mxu0 0.0
        %1765 = vmatpush1.msra.mxu0 0.0
        %1766 = vmatprep.subr.mxu0 0.0
        %1767 = vmatpush1.msra.mxu0 0.0
        %1768 = vmatprep.subr.mxu0 0.0
        %1769 = vmatpush1.msra.mxu0 0.0
        %1770 = vmatprep.subr.mxu0 0.0
        %1771 = vmatpush1.msra.mxu0 0.0
        %1772 = vmatprep.subr.mxu0 0.0
        %1773 = vmatpush1.msra.mxu0 0.0
        %1774 = vmatprep.subr.mxu0 0.0
        %1775 = vmatpush1.msra.mxu0 0.0
        %1776 = vmatprep.subr.mxu0 0.0
        %1777 = vmatpush1.msra.mxu0 %v1667
        %1778 = vmatprep.subr.mxu0 0.0
        %1779 = vmatpush2.msra.mxu0 0.0
        %1780 = vmatprep.subr.mxu0 0.0
        %1781 = vmatpush2.msra.mxu0 0.0
        %1782 = vmatprep.subr.mxu0 0.0
        %1783 = vmatpush2.msra.mxu0 0.0
        %1784 = vmatprep.subr.mxu0 0.0
        %1785 = vmatpush2.msra.mxu0 0.0
        %1786 = vmatprep.subr.mxu0 0.0
        %1787 = vmatpush2.msra.mxu0 0.0
        %1788 = vmatprep.subr.mxu0 0.0
        %1789 = vmatpush2.msra.mxu0 0.0
        %1790 = vmatprep.subr.mxu0 0.0
        %1791 = vmatpush2.msra.mxu0 0.0
        %1792 = vmatprep.subr.mxu0 0.0
        %1793 = vmatpush2.msra.mxu0 0.0
        %1794 = vmatprep.subr.mxu0 0.0
        %1795 = vmatpush2.msra.mxu0 0.0
        %1796 = vmatprep.subr.mxu0 0.0
        %1797 = vmatpush2.msra.mxu0 0.0
        %1798 = vmatprep.subr.mxu0 0.0
        %1799 = vmatpush2.msra.mxu0 0.0
        %1800 = vmatprep.subr.mxu0 0.0
        %1801 = vmatpush2.msra.mxu0 0.0
        %1802 = vmatprep.subr.mxu0 0.0
        %1803 = vmatpush2.msra.mxu0 0.0
        %1804 = vmatprep.subr.mxu0 0.0
        %1805 = vmatpush2.msra.mxu0 0.0
        %1806 = vmatprep.subr.mxu0 0.0
        %1807 = vmatpush2.msra.mxu0 0.0
        %1808 = vmatprep.subr.mxu0 0.0
        %1809 = vmatpush2.msra.mxu0 0.0
        %1810 = vmatprep.mubr.f32.mxu0 0.0
        %1811 = vmatmul.mubr.f32.gmra.mxu0 %v1658
        %v1812 = vpop.f32.mrf.mxu0
        %v1813 = vadd.f32 0.0, %v1812
        %v1814 = vpop.f32.mrf.mxu0
        %1815 = vmatprep.mubr.f32.mxu0 0.0
        %1816 = vmatmul.mubr.f32.gmra.mxu0 %v1661
        %v1817 = vpop.f32.mrf.mxu0
        %v1818 = vadd.f32 0.0, %v1817
        %v1819 = vpop.f32.mrf.mxu0
        %1820 = vdwg.mxu0
        %v1821 = vadd.f32 %v1634, %v1736
        %v1822 = vadd.f32 %v1635, %v1738
        %v1823 = vadd.f32 %v1636, %v1813
        %v1824 = vadd.f32 %v1637, %v1742
        %v1825 = vadd.f32 %v1638, %v1744
        %v1826 = vadd.f32 %v1639, %v1818
        %v1827 = vld [vmem:[%s2] sm:$0xff]
        %v1828 = vld [vmem:[%s2 + $0x8] sm:$0xff]
        %1830 = vset.pattern.permute.xlu0 0
        %1831 = vperm.xlu0 %1830, %v1827
        %v1832 = vpop.permute.xlu0 %1831
        %1835 = vset.pattern.permute.xlu0 0
        %1836 = vperm.xlu0 %1835, %v1828
        %v1837 = vpop.permute.xlu0 %1836
        %v1839 = vadd.f32 %v1821, %v1832
        %v1840 = vadd.f32 %v1822, %v1832
        %v1841 = vadd.f32 %v1823, %v1832
        %v1842 = vadd.f32 %v1824, %v1837
        %v1843 = vadd.f32 %v1825, %v1837
        %v1844 = vadd.f32 %v1826, %v1837
        %v1845 = vmax.f32 %v1839, 0.0
        %v1846 = vmax.f32 %v1840, 0.0
        %v1847 = vmax.f32 %v1841, 0.0
        %v1848 = vmax.f32 %v1842, 0.0
        %v1849 = vmax.f32 %v1843, 0.0
        %v1850 = vmax.f32 %v1844, 0.0
        %v1853 = vcombine.high %v1845, %v1845
        %v1855 = vunpack.c.l.s4 1966171168
        %v1856 = vunpack.c.0.s8 %v1855
        %v1857 = vlaneseq
        %v1858 = vshrl.u32 %v1857, 7
        %v1859 = vsub.s32 %v1856, %v1858
        %v1860 = vrot.slane %v1845, %v1859
        %v1862 = vunpack.c.l.s4 1966171168
        %v1863 = vunpack.c.0.s8 %v1862
        %v1864 = vlaneseq
        %v1865 = vshrl.u32 %v1864, 7
        %v1866 = vsub.s32 %v1863, %v1865
        %v1867 = vrot.slane %v1853, %v1866
        %v1868 = vcombine.high %v1860, %v1860
        %v1869 = vcombine.high %v1867, %v1867
        %v1871 = vunpack.c.l.s4 1966171168
        %v1872 = vunpack.c.0.s8 %v1871
        %v1873 = vlaneseq
        %v1874 = vshrl.u32 %v1873, 7
        %v1875 = vsub.s32 %v1872, %v1874
        %v1876 = vrot.slane %v1860, %v1875
        %v1878 = vunpack.c.l.s4 1966171168
        %v1879 = vunpack.c.0.s8 %v1878
        %v1880 = vlaneseq
        %v1881 = vshrl.u32 %v1880, 7
        %v1882 = vsub.s32 %v1879, %v1881
        %v1883 = vrot.slane %v1867, %v1882
        %v1885 = vunpack.c.l.s4 1966171168
        %v1886 = vunpack.c.0.s8 %v1885
        %v1887 = vlaneseq
        %v1888 = vshrl.u32 %v1887, 7
        %v1889 = vsub.s32 %v1886, %v1888
        %v1890 = vrot.slane %v1868, %v1889
        %v1892 = vunpack.c.l.s4 1966171168
        %v1893 = vunpack.c.0.s8 %v1892
        %v1894 = vlaneseq
        %v1895 = vshrl.u32 %v1894, 7
        %v1896 = vsub.s32 %v1893, %v1895
        %v1897 = vrot.slane %v1869, %v1896
        %v1898 = vcombine.high %v1876, %v1876
        %v1899 = vcombine.high %v1883, %v1883
        %v1900 = vcombine.high %v1890, %v1890
        %v1901 = vcombine.high %v1897, %v1897
        %v1902 = vcombine.high %v1848, %v1848
        %v1904 = vunpack.c.l.s4 1966171168
        %v1905 = vunpack.c.0.s8 %v1904
        %v1906 = vlaneseq
        %v1907 = vshrl.u32 %v1906, 7
        %v1908 = vsub.s32 %v1905, %v1907
        %v1909 = vrot.slane %v1848, %v1908
        %v1911 = vunpack.c.l.s4 1966171168
        %v1912 = vunpack.c.0.s8 %v1911
        %v1913 = vlaneseq
        %v1914 = vshrl.u32 %v1913, 7
        %v1915 = vsub.s32 %v1912, %v1914
        %v1916 = vrot.slane %v1902, %v1915
        %v1917 = vcombine.high %v1909, %v1909
        %v1918 = vcombine.high %v1916, %v1916
        %v1920 = vunpack.c.l.s4 1966171168
        %v1921 = vunpack.c.0.s8 %v1920
        %v1922 = vlaneseq
        %v1923 = vshrl.u32 %v1922, 7
        %v1924 = vsub.s32 %v1921, %v1923
        %v1925 = vrot.slane %v1909, %v1924
        %v1927 = vunpack.c.l.s4 1966171168
        %v1928 = vunpack.c.0.s8 %v1927
        %v1929 = vlaneseq
        %v1930 = vshrl.u32 %v1929, 7
        %v1931 = vsub.s32 %v1928, %v1930
        %v1932 = vrot.slane %v1916, %v1931
        %v1934 = vunpack.c.l.s4 1966171168
        %v1935 = vunpack.c.0.s8 %v1934
        %v1936 = vlaneseq
        %v1937 = vshrl.u32 %v1936, 7
        %v1938 = vsub.s32 %v1935, %v1937
        %v1939 = vrot.slane %v1917, %v1938
        %v1941 = vunpack.c.l.s4 1966171168
        %v1942 = vunpack.c.0.s8 %v1941
        %v1943 = vlaneseq
        %v1944 = vshrl.u32 %v1943, 7
        %v1945 = vsub.s32 %v1942, %v1944
        %v1946 = vrot.slane %v1918, %v1945
        %v1947 = vcombine.high %v1925, %v1925
        %v1948 = vcombine.high %v1932, %v1932
        %v1949 = vcombine.high %v1939, %v1939
        %v1950 = vcombine.high %v1946, %v1946
        %vm1967 = vcmask 122880
        %1968 = vst.msk [vmem:[%s163] sm:$0x1] %vm1967, %v1876
        %1969 = vst.msk [vmem:[%s163 + $0x10] sm:$0x1] %vm1967, %v1890
        %1970 = vst.msk [vmem:[%s163 + $0x20] sm:$0x1] %vm1967, %v1898
        %1971 = vst.msk [vmem:[%s163 + $0x30] sm:$0x1] %vm1967, %v1900
        %1972 = vst.msk [vmem:[%s163 + $0x40] sm:$0x1] %vm1967, %v1883
        %1973 = vst.msk [vmem:[%s163 + $0x50] sm:$0x1] %vm1967, %v1897
        %1974 = vst.msk [vmem:[%s163 + $0x60] sm:$0x1] %vm1967, %v1899
        %1975 = vst.msk [vmem:[%s163 + $0x70] sm:$0x1] %vm1967, %v1901
        %1976 = vst.msk [vmem:[%s163 + $0x80] sm:$0x1] %vm1967, %v1925
        %1977 = vst.msk [vmem:[%s163 + $0x90] sm:$0x1] %vm1967, %v1939
        %1978 = vst.msk [vmem:[%s163 + $0xa0] sm:$0x1] %vm1967, %v1947
        %1979 = vst.msk [vmem:[%s163 + $0xb0] sm:$0x1] %vm1967, %v1949
        %1980 = vst.msk [vmem:[%s163 + $0xc0] sm:$0x1] %vm1967, %v1932
        %1981 = vst.msk [vmem:[%s163 + $0xd0] sm:$0x1] %vm1967, %v1946
        %1982 = vst.msk [vmem:[%s163 + $0xe0] sm:$0x1] %vm1967, %v1948
        %1983 = vst.msk [vmem:[%s163 + $0xf0] sm:$0x1] %vm1967, %v1950
        %v1984 = vlaneseq
        %v1985 = vshrl.u32 %v1984, 7
        %v1986 = vsub.s32 0, %v1985
        %v1987 = vrot.slane %v1876, %v1986
        %v1988 = vlaneseq
        %v1989 = vshrl.u32 %v1988, 7
        %v1990 = vsub.s32 0, %v1989
        %v1991 = vrot.slane %v1890, %v1990
        %v1992 = vlaneseq
        %v1993 = vshrl.u32 %v1992, 7
        %v1994 = vsub.s32 0, %v1993
        %v1995 = vrot.slane %v1898, %v1994
        %v1996 = vlaneseq
        %v1997 = vshrl.u32 %v1996, 7
        %v1998 = vsub.s32 0, %v1997
        %v1999 = vrot.slane %v1900, %v1998
        %v2000 = vlaneseq
        %v2001 = vshrl.u32 %v2000, 7
        %v2002 = vsub.s32 0, %v2001
        %v2003 = vrot.slane %v1883, %v2002
        %v2004 = vlaneseq
        %v2005 = vshrl.u32 %v2004, 7
        %v2006 = vsub.s32 0, %v2005
        %v2007 = vrot.slane %v1897, %v2006
        %v2008 = vlaneseq
        %v2009 = vshrl.u32 %v2008, 7
        %v2010 = vsub.s32 0, %v2009
        %v2011 = vrot.slane %v1899, %v2010
        %v2012 = vlaneseq
        %v2013 = vshrl.u32 %v2012, 7
        %v2014 = vsub.s32 0, %v2013
        %v2015 = vrot.slane %v1901, %v2014
        %v2016 = vlaneseq
        %v2017 = vshrl.u32 %v2016, 7
        %v2018 = vsub.s32 0, %v2017
        %v2019 = vrot.slane %v1925, %v2018
        %v2020 = vlaneseq
        %v2021 = vshrl.u32 %v2020, 7
        %v2022 = vsub.s32 0, %v2021
        %v2023 = vrot.slane %v1939, %v2022
        %v2024 = vlaneseq
        %v2025 = vshrl.u32 %v2024, 7
        %v2026 = vsub.s32 0, %v2025
        %v2027 = vrot.slane %v1947, %v2026
        %v2028 = vlaneseq
        %v2029 = vshrl.u32 %v2028, 7
        %v2030 = vsub.s32 0, %v2029
        %v2031 = vrot.slane %v1949, %v2030
        %v2032 = vlaneseq
        %v2033 = vshrl.u32 %v2032, 7
        %v2034 = vsub.s32 0, %v2033
        %v2035 = vrot.slane %v1932, %v2034
        %v2036 = vlaneseq
        %v2037 = vshrl.u32 %v2036, 7
        %v2038 = vsub.s32 0, %v2037
        %v2039 = vrot.slane %v1946, %v2038
        %v2040 = vlaneseq
        %v2041 = vshrl.u32 %v2040, 7
        %v2042 = vsub.s32 0, %v2041
        %v2043 = vrot.slane %v1948, %v2042
        %v2044 = vlaneseq
        %v2045 = vshrl.u32 %v2044, 7
        %v2046 = vsub.s32 0, %v2045
        %v2047 = vrot.slane %v1950, %v2046
        %2048 = vrot.lane.b32.xlu0 %v1987, 110
        %v2049 = vpop.permute.xlu0 %2048
        %2050 = vrot.lane.b32.xlu0 %v1991, 110
        %v2051 = vpop.permute.xlu0 %2050
        %2052 = vrot.lane.b32.xlu0 %v1995, 110
        %v2053 = vpop.permute.xlu0 %2052
        %2054 = vrot.lane.b32.xlu0 %v1999, 110
        %v2055 = vpop.permute.xlu0 %2054
        %2056 = vrot.lane.b32.xlu0 %v2003, 110
        %v2057 = vpop.permute.xlu0 %2056
        %2058 = vrot.lane.b32.xlu0 %v2007, 110
        %v2059 = vpop.permute.xlu0 %2058
        %2060 = vrot.lane.b32.xlu0 %v2011, 110
        %v2061 = vpop.permute.xlu0 %2060
        %2062 = vrot.lane.b32.xlu0 %v2015, 110
        %v2063 = vpop.permute.xlu0 %2062
        %2064 = vrot.lane.b32.xlu0 %v2019, 110
        %v2065 = vpop.permute.xlu0 %2064
        %2066 = vrot.lane.b32.xlu0 %v2023, 110
        %v2067 = vpop.permute.xlu0 %2066
        %2068 = vrot.lane.b32.xlu0 %v2027, 110
        %v2069 = vpop.permute.xlu0 %2068
        %2070 = vrot.lane.b32.xlu0 %v2031, 110
        %v2071 = vpop.permute.xlu0 %2070
        %2072 = vrot.lane.b32.xlu0 %v2035, 110
        %v2073 = vpop.permute.xlu0 %2072
        %2074 = vrot.lane.b32.xlu0 %v2039, 110
        %v2075 = vpop.permute.xlu0 %2074
        %2076 = vrot.lane.b32.xlu0 %v2043, 110
        %v2077 = vpop.permute.xlu0 %2076
        %2078 = vrot.lane.b32.xlu0 %v2047, 110
        %v2079 = vpop.permute.xlu0 %2078
        %2096 = vst.msk [vmem:[%s163 + $0x1] sm:$0x1] %vm1967, %v2049
        %2097 = vst.msk [vmem:[%s163 + $0x11] sm:$0x1] %vm1967, %v2051
        %2098 = vst.msk [vmem:[%s163 + $0x21] sm:$0x1] %vm1967, %v2053
        %2099 = vst.msk [vmem:[%s163 + $0x31] sm:$0x1] %vm1967, %v2055
        %2100 = vst.msk [vmem:[%s163 + $0x41] sm:$0x1] %vm1967, %v2057
        %2101 = vst.msk [vmem:[%s163 + $0x51] sm:$0x1] %vm1967, %v2059
        %2102 = vst.msk [vmem:[%s163 + $0x61] sm:$0x1] %vm1967, %v2061
        %2103 = vst.msk [vmem:[%s163 + $0x71] sm:$0x1] %vm1967, %v2063
        %2104 = vst.msk [vmem:[%s163 + $0x81] sm:$0x1] %vm1967, %v2065
        %2105 = vst.msk [vmem:[%s163 + $0x91] sm:$0x1] %vm1967, %v2067
        %2106 = vst.msk [vmem:[%s163 + $0xa1] sm:$0x1] %vm1967, %v2069
        %2107 = vst.msk [vmem:[%s163 + $0xb1] sm:$0x1] %vm1967, %v2071
        %2108 = vst.msk [vmem:[%s163 + $0xc1] sm:$0x1] %vm1967, %v2073
        %2109 = vst.msk [vmem:[%s163 + $0xd1] sm:$0x1] %vm1967, %v2075
        %2110 = vst.msk [vmem:[%s163 + $0xe1] sm:$0x1] %vm1967, %v2077
        %2111 = vst.msk [vmem:[%s163 + $0xf1] sm:$0x1] %vm1967, %v2079
        %2112 = vrot.lane.b32.xlu0 %v1987, 92
        %v2113 = vpop.permute.xlu0 %2112
        %2114 = vrot.lane.b32.xlu0 %v1991, 92
        %v2115 = vpop.permute.xlu0 %2114
        %2116 = vrot.lane.b32.xlu0 %v1995, 92
        %v2117 = vpop.permute.xlu0 %2116
        %2118 = vrot.lane.b32.xlu0 %v1999, 92
        %v2119 = vpop.permute.xlu0 %2118
        %2120 = vrot.lane.b32.xlu0 %v2003, 92
        %v2121 = vpop.permute.xlu0 %2120
        %2122 = vrot.lane.b32.xlu0 %v2007, 92
        %v2123 = vpop.permute.xlu0 %2122
        %2124 = vrot.lane.b32.xlu0 %v2011, 92
        %v2125 = vpop.permute.xlu0 %2124
        %2126 = vrot.lane.b32.xlu0 %v2015, 92
        %v2127 = vpop.permute.xlu0 %2126
        %2128 = vrot.lane.b32.xlu0 %v2019, 92
        %v2129 = vpop.permute.xlu0 %2128
        %2130 = vrot.lane.b32.xlu0 %v2023, 92
        %v2131 = vpop.permute.xlu0 %2130
        %2132 = vrot.lane.b32.xlu0 %v2027, 92
        %v2133 = vpop.permute.xlu0 %2132
        %2134 = vrot.lane.b32.xlu0 %v2031, 92
        %v2135 = vpop.permute.xlu0 %2134
        %2136 = vrot.lane.b32.xlu0 %v2035, 92
        %v2137 = vpop.permute.xlu0 %2136
        %2138 = vrot.lane.b32.xlu0 %v2039, 92
        %v2139 = vpop.permute.xlu0 %2138
        %2140 = vrot.lane.b32.xlu0 %v2043, 92
        %v2141 = vpop.permute.xlu0 %2140
        %2142 = vrot.lane.b32.xlu0 %v2047, 92
        %v2143 = vpop.permute.xlu0 %2142
        %2160 = vst.msk [vmem:[%s163 + $0x2] sm:$0x1] %vm1967, %v2113
        %2161 = vst.msk [vmem:[%s163 + $0x12] sm:$0x1] %vm1967, %v2115
        %2162 = vst.msk [vmem:[%s163 + $0x22] sm:$0x1] %vm1967, %v2117
        %2163 = vst.msk [vmem:[%s163 + $0x32] sm:$0x1] %vm1967, %v2119
        %2164 = vst.msk [vmem:[%s163 + $0x42] sm:$0x1] %vm1967, %v2121
        %2165 = vst.msk [vmem:[%s163 + $0x52] sm:$0x1] %vm1967, %v2123
        %2166 = vst.msk [vmem:[%s163 + $0x62] sm:$0x1] %vm1967, %v2125
        %2167 = vst.msk [vmem:[%s163 + $0x72] sm:$0x1] %vm1967, %v2127
        %2168 = vst.msk [vmem:[%s163 + $0x82] sm:$0x1] %vm1967, %v2129
        %2169 = vst.msk [vmem:[%s163 + $0x92] sm:$0x1] %vm1967, %v2131
        %2170 = vst.msk [vmem:[%s163 + $0xa2] sm:$0x1] %vm1967, %v2133
        %2171 = vst.msk [vmem:[%s163 + $0xb2] sm:$0x1] %vm1967, %v2135
        %2172 = vst.msk [vmem:[%s163 + $0xc2] sm:$0x1] %vm1967, %v2137
        %2173 = vst.msk [vmem:[%s163 + $0xd2] sm:$0x1] %vm1967, %v2139
        %2174 = vst.msk [vmem:[%s163 + $0xe2] sm:$0x1] %vm1967, %v2141
        %2175 = vst.msk [vmem:[%s163 + $0xf2] sm:$0x1] %vm1967, %v2143
        %2176 = vrot.lane.b32.xlu0 %v1987, 74
        %v2177 = vpop.permute.xlu0 %2176
        %2178 = vrot.lane.b32.xlu0 %v1991, 74
        %v2179 = vpop.permute.xlu0 %2178
        %2180 = vrot.lane.b32.xlu0 %v1995, 74
        %v2181 = vpop.permute.xlu0 %2180
        %2182 = vrot.lane.b32.xlu0 %v1999, 74
        %v2183 = vpop.permute.xlu0 %2182
        %2184 = vrot.lane.b32.xlu0 %v2003, 74
        %v2185 = vpop.permute.xlu0 %2184
        %2186 = vrot.lane.b32.xlu0 %v2007, 74
        %v2187 = vpop.permute.xlu0 %2186
        %2188 = vrot.lane.b32.xlu0 %v2011, 74
        %v2189 = vpop.permute.xlu0 %2188
        %2190 = vrot.lane.b32.xlu0 %v2015, 74
        %v2191 = vpop.permute.xlu0 %2190
        %2192 = vrot.lane.b32.xlu0 %v2019, 74
        %v2193 = vpop.permute.xlu0 %2192
        %2194 = vrot.lane.b32.xlu0 %v2023, 74
        %v2195 = vpop.permute.xlu0 %2194
        %2196 = vrot.lane.b32.xlu0 %v2027, 74
        %v2197 = vpop.permute.xlu0 %2196
        %2198 = vrot.lane.b32.xlu0 %v2031, 74
        %v2199 = vpop.permute.xlu0 %2198
        %2200 = vrot.lane.b32.xlu0 %v2035, 74
        %v2201 = vpop.permute.xlu0 %2200
        %2202 = vrot.lane.b32.xlu0 %v2039, 74
        %v2203 = vpop.permute.xlu0 %2202
        %2204 = vrot.lane.b32.xlu0 %v2043, 74
        %v2205 = vpop.permute.xlu0 %2204
        %2206 = vrot.lane.b32.xlu0 %v2047, 74
        %v2207 = vpop.permute.xlu0 %2206
        %2224 = vst.msk [vmem:[%s163 + $0x3] sm:$0x1] %vm1967, %v2177
        %2225 = vst.msk [vmem:[%s163 + $0x13] sm:$0x1] %vm1967, %v2179
        %2226 = vst.msk [vmem:[%s163 + $0x23] sm:$0x1] %vm1967, %v2181
        %2227 = vst.msk [vmem:[%s163 + $0x33] sm:$0x1] %vm1967, %v2183
        %2228 = vst.msk [vmem:[%s163 + $0x43] sm:$0x1] %vm1967, %v2185
        %2229 = vst.msk [vmem:[%s163 + $0x53] sm:$0x1] %vm1967, %v2187
        %2230 = vst.msk [vmem:[%s163 + $0x63] sm:$0x1] %vm1967, %v2189
        %2231 = vst.msk [vmem:[%s163 + $0x73] sm:$0x1] %vm1967, %v2191
        %2232 = vst.msk [vmem:[%s163 + $0x83] sm:$0x1] %vm1967, %v2193
        %2233 = vst.msk [vmem:[%s163 + $0x93] sm:$0x1] %vm1967, %v2195
        %2234 = vst.msk [vmem:[%s163 + $0xa3] sm:$0x1] %vm1967, %v2197
        %2235 = vst.msk [vmem:[%s163 + $0xb3] sm:$0x1] %vm1967, %v2199
        %2236 = vst.msk [vmem:[%s163 + $0xc3] sm:$0x1] %vm1967, %v2201
        %2237 = vst.msk [vmem:[%s163 + $0xd3] sm:$0x1] %vm1967, %v2203
        %2238 = vst.msk [vmem:[%s163 + $0xe3] sm:$0x1] %vm1967, %v2205
        %2239 = vst.msk [vmem:[%s163 + $0xf3] sm:$0x1] %vm1967, %v2207
        %2240 = vrot.lane.b32.xlu0 %v1987, 56
        %v2241 = vpop.permute.xlu0 %2240
        %2242 = vrot.lane.b32.xlu0 %v1991, 56
        %v2243 = vpop.permute.xlu0 %2242
        %2244 = vrot.lane.b32.xlu0 %v1995, 56
        %v2245 = vpop.permute.xlu0 %2244
        %2246 = vrot.lane.b32.xlu0 %v1999, 56
        %v2247 = vpop.permute.xlu0 %2246
        %2248 = vrot.lane.b32.xlu0 %v2003, 56
        %v2249 = vpop.permute.xlu0 %2248
        %2250 = vrot.lane.b32.xlu0 %v2007, 56
        %v2251 = vpop.permute.xlu0 %2250
        %2252 = vrot.lane.b32.xlu0 %v2011, 56
        %v2253 = vpop.permute.xlu0 %2252
        %2254 = vrot.lane.b32.xlu0 %v2015, 56
        %v2255 = vpop.permute.xlu0 %2254
        %2256 = vrot.lane.b32.xlu0 %v2019, 56
        %v2257 = vpop.permute.xlu0 %2256
        %2258 = vrot.lane.b32.xlu0 %v2023, 56
        %v2259 = vpop.permute.xlu0 %2258
        %2260 = vrot.lane.b32.xlu0 %v2027, 56
        %v2261 = vpop.permute.xlu0 %2260
        %2262 = vrot.lane.b32.xlu0 %v2031, 56
        %v2263 = vpop.permute.xlu0 %2262
        %2264 = vrot.lane.b32.xlu0 %v2035, 56
        %v2265 = vpop.permute.xlu0 %2264
        %2266 = vrot.lane.b32.xlu0 %v2039, 56
        %v2267 = vpop.permute.xlu0 %2266
        %2268 = vrot.lane.b32.xlu0 %v2043, 56
        %v2269 = vpop.permute.xlu0 %2268
        %2270 = vrot.lane.b32.xlu0 %v2047, 56
        %v2271 = vpop.permute.xlu0 %2270
        %2288 = vst.msk [vmem:[%s163 + $0x4] sm:$0x1] %vm1967, %v2241
        %2289 = vst.msk [vmem:[%s163 + $0x14] sm:$0x1] %vm1967, %v2243
        %2290 = vst.msk [vmem:[%s163 + $0x24] sm:$0x1] %vm1967, %v2245
        %2291 = vst.msk [vmem:[%s163 + $0x34] sm:$0x1] %vm1967, %v2247
        %2292 = vst.msk [vmem:[%s163 + $0x44] sm:$0x1] %vm1967, %v2249
        %2293 = vst.msk [vmem:[%s163 + $0x54] sm:$0x1] %vm1967, %v2251
        %2294 = vst.msk [vmem:[%s163 + $0x64] sm:$0x1] %vm1967, %v2253
        %2295 = vst.msk [vmem:[%s163 + $0x74] sm:$0x1] %vm1967, %v2255
        %2296 = vst.msk [vmem:[%s163 + $0x84] sm:$0x1] %vm1967, %v2257
        %2297 = vst.msk [vmem:[%s163 + $0x94] sm:$0x1] %vm1967, %v2259
        %2298 = vst.msk [vmem:[%s163 + $0xa4] sm:$0x1] %vm1967, %v2261
        %2299 = vst.msk [vmem:[%s163 + $0xb4] sm:$0x1] %vm1967, %v2263
        %2300 = vst.msk [vmem:[%s163 + $0xc4] sm:$0x1] %vm1967, %v2265
        %2301 = vst.msk [vmem:[%s163 + $0xd4] sm:$0x1] %vm1967, %v2267
        %2302 = vst.msk [vmem:[%s163 + $0xe4] sm:$0x1] %vm1967, %v2269
        %2303 = vst.msk [vmem:[%s163 + $0xf4] sm:$0x1] %vm1967, %v2271
        %2304 = vrot.lane.b32.xlu0 %v1987, 38
        %v2305 = vpop.permute.xlu0 %2304
        %2306 = vrot.lane.b32.xlu0 %v1991, 38
        %v2307 = vpop.permute.xlu0 %2306
        %2308 = vrot.lane.b32.xlu0 %v1995, 38
        %v2309 = vpop.permute.xlu0 %2308
        %2310 = vrot.lane.b32.xlu0 %v1999, 38
        %v2311 = vpop.permute.xlu0 %2310
        %2312 = vrot.lane.b32.xlu0 %v2003, 38
        %v2313 = vpop.permute.xlu0 %2312
        %2314 = vrot.lane.b32.xlu0 %v2007, 38
        %v2315 = vpop.permute.xlu0 %2314
        %2316 = vrot.lane.b32.xlu0 %v2011, 38
        %v2317 = vpop.permute.xlu0 %2316
        %2318 = vrot.lane.b32.xlu0 %v2015, 38
        %v2319 = vpop.permute.xlu0 %2318
        %2320 = vrot.lane.b32.xlu0 %v2019, 38
        %v2321 = vpop.permute.xlu0 %2320
        %2322 = vrot.lane.b32.xlu0 %v2023, 38
        %v2323 = vpop.permute.xlu0 %2322
        %2324 = vrot.lane.b32.xlu0 %v2027, 38
        %v2325 = vpop.permute.xlu0 %2324
        %2326 = vrot.lane.b32.xlu0 %v2031, 38
        %v2327 = vpop.permute.xlu0 %2326
        %2328 = vrot.lane.b32.xlu0 %v2035, 38
        %v2329 = vpop.permute.xlu0 %2328
        %2330 = vrot.lane.b32.xlu0 %v2039, 38
        %v2331 = vpop.permute.xlu0 %2330
        %2332 = vrot.lane.b32.xlu0 %v2043, 38
        %v2333 = vpop.permute.xlu0 %2332
        %2334 = vrot.lane.b32.xlu0 %v2047, 38
        %v2335 = vpop.permute.xlu0 %2334
        %2352 = vst.msk [vmem:[%s163 + $0x5] sm:$0x1] %vm1967, %v2305
        %2353 = vst.msk [vmem:[%s163 + $0x15] sm:$0x1] %vm1967, %v2307
        %2354 = vst.msk [vmem:[%s163 + $0x25] sm:$0x1] %vm1967, %v2309
        %2355 = vst.msk [vmem:[%s163 + $0x35] sm:$0x1] %vm1967, %v2311
        %2356 = vst.msk [vmem:[%s163 + $0x45] sm:$0x1] %vm1967, %v2313
        %2357 = vst.msk [vmem:[%s163 + $0x55] sm:$0x1] %vm1967, %v2315
        %2358 = vst.msk [vmem:[%s163 + $0x65] sm:$0x1] %vm1967, %v2317
        %2359 = vst.msk [vmem:[%s163 + $0x75] sm:$0x1] %vm1967, %v2319
        %2360 = vst.msk [vmem:[%s163 + $0x85] sm:$0x1] %vm1967, %v2321
        %2361 = vst.msk [vmem:[%s163 + $0x95] sm:$0x1] %vm1967, %v2323
        %2362 = vst.msk [vmem:[%s163 + $0xa5] sm:$0x1] %vm1967, %v2325
        %2363 = vst.msk [vmem:[%s163 + $0xb5] sm:$0x1] %vm1967, %v2327
        %2364 = vst.msk [vmem:[%s163 + $0xc5] sm:$0x1] %vm1967, %v2329
        %2365 = vst.msk [vmem:[%s163 + $0xd5] sm:$0x1] %vm1967, %v2331
        %2366 = vst.msk [vmem:[%s163 + $0xe5] sm:$0x1] %vm1967, %v2333
        %2367 = vst.msk [vmem:[%s163 + $0xf5] sm:$0x1] %vm1967, %v2335
        %2368 = vrot.lane.b32.xlu0 %v1987, 20
        %v2369 = vpop.permute.xlu0 %2368
        %2370 = vrot.lane.b32.xlu0 %v1991, 20
        %v2371 = vpop.permute.xlu0 %2370
        %2372 = vrot.lane.b32.xlu0 %v1995, 20
        %v2373 = vpop.permute.xlu0 %2372
        %2374 = vrot.lane.b32.xlu0 %v1999, 20
        %v2375 = vpop.permute.xlu0 %2374
        %2376 = vrot.lane.b32.xlu0 %v2003, 20
        %v2377 = vpop.permute.xlu0 %2376
        %2378 = vrot.lane.b32.xlu0 %v2007, 20
        %v2379 = vpop.permute.xlu0 %2378
        %2380 = vrot.lane.b32.xlu0 %v2011, 20
        %v2381 = vpop.permute.xlu0 %2380
        %2382 = vrot.lane.b32.xlu0 %v2015, 20
        %v2383 = vpop.permute.xlu0 %2382
        %2384 = vrot.lane.b32.xlu0 %v2019, 20
        %v2385 = vpop.permute.xlu0 %2384
        %2386 = vrot.lane.b32.xlu0 %v2023, 20
        %v2387 = vpop.permute.xlu0 %2386
        %2388 = vrot.lane.b32.xlu0 %v2027, 20
        %v2389 = vpop.permute.xlu0 %2388
        %2390 = vrot.lane.b32.xlu0 %v2031, 20
        %v2391 = vpop.permute.xlu0 %2390
        %2392 = vrot.lane.b32.xlu0 %v2035, 20
        %v2393 = vpop.permute.xlu0 %2392
        %2394 = vrot.lane.b32.xlu0 %v2039, 20
        %v2395 = vpop.permute.xlu0 %2394
        %2396 = vrot.lane.b32.xlu0 %v2043, 20
        %v2397 = vpop.permute.xlu0 %2396
        %2398 = vrot.lane.b32.xlu0 %v2047, 20
        %v2399 = vpop.permute.xlu0 %2398
        %2416 = vst.msk [vmem:[%s163 + $0x6] sm:$0x1] %vm1967, %v2369
        %2417 = vst.msk [vmem:[%s163 + $0x16] sm:$0x1] %vm1967, %v2371
        %2418 = vst.msk [vmem:[%s163 + $0x26] sm:$0x1] %vm1967, %v2373
        %2419 = vst.msk [vmem:[%s163 + $0x36] sm:$0x1] %vm1967, %v2375
        %2420 = vst.msk [vmem:[%s163 + $0x46] sm:$0x1] %vm1967, %v2377
        %2421 = vst.msk [vmem:[%s163 + $0x56] sm:$0x1] %vm1967, %v2379
        %2422 = vst.msk [vmem:[%s163 + $0x66] sm:$0x1] %vm1967, %v2381
        %2423 = vst.msk [vmem:[%s163 + $0x76] sm:$0x1] %vm1967, %v2383
        %2424 = vst.msk [vmem:[%s163 + $0x86] sm:$0x1] %vm1967, %v2385
        %2425 = vst.msk [vmem:[%s163 + $0x96] sm:$0x1] %vm1967, %v2387
        %2426 = vst.msk [vmem:[%s163 + $0xa6] sm:$0x1] %vm1967, %v2389
        %2427 = vst.msk [vmem:[%s163 + $0xb6] sm:$0x1] %vm1967, %v2391
        %2428 = vst.msk [vmem:[%s163 + $0xc6] sm:$0x1] %vm1967, %v2393
        %2429 = vst.msk [vmem:[%s163 + $0xd6] sm:$0x1] %vm1967, %v2395
        %2430 = vst.msk [vmem:[%s163 + $0xe6] sm:$0x1] %vm1967, %v2397
        %2431 = vst.msk [vmem:[%s163 + $0xf6] sm:$0x1] %vm1967, %v2399
        %v2434 = vcombine.low %v1845, %v1846
        %v2435 = vcombine.high %v1845, %v1846
        %v2437 = vunpack.c.l.s4 1966171168
        %v2438 = vunpack.c.0.s8 %v2437
        %v2439 = vlaneseq
        %v2440 = vshrl.u32 %v2439, 7
        %v2441 = vsub.s32 %v2438, %v2440
        %v2442 = vrot.slane %v2434, %v2441
        %v2444 = vunpack.c.l.s4 1966171168
        %v2445 = vunpack.c.0.s8 %v2444
        %v2446 = vlaneseq
        %v2447 = vshrl.u32 %v2446, 7
        %v2448 = vsub.s32 %v2445, %v2447
        %v2449 = vrot.slane %v2435, %v2448
        %v2450 = vcombine.high %v2442, %v2442
        %v2451 = vcombine.high %v2449, %v2449
        %v2453 = vunpack.c.l.s4 1966171168
        %v2454 = vunpack.c.0.s8 %v2453
        %v2455 = vlaneseq
        %v2456 = vshrl.u32 %v2455, 7
        %v2457 = vsub.s32 %v2454, %v2456
        %v2458 = vrot.slane %v2442, %v2457
        %v2460 = vunpack.c.l.s4 1966171168
        %v2461 = vunpack.c.0.s8 %v2460
        %v2462 = vlaneseq
        %v2463 = vshrl.u32 %v2462, 7
        %v2464 = vsub.s32 %v2461, %v2463
        %v2465 = vrot.slane %v2449, %v2464
        %v2467 = vunpack.c.l.s4 1966171168
        %v2468 = vunpack.c.0.s8 %v2467
        %v2469 = vlaneseq
        %v2470 = vshrl.u32 %v2469, 7
        %v2471 = vsub.s32 %v2468, %v2470
        %v2472 = vrot.slane %v2450, %v2471
        %v2474 = vunpack.c.l.s4 1966171168
        %v2475 = vunpack.c.0.s8 %v2474
        %v2476 = vlaneseq
        %v2477 = vshrl.u32 %v2476, 7
        %v2478 = vsub.s32 %v2475, %v2477
        %v2479 = vrot.slane %v2451, %v2478
        %v2480 = vcombine.high %v2458, %v2458
        %v2481 = vcombine.high %v2465, %v2465
        %v2482 = vcombine.high %v2472, %v2472
        %v2483 = vcombine.high %v2479, %v2479
        %v2484 = vcombine.low %v1848, %v1849
        %v2485 = vcombine.high %v1848, %v1849
        %v2487 = vunpack.c.l.s4 1966171168
        %v2488 = vunpack.c.0.s8 %v2487
        %v2489 = vlaneseq
        %v2490 = vshrl.u32 %v2489, 7
        %v2491 = vsub.s32 %v2488, %v2490
        %v2492 = vrot.slane %v2484, %v2491
        %v2494 = vunpack.c.l.s4 1966171168
        %v2495 = vunpack.c.0.s8 %v2494
        %v2496 = vlaneseq
        %v2497 = vshrl.u32 %v2496, 7
        %v2498 = vsub.s32 %v2495, %v2497
        %v2499 = vrot.slane %v2485, %v2498
        %v2500 = vcombine.high %v2492, %v2492
        %v2501 = vcombine.high %v2499, %v2499
        %v2503 = vunpack.c.l.s4 1966171168
        %v2504 = vunpack.c.0.s8 %v2503
        %v2505 = vlaneseq
        %v2506 = vshrl.u32 %v2505, 7
        %v2507 = vsub.s32 %v2504, %v2506
        %v2508 = vrot.slane %v2492, %v2507
        %v2510 = vunpack.c.l.s4 1966171168
        %v2511 = vunpack.c.0.s8 %v2510
        %v2512 = vlaneseq
        %v2513 = vshrl.u32 %v2512, 7
        %v2514 = vsub.s32 %v2511, %v2513
        %v2515 = vrot.slane %v2499, %v2514
        %v2517 = vunpack.c.l.s4 1966171168
        %v2518 = vunpack.c.0.s8 %v2517
        %v2519 = vlaneseq
        %v2520 = vshrl.u32 %v2519, 7
        %v2521 = vsub.s32 %v2518, %v2520
        %v2522 = vrot.slane %v2500, %v2521
        %v2524 = vunpack.c.l.s4 1966171168
        %v2525 = vunpack.c.0.s8 %v2524
        %v2526 = vlaneseq
        %v2527 = vshrl.u32 %v2526, 7
        %v2528 = vsub.s32 %v2525, %v2527
        %v2529 = vrot.slane %v2501, %v2528
        %v2530 = vcombine.high %v2508, %v2508
        %v2531 = vcombine.high %v2515, %v2515
        %v2532 = vcombine.high %v2522, %v2522
        %v2533 = vcombine.high %v2529, %v2529
        %v2534 = vlaneseq
        %v2535 = vshrl.u32 %v2534, 7
        %v2536 = vsub.s32 0, %v2535
        %v2537 = vrot.slane %v2458, %v2536
        %v2538 = vlaneseq
        %v2539 = vshrl.u32 %v2538, 7
        %v2540 = vsub.s32 1, %v2539
        %v2541 = vrot.slane %v2458, %v2540
        %v2542 = vlaneseq
        %v2543 = vshrl.u32 %v2542, 7
        %v2544 = vsub.s32 0, %v2543
        %v2545 = vrot.slane %v2472, %v2544
        %v2546 = vlaneseq
        %v2547 = vshrl.u32 %v2546, 7
        %v2548 = vsub.s32 1, %v2547
        %v2549 = vrot.slane %v2472, %v2548
        %v2550 = vlaneseq
        %v2551 = vshrl.u32 %v2550, 7
        %v2552 = vsub.s32 0, %v2551
        %v2553 = vrot.slane %v2480, %v2552
        %v2554 = vlaneseq
        %v2555 = vshrl.u32 %v2554, 7
        %v2556 = vsub.s32 1, %v2555
        %v2557 = vrot.slane %v2480, %v2556
        %v2558 = vlaneseq
        %v2559 = vshrl.u32 %v2558, 7
        %v2560 = vsub.s32 0, %v2559
        %v2561 = vrot.slane %v2482, %v2560
        %v2562 = vlaneseq
        %v2563 = vshrl.u32 %v2562, 7
        %v2564 = vsub.s32 1, %v2563
        %v2565 = vrot.slane %v2482, %v2564
        %v2566 = vlaneseq
        %v2567 = vshrl.u32 %v2566, 7
        %v2568 = vsub.s32 0, %v2567
        %v2569 = vrot.slane %v2465, %v2568
        %v2570 = vlaneseq
        %v2571 = vshrl.u32 %v2570, 7
        %v2572 = vsub.s32 1, %v2571
        %v2573 = vrot.slane %v2465, %v2572
        %v2574 = vlaneseq
        %v2575 = vshrl.u32 %v2574, 7
        %v2576 = vsub.s32 0, %v2575
        %v2577 = vrot.slane %v2479, %v2576
        %v2578 = vlaneseq
        %v2579 = vshrl.u32 %v2578, 7
        %v2580 = vsub.s32 1, %v2579
        %v2581 = vrot.slane %v2479, %v2580
        %v2582 = vlaneseq
        %v2583 = vshrl.u32 %v2582, 7
        %v2584 = vsub.s32 0, %v2583
        %v2585 = vrot.slane %v2481, %v2584
        %v2586 = vlaneseq
        %v2587 = vshrl.u32 %v2586, 7
        %v2588 = vsub.s32 1, %v2587
        %v2589 = vrot.slane %v2481, %v2588
        %v2590 = vlaneseq
        %v2591 = vshrl.u32 %v2590, 7
        %v2592 = vsub.s32 0, %v2591
        %v2593 = vrot.slane %v2483, %v2592
        %v2594 = vlaneseq
        %v2595 = vshrl.u32 %v2594, 7
        %v2596 = vsub.s32 1, %v2595
        %v2597 = vrot.slane %v2483, %v2596
        %v2598 = vlaneseq
        %v2599 = vshrl.u32 %v2598, 7
        %v2600 = vsub.s32 0, %v2599
        %v2601 = vrot.slane %v2508, %v2600
        %v2602 = vlaneseq
        %v2603 = vshrl.u32 %v2602, 7
        %v2604 = vsub.s32 1, %v2603
        %v2605 = vrot.slane %v2508, %v2604
        %v2606 = vlaneseq
        %v2607 = vshrl.u32 %v2606, 7
        %v2608 = vsub.s32 0, %v2607
        %v2609 = vrot.slane %v2522, %v2608
        %v2610 = vlaneseq
        %v2611 = vshrl.u32 %v2610, 7
        %v2612 = vsub.s32 1, %v2611
        %v2613 = vrot.slane %v2522, %v2612
        %v2614 = vlaneseq
        %v2615 = vshrl.u32 %v2614, 7
        %v2616 = vsub.s32 0, %v2615
        %v2617 = vrot.slane %v2530, %v2616
        %v2618 = vlaneseq
        %v2619 = vshrl.u32 %v2618, 7
        %v2620 = vsub.s32 1, %v2619
        %v2621 = vrot.slane %v2530, %v2620
        %v2622 = vlaneseq
        %v2623 = vshrl.u32 %v2622, 7
        %v2624 = vsub.s32 0, %v2623
        %v2625 = vrot.slane %v2532, %v2624
        %v2626 = vlaneseq
        %v2627 = vshrl.u32 %v2626, 7
        %v2628 = vsub.s32 1, %v2627
        %v2629 = vrot.slane %v2532, %v2628
        %v2630 = vlaneseq
        %v2631 = vshrl.u32 %v2630, 7
        %v2632 = vsub.s32 0, %v2631
        %v2633 = vrot.slane %v2515, %v2632
        %v2634 = vlaneseq
        %v2635 = vshrl.u32 %v2634, 7
        %v2636 = vsub.s32 1, %v2635
        %v2637 = vrot.slane %v2515, %v2636
        %v2638 = vlaneseq
        %v2639 = vshrl.u32 %v2638, 7
        %v2640 = vsub.s32 0, %v2639
        %v2641 = vrot.slane %v2529, %v2640
        %v2642 = vlaneseq
        %v2643 = vshrl.u32 %v2642, 7
        %v2644 = vsub.s32 1, %v2643
        %v2645 = vrot.slane %v2529, %v2644
        %v2646 = vlaneseq
        %v2647 = vshrl.u32 %v2646, 7
        %v2648 = vsub.s32 0, %v2647
        %v2649 = vrot.slane %v2531, %v2648
        %v2650 = vlaneseq
        %v2651 = vshrl.u32 %v2650, 7
        %v2652 = vsub.s32 1, %v2651
        %v2653 = vrot.slane %v2531, %v2652
        %v2654 = vlaneseq
        %v2655 = vshrl.u32 %v2654, 7
        %v2656 = vsub.s32 0, %v2655
        %v2657 = vrot.slane %v2533, %v2656
        %v2658 = vlaneseq
        %v2659 = vshrl.u32 %v2658, 7
        %v2660 = vsub.s32 1, %v2659
        %v2661 = vrot.slane %v2533, %v2660
        %2662 = vrot.lane.b32.xlu0 %v2537, 2
        %v2663 = vpop.permute.xlu0 %2662
        %2664 = vrot.lane.b32.xlu0 %v2541, 2
        %v2665 = vpop.permute.xlu0 %2664
        %2666 = vrot.lane.b32.xlu0 %v2545, 2
        %v2667 = vpop.permute.xlu0 %2666
        %2668 = vrot.lane.b32.xlu0 %v2549, 2
        %v2669 = vpop.permute.xlu0 %2668
        %2670 = vrot.lane.b32.xlu0 %v2553, 2
        %v2671 = vpop.permute.xlu0 %2670
        %2672 = vrot.lane.b32.xlu0 %v2557, 2
        %v2673 = vpop.permute.xlu0 %2672
        %2674 = vrot.lane.b32.xlu0 %v2561, 2
        %v2675 = vpop.permute.xlu0 %2674
        %2676 = vrot.lane.b32.xlu0 %v2565, 2
        %v2677 = vpop.permute.xlu0 %2676
        %2678 = vrot.lane.b32.xlu0 %v2569, 2
        %v2679 = vpop.permute.xlu0 %2678
        %2680 = vrot.lane.b32.xlu0 %v2573, 2
        %v2681 = vpop.permute.xlu0 %2680
        %2682 = vrot.lane.b32.xlu0 %v2577, 2
        %v2683 = vpop.permute.xlu0 %2682
        %2684 = vrot.lane.b32.xlu0 %v2581, 2
        %v2685 = vpop.permute.xlu0 %2684
        %2686 = vrot.lane.b32.xlu0 %v2585, 2
        %v2687 = vpop.permute.xlu0 %2686
        %2688 = vrot.lane.b32.xlu0 %v2589, 2
        %v2689 = vpop.permute.xlu0 %2688
        %2690 = vrot.lane.b32.xlu0 %v2593, 2
        %v2691 = vpop.permute.xlu0 %2690
        %2692 = vrot.lane.b32.xlu0 %v2597, 2
        %v2693 = vpop.permute.xlu0 %2692
        %2694 = vrot.lane.b32.xlu0 %v2601, 2
        %v2695 = vpop.permute.xlu0 %2694
        %2696 = vrot.lane.b32.xlu0 %v2605, 2
        %v2697 = vpop.permute.xlu0 %2696
        %2698 = vrot.lane.b32.xlu0 %v2609, 2
        %v2699 = vpop.permute.xlu0 %2698
        %2700 = vrot.lane.b32.xlu0 %v2613, 2
        %v2701 = vpop.permute.xlu0 %2700
        %2702 = vrot.lane.b32.xlu0 %v2617, 2
        %v2703 = vpop.permute.xlu0 %2702
        %2704 = vrot.lane.b32.xlu0 %v2621, 2
        %v2705 = vpop.permute.xlu0 %2704
        %2706 = vrot.lane.b32.xlu0 %v2625, 2
        %v2707 = vpop.permute.xlu0 %2706
        %2708 = vrot.lane.b32.xlu0 %v2629, 2
        %v2709 = vpop.permute.xlu0 %2708
        %2710 = vrot.lane.b32.xlu0 %v2633, 2
        %v2711 = vpop.permute.xlu0 %2710
        %2712 = vrot.lane.b32.xlu0 %v2637, 2
        %v2713 = vpop.permute.xlu0 %2712
        %2714 = vrot.lane.b32.xlu0 %v2641, 2
        %v2715 = vpop.permute.xlu0 %2714
        %2716 = vrot.lane.b32.xlu0 %v2645, 2
        %v2717 = vpop.permute.xlu0 %2716
        %2718 = vrot.lane.b32.xlu0 %v2649, 2
        %v2719 = vpop.permute.xlu0 %2718
        %2720 = vrot.lane.b32.xlu0 %v2653, 2
        %v2721 = vpop.permute.xlu0 %2720
        %2722 = vrot.lane.b32.xlu0 %v2657, 2
        %v2723 = vpop.permute.xlu0 %2722
        %2724 = vrot.lane.b32.xlu0 %v2661, 2
        %v2725 = vpop.permute.xlu0 %2724
        %vm2726 = vcmask 15360
        %v2727 = vsel %vm2726, %v2663, %v2665
        %v2728 = vsel %vm2726, %v2667, %v2669
        %v2729 = vsel %vm2726, %v2671, %v2673
        %v2730 = vsel %vm2726, %v2675, %v2677
        %v2731 = vsel %vm2726, %v2679, %v2681
        %v2732 = vsel %vm2726, %v2683, %v2685
        %v2733 = vsel %vm2726, %v2687, %v2689
        %v2734 = vsel %vm2726, %v2691, %v2693
        %v2735 = vsel %vm2726, %v2695, %v2697
        %v2736 = vsel %vm2726, %v2699, %v2701
        %v2737 = vsel %vm2726, %v2703, %v2705
        %v2738 = vsel %vm2726, %v2707, %v2709
        %v2739 = vsel %vm2726, %v2711, %v2713
        %v2740 = vsel %vm2726, %v2715, %v2717
        %v2741 = vsel %vm2726, %v2719, %v2721
        %v2742 = vsel %vm2726, %v2723, %v2725
        %2759 = vst.msk [vmem:[%s163 + $0x7] sm:$0x1] %vm1967, %v2727
        %2760 = vst.msk [vmem:[%s163 + $0x17] sm:$0x1] %vm1967, %v2728
        %2761 = vst.msk [vmem:[%s163 + $0x27] sm:$0x1] %vm1967, %v2729
        %2762 = vst.msk [vmem:[%s163 + $0x37] sm:$0x1] %vm1967, %v2730
        %2763 = vst.msk [vmem:[%s163 + $0x47] sm:$0x1] %vm1967, %v2731
        %2764 = vst.msk [vmem:[%s163 + $0x57] sm:$0x1] %vm1967, %v2732
        %2765 = vst.msk [vmem:[%s163 + $0x67] sm:$0x1] %vm1967, %v2733
        %2766 = vst.msk [vmem:[%s163 + $0x77] sm:$0x1] %vm1967, %v2734
        %2767 = vst.msk [vmem:[%s163 + $0x87] sm:$0x1] %vm1967, %v2735
        %2768 = vst.msk [vmem:[%s163 + $0x97] sm:$0x1] %vm1967, %v2736
        %2769 = vst.msk [vmem:[%s163 + $0xa7] sm:$0x1] %vm1967, %v2737
        %2770 = vst.msk [vmem:[%s163 + $0xb7] sm:$0x1] %vm1967, %v2738
        %2771 = vst.msk [vmem:[%s163 + $0xc7] sm:$0x1] %vm1967, %v2739
        %2772 = vst.msk [vmem:[%s163 + $0xd7] sm:$0x1] %vm1967, %v2740
        %2773 = vst.msk [vmem:[%s163 + $0xe7] sm:$0x1] %vm1967, %v2741
        %2774 = vst.msk [vmem:[%s163 + $0xf7] sm:$0x1] %vm1967, %v2742
        %v2775 = vcombine.high %v1846, %v1846
        %v2777 = vunpack.c.l.s4 1966171168
        %v2778 = vunpack.c.0.s8 %v2777
        %v2779 = vlaneseq
        %v2780 = vshrl.u32 %v2779, 7
        %v2781 = vsub.s32 %v2778, %v2780
        %v2782 = vrot.slane %v1846, %v2781
        %v2784 = vunpack.c.l.s4 1966171168
        %v2785 = vunpack.c.0.s8 %v2784
        %v2786 = vlaneseq
        %v2787 = vshrl.u32 %v2786, 7
        %v2788 = vsub.s32 %v2785, %v2787
        %v2789 = vrot.slane %v2775, %v2788
        %v2790 = vcombine.high %v2782, %v2782
        %v2791 = vcombine.high %v2789, %v2789
        %v2793 = vunpack.c.l.s4 1966171168
        %v2794 = vunpack.c.0.s8 %v2793
        %v2795 = vlaneseq
        %v2796 = vshrl.u32 %v2795, 7
        %v2797 = vsub.s32 %v2794, %v2796
        %v2798 = vrot.slane %v2782, %v2797
        %v2800 = vunpack.c.l.s4 1966171168
        %v2801 = vunpack.c.0.s8 %v2800
        %v2802 = vlaneseq
        %v2803 = vshrl.u32 %v2802, 7
        %v2804 = vsub.s32 %v2801, %v2803
        %v2805 = vrot.slane %v2789, %v2804
        %v2807 = vunpack.c.l.s4 1966171168
        %v2808 = vunpack.c.0.s8 %v2807
        %v2809 = vlaneseq
        %v2810 = vshrl.u32 %v2809, 7
        %v2811 = vsub.s32 %v2808, %v2810
        %v2812 = vrot.slane %v2790, %v2811
        %v2814 = vunpack.c.l.s4 1966171168
        %v2815 = vunpack.c.0.s8 %v2814
        %v2816 = vlaneseq
        %v2817 = vshrl.u32 %v2816, 7
        %v2818 = vsub.s32 %v2815, %v2817
        %v2819 = vrot.slane %v2791, %v2818
        %v2820 = vcombine.high %v2798, %v2798
        %v2821 = vcombine.high %v2805, %v2805
        %v2822 = vcombine.high %v2812, %v2812
        %v2823 = vcombine.high %v2819, %v2819
        %v2824 = vcombine.high %v1849, %v1849
        %v2826 = vunpack.c.l.s4 1966171168
        %v2827 = vunpack.c.0.s8 %v2826
        %v2828 = vlaneseq
        %v2829 = vshrl.u32 %v2828, 7
        %v2830 = vsub.s32 %v2827, %v2829
        %v2831 = vrot.slane %v1849, %v2830
        %v2833 = vunpack.c.l.s4 1966171168
        %v2834 = vunpack.c.0.s8 %v2833
        %v2835 = vlaneseq
        %v2836 = vshrl.u32 %v2835, 7
        %v2837 = vsub.s32 %v2834, %v2836
        %v2838 = vrot.slane %v2824, %v2837
        %v2839 = vcombine.high %v2831, %v2831
        %v2840 = vcombine.high %v2838, %v2838
        %v2842 = vunpack.c.l.s4 1966171168
        %v2843 = vunpack.c.0.s8 %v2842
        %v2844 = vlaneseq
        %v2845 = vshrl.u32 %v2844, 7
        %v2846 = vsub.s32 %v2843, %v2845
        %v2847 = vrot.slane %v2831, %v2846
        %v2849 = vunpack.c.l.s4 1966171168
        %v2850 = vunpack.c.0.s8 %v2849
        %v2851 = vlaneseq
        %v2852 = vshrl.u32 %v2851, 7
        %v2853 = vsub.s32 %v2850, %v2852
        %v2854 = vrot.slane %v2838, %v2853
        %v2856 = vunpack.c.l.s4 1966171168
        %v2857 = vunpack.c.0.s8 %v2856
        %v2858 = vlaneseq
        %v2859 = vshrl.u32 %v2858, 7
        %v2860 = vsub.s32 %v2857, %v2859
        %v2861 = vrot.slane %v2839, %v2860
        %v2863 = vunpack.c.l.s4 1966171168
        %v2864 = vunpack.c.0.s8 %v2863
        %v2865 = vlaneseq
        %v2866 = vshrl.u32 %v2865, 7
        %v2867 = vsub.s32 %v2864, %v2866
        %v2868 = vrot.slane %v2840, %v2867
        %v2869 = vcombine.high %v2847, %v2847
        %v2870 = vcombine.high %v2854, %v2854
        %v2871 = vcombine.high %v2861, %v2861
        %v2872 = vcombine.high %v2868, %v2868
        %v2873 = vlaneseq
        %v2874 = vshrl.u32 %v2873, 7
        %v2875 = vsub.s32 0, %v2874
        %v2876 = vrot.slane %v2798, %v2875
        %v2877 = vlaneseq
        %v2878 = vshrl.u32 %v2877, 7
        %v2879 = vsub.s32 0, %v2878
        %v2880 = vrot.slane %v2812, %v2879
        %v2881 = vlaneseq
        %v2882 = vshrl.u32 %v2881, 7
        %v2883 = vsub.s32 0, %v2882
        %v2884 = vrot.slane %v2820, %v2883
        %v2885 = vlaneseq
        %v2886 = vshrl.u32 %v2885, 7
        %v2887 = vsub.s32 0, %v2886
        %v2888 = vrot.slane %v2822, %v2887
        %v2889 = vlaneseq
        %v2890 = vshrl.u32 %v2889, 7
        %v2891 = vsub.s32 0, %v2890
        %v2892 = vrot.slane %v2805, %v2891
        %v2893 = vlaneseq
        %v2894 = vshrl.u32 %v2893, 7
        %v2895 = vsub.s32 0, %v2894
        %v2896 = vrot.slane %v2819, %v2895
        %v2897 = vlaneseq
        %v2898 = vshrl.u32 %v2897, 7
        %v2899 = vsub.s32 0, %v2898
        %v2900 = vrot.slane %v2821, %v2899
        %v2901 = vlaneseq
        %v2902 = vshrl.u32 %v2901, 7
        %v2903 = vsub.s32 0, %v2902
        %v2904 = vrot.slane %v2823, %v2903
        %v2905 = vlaneseq
        %v2906 = vshrl.u32 %v2905, 7
        %v2907 = vsub.s32 0, %v2906
        %v2908 = vrot.slane %v2847, %v2907
        %v2909 = vlaneseq
        %v2910 = vshrl.u32 %v2909, 7
        %v2911 = vsub.s32 0, %v2910
        %v2912 = vrot.slane %v2861, %v2911
        %v2913 = vlaneseq
        %v2914 = vshrl.u32 %v2913, 7
        %v2915 = vsub.s32 0, %v2914
        %v2916 = vrot.slane %v2869, %v2915
        %v2917 = vlaneseq
        %v2918 = vshrl.u32 %v2917, 7
        %v2919 = vsub.s32 0, %v2918
        %v2920 = vrot.slane %v2871, %v2919
        %v2921 = vlaneseq
        %v2922 = vshrl.u32 %v2921, 7
        %v2923 = vsub.s32 0, %v2922
        %v2924 = vrot.slane %v2854, %v2923
        %v2925 = vlaneseq
        %v2926 = vshrl.u32 %v2925, 7
        %v2927 = vsub.s32 0, %v2926
        %v2928 = vrot.slane %v2868, %v2927
        %v2929 = vlaneseq
        %v2930 = vshrl.u32 %v2929, 7
        %v2931 = vsub.s32 0, %v2930
        %v2932 = vrot.slane %v2870, %v2931
        %v2933 = vlaneseq
        %v2934 = vshrl.u32 %v2933, 7
        %v2935 = vsub.s32 0, %v2934
        %v2936 = vrot.slane %v2872, %v2935
        %2937 = vrot.lane.b32.xlu0 %v2876, 112
        %v2938 = vpop.permute.xlu0 %2937
        %2939 = vrot.lane.b32.xlu0 %v2880, 112
        %v2940 = vpop.permute.xlu0 %2939
        %2941 = vrot.lane.b32.xlu0 %v2884, 112
        %v2942 = vpop.permute.xlu0 %2941
        %2943 = vrot.lane.b32.xlu0 %v2888, 112
        %v2944 = vpop.permute.xlu0 %2943
        %2945 = vrot.lane.b32.xlu0 %v2892, 112
        %v2946 = vpop.permute.xlu0 %2945
        %2947 = vrot.lane.b32.xlu0 %v2896, 112
        %v2948 = vpop.permute.xlu0 %2947
        %2949 = vrot.lane.b32.xlu0 %v2900, 112
        %v2950 = vpop.permute.xlu0 %2949
        %2951 = vrot.lane.b32.xlu0 %v2904, 112
        %v2952 = vpop.permute.xlu0 %2951
        %2953 = vrot.lane.b32.xlu0 %v2908, 112
        %v2954 = vpop.permute.xlu0 %2953
        %2955 = vrot.lane.b32.xlu0 %v2912, 112
        %v2956 = vpop.permute.xlu0 %2955
        %2957 = vrot.lane.b32.xlu0 %v2916, 112
        %v2958 = vpop.permute.xlu0 %2957
        %2959 = vrot.lane.b32.xlu0 %v2920, 112
        %v2960 = vpop.permute.xlu0 %2959
        %2961 = vrot.lane.b32.xlu0 %v2924, 112
        %v2962 = vpop.permute.xlu0 %2961
        %2963 = vrot.lane.b32.xlu0 %v2928, 112
        %v2964 = vpop.permute.xlu0 %2963
        %2965 = vrot.lane.b32.xlu0 %v2932, 112
        %v2966 = vpop.permute.xlu0 %2965
        %2967 = vrot.lane.b32.xlu0 %v2936, 112
        %v2968 = vpop.permute.xlu0 %2967
        %2985 = vst.msk [vmem:[%s163 + $0x8] sm:$0x1] %vm1967, %v2938
        %2986 = vst.msk [vmem:[%s163 + $0x18] sm:$0x1] %vm1967, %v2940
        %2987 = vst.msk [vmem:[%s163 + $0x28] sm:$0x1] %vm1967, %v2942
        %2988 = vst.msk [vmem:[%s163 + $0x38] sm:$0x1] %vm1967, %v2944
        %2989 = vst.msk [vmem:[%s163 + $0x48] sm:$0x1] %vm1967, %v2946
        %2990 = vst.msk [vmem:[%s163 + $0x58] sm:$0x1] %vm1967, %v2948
        %2991 = vst.msk [vmem:[%s163 + $0x68] sm:$0x1] %vm1967, %v2950
        %2992 = vst.msk [vmem:[%s163 + $0x78] sm:$0x1] %vm1967, %v2952
        %2993 = vst.msk [vmem:[%s163 + $0x88] sm:$0x1] %vm1967, %v2954
        %2994 = vst.msk [vmem:[%s163 + $0x98] sm:$0x1] %vm1967, %v2956
        %2995 = vst.msk [vmem:[%s163 + $0xa8] sm:$0x1] %vm1967, %v2958
        %2996 = vst.msk [vmem:[%s163 + $0xb8] sm:$0x1] %vm1967, %v2960
        %2997 = vst.msk [vmem:[%s163 + $0xc8] sm:$0x1] %vm1967, %v2962
        %2998 = vst.msk [vmem:[%s163 + $0xd8] sm:$0x1] %vm1967, %v2964
        %2999 = vst.msk [vmem:[%s163 + $0xe8] sm:$0x1] %vm1967, %v2966
        %3000 = vst.msk [vmem:[%s163 + $0xf8] sm:$0x1] %vm1967, %v2968
        %3001 = vrot.lane.b32.xlu0 %v2876, 94
        %v3002 = vpop.permute.xlu0 %3001
        %3003 = vrot.lane.b32.xlu0 %v2880, 94
        %v3004 = vpop.permute.xlu0 %3003
        %3005 = vrot.lane.b32.xlu0 %v2884, 94
        %v3006 = vpop.permute.xlu0 %3005
        %3007 = vrot.lane.b32.xlu0 %v2888, 94
        %v3008 = vpop.permute.xlu0 %3007
        %3009 = vrot.lane.b32.xlu0 %v2892, 94
        %v3010 = vpop.permute.xlu0 %3009
        %3011 = vrot.lane.b32.xlu0 %v2896, 94
        %v3012 = vpop.permute.xlu0 %3011
        %3013 = vrot.lane.b32.xlu0 %v2900, 94
        %v3014 = vpop.permute.xlu0 %3013
        %3015 = vrot.lane.b32.xlu0 %v2904, 94
        %v3016 = vpop.permute.xlu0 %3015
        %3017 = vrot.lane.b32.xlu0 %v2908, 94
        %v3018 = vpop.permute.xlu0 %3017
        %3019 = vrot.lane.b32.xlu0 %v2912, 94
        %v3020 = vpop.permute.xlu0 %3019
        %3021 = vrot.lane.b32.xlu0 %v2916, 94
        %v3022 = vpop.permute.xlu0 %3021
        %3023 = vrot.lane.b32.xlu0 %v2920, 94
        %v3024 = vpop.permute.xlu0 %3023
        %3025 = vrot.lane.b32.xlu0 %v2924, 94
        %v3026 = vpop.permute.xlu0 %3025
        %3027 = vrot.lane.b32.xlu0 %v2928, 94
        %v3028 = vpop.permute.xlu0 %3027
        %3029 = vrot.lane.b32.xlu0 %v2932, 94
        %v3030 = vpop.permute.xlu0 %3029
        %3031 = vrot.lane.b32.xlu0 %v2936, 94
        %v3032 = vpop.permute.xlu0 %3031
        %3049 = vst.msk [vmem:[%s163 + $0x9] sm:$0x1] %vm1967, %v3002
        %3050 = vst.msk [vmem:[%s163 + $0x19] sm:$0x1] %vm1967, %v3004
        %3051 = vst.msk [vmem:[%s163 + $0x29] sm:$0x1] %vm1967, %v3006
        %3052 = vst.msk [vmem:[%s163 + $0x39] sm:$0x1] %vm1967, %v3008
        %3053 = vst.msk [vmem:[%s163 + $0x49] sm:$0x1] %vm1967, %v3010
        %3054 = vst.msk [vmem:[%s163 + $0x59] sm:$0x1] %vm1967, %v3012
        %3055 = vst.msk [vmem:[%s163 + $0x69] sm:$0x1] %vm1967, %v3014
        %3056 = vst.msk [vmem:[%s163 + $0x79] sm:$0x1] %vm1967, %v3016
        %3057 = vst.msk [vmem:[%s163 + $0x89] sm:$0x1] %vm1967, %v3018
        %3058 = vst.msk [vmem:[%s163 + $0x99] sm:$0x1] %vm1967, %v3020
        %3059 = vst.msk [vmem:[%s163 + $0xa9] sm:$0x1] %vm1967, %v3022
        %3060 = vst.msk [vmem:[%s163 + $0xb9] sm:$0x1] %vm1967, %v3024
        %3061 = vst.msk [vmem:[%s163 + $0xc9] sm:$0x1] %vm1967, %v3026
        %3062 = vst.msk [vmem:[%s163 + $0xd9] sm:$0x1] %vm1967, %v3028
        %3063 = vst.msk [vmem:[%s163 + $0xe9] sm:$0x1] %vm1967, %v3030
        %3064 = vst.msk [vmem:[%s163 + $0xf9] sm:$0x1] %vm1967, %v3032
        %3065 = vrot.lane.b32.xlu0 %v2876, 76
        %v3066 = vpop.permute.xlu0 %3065
        %3067 = vrot.lane.b32.xlu0 %v2880, 76
        %v3068 = vpop.permute.xlu0 %3067
        %3069 = vrot.lane.b32.xlu0 %v2884, 76
        %v3070 = vpop.permute.xlu0 %3069
        %3071 = vrot.lane.b32.xlu0 %v2888, 76
        %v3072 = vpop.permute.xlu0 %3071
        %3073 = vrot.lane.b32.xlu0 %v2892, 76
        %v3074 = vpop.permute.xlu0 %3073
        %3075 = vrot.lane.b32.xlu0 %v2896, 76
        %v3076 = vpop.permute.xlu0 %3075
        %3077 = vrot.lane.b32.xlu0 %v2900, 76
        %v3078 = vpop.permute.xlu0 %3077
        %3079 = vrot.lane.b32.xlu0 %v2904, 76
        %v3080 = vpop.permute.xlu0 %3079
        %3081 = vrot.lane.b32.xlu0 %v2908, 76
        %v3082 = vpop.permute.xlu0 %3081
        %3083 = vrot.lane.b32.xlu0 %v2912, 76
        %v3084 = vpop.permute.xlu0 %3083
        %3085 = vrot.lane.b32.xlu0 %v2916, 76
        %v3086 = vpop.permute.xlu0 %3085
        %3087 = vrot.lane.b32.xlu0 %v2920, 76
        %v3088 = vpop.permute.xlu0 %3087
        %3089 = vrot.lane.b32.xlu0 %v2924, 76
        %v3090 = vpop.permute.xlu0 %3089
        %3091 = vrot.lane.b32.xlu0 %v2928, 76
        %v3092 = vpop.permute.xlu0 %3091
        %3093 = vrot.lane.b32.xlu0 %v2932, 76
        %v3094 = vpop.permute.xlu0 %3093
        %3095 = vrot.lane.b32.xlu0 %v2936, 76
        %v3096 = vpop.permute.xlu0 %3095
        %3113 = vst.msk [vmem:[%s163 + $0xa] sm:$0x1] %vm1967, %v3066
        %3114 = vst.msk [vmem:[%s163 + $0x1a] sm:$0x1] %vm1967, %v3068
        %3115 = vst.msk [vmem:[%s163 + $0x2a] sm:$0x1] %vm1967, %v3070
        %3116 = vst.msk [vmem:[%s163 + $0x3a] sm:$0x1] %vm1967, %v3072
        %3117 = vst.msk [vmem:[%s163 + $0x4a] sm:$0x1] %vm1967, %v3074
        %3118 = vst.msk [vmem:[%s163 + $0x5a] sm:$0x1] %vm1967, %v3076
        %3119 = vst.msk [vmem:[%s163 + $0x6a] sm:$0x1] %vm1967, %v3078
        %3120 = vst.msk [vmem:[%s163 + $0x7a] sm:$0x1] %vm1967, %v3080
        %3121 = vst.msk [vmem:[%s163 + $0x8a] sm:$0x1] %vm1967, %v3082
        %3122 = vst.msk [vmem:[%s163 + $0x9a] sm:$0x1] %vm1967, %v3084
        %3123 = vst.msk [vmem:[%s163 + $0xaa] sm:$0x1] %vm1967, %v3086
        %3124 = vst.msk [vmem:[%s163 + $0xba] sm:$0x1] %vm1967, %v3088
        %3125 = vst.msk [vmem:[%s163 + $0xca] sm:$0x1] %vm1967, %v3090
        %3126 = vst.msk [vmem:[%s163 + $0xda] sm:$0x1] %vm1967, %v3092
        %3127 = vst.msk [vmem:[%s163 + $0xea] sm:$0x1] %vm1967, %v3094
        %3128 = vst.msk [vmem:[%s163 + $0xfa] sm:$0x1] %vm1967, %v3096
        %3129 = vrot.lane.b32.xlu0 %v2876, 58
        %v3130 = vpop.permute.xlu0 %3129
        %3131 = vrot.lane.b32.xlu0 %v2880, 58
        %v3132 = vpop.permute.xlu0 %3131
        %3133 = vrot.lane.b32.xlu0 %v2884, 58
        %v3134 = vpop.permute.xlu0 %3133
        %3135 = vrot.lane.b32.xlu0 %v2888, 58
        %v3136 = vpop.permute.xlu0 %3135
        %3137 = vrot.lane.b32.xlu0 %v2892, 58
        %v3138 = vpop.permute.xlu0 %3137
        %3139 = vrot.lane.b32.xlu0 %v2896, 58
        %v3140 = vpop.permute.xlu0 %3139
        %3141 = vrot.lane.b32.xlu0 %v2900, 58
        %v3142 = vpop.permute.xlu0 %3141
        %3143 = vrot.lane.b32.xlu0 %v2904, 58
        %v3144 = vpop.permute.xlu0 %3143
        %3145 = vrot.lane.b32.xlu0 %v2908, 58
        %v3146 = vpop.permute.xlu0 %3145
        %3147 = vrot.lane.b32.xlu0 %v2912, 58
        %v3148 = vpop.permute.xlu0 %3147
        %3149 = vrot.lane.b32.xlu0 %v2916, 58
        %v3150 = vpop.permute.xlu0 %3149
        %3151 = vrot.lane.b32.xlu0 %v2920, 58
        %v3152 = vpop.permute.xlu0 %3151
        %3153 = vrot.lane.b32.xlu0 %v2924, 58
        %v3154 = vpop.permute.xlu0 %3153
        %3155 = vrot.lane.b32.xlu0 %v2928, 58
        %v3156 = vpop.permute.xlu0 %3155
        %3157 = vrot.lane.b32.xlu0 %v2932, 58
        %v3158 = vpop.permute.xlu0 %3157
        %3159 = vrot.lane.b32.xlu0 %v2936, 58
        %v3160 = vpop.permute.xlu0 %3159
        %3177 = vst.msk [vmem:[%s163 + $0xb] sm:$0x1] %vm1967, %v3130
        %3178 = vst.msk [vmem:[%s163 + $0x1b] sm:$0x1] %vm1967, %v3132
        %3179 = vst.msk [vmem:[%s163 + $0x2b] sm:$0x1] %vm1967, %v3134
        %3180 = vst.msk [vmem:[%s163 + $0x3b] sm:$0x1] %vm1967, %v3136
        %3181 = vst.msk [vmem:[%s163 + $0x4b] sm:$0x1] %vm1967, %v3138
        %3182 = vst.msk [vmem:[%s163 + $0x5b] sm:$0x1] %vm1967, %v3140
        %3183 = vst.msk [vmem:[%s163 + $0x6b] sm:$0x1] %vm1967, %v3142
        %3184 = vst.msk [vmem:[%s163 + $0x7b] sm:$0x1] %vm1967, %v3144
        %3185 = vst.msk [vmem:[%s163 + $0x8b] sm:$0x1] %vm1967, %v3146
        %3186 = vst.msk [vmem:[%s163 + $0x9b] sm:$0x1] %vm1967, %v3148
        %3187 = vst.msk [vmem:[%s163 + $0xab] sm:$0x1] %vm1967, %v3150
        %3188 = vst.msk [vmem:[%s163 + $0xbb] sm:$0x1] %vm1967, %v3152
        %3189 = vst.msk [vmem:[%s163 + $0xcb] sm:$0x1] %vm1967, %v3154
        %3190 = vst.msk [vmem:[%s163 + $0xdb] sm:$0x1] %vm1967, %v3156
        %3191 = vst.msk [vmem:[%s163 + $0xeb] sm:$0x1] %vm1967, %v3158
        %3192 = vst.msk [vmem:[%s163 + $0xfb] sm:$0x1] %vm1967, %v3160
        %3193 = vrot.lane.b32.xlu0 %v2876, 40
        %v3194 = vpop.permute.xlu0 %3193
        %3195 = vrot.lane.b32.xlu0 %v2880, 40
        %v3196 = vpop.permute.xlu0 %3195
        %3197 = vrot.lane.b32.xlu0 %v2884, 40
        %v3198 = vpop.permute.xlu0 %3197
        %3199 = vrot.lane.b32.xlu0 %v2888, 40
        %v3200 = vpop.permute.xlu0 %3199
        %3201 = vrot.lane.b32.xlu0 %v2892, 40
        %v3202 = vpop.permute.xlu0 %3201
        %3203 = vrot.lane.b32.xlu0 %v2896, 40
        %v3204 = vpop.permute.xlu0 %3203
        %3205 = vrot.lane.b32.xlu0 %v2900, 40
        %v3206 = vpop.permute.xlu0 %3205
        %3207 = vrot.lane.b32.xlu0 %v2904, 40
        %v3208 = vpop.permute.xlu0 %3207
        %3209 = vrot.lane.b32.xlu0 %v2908, 40
        %v3210 = vpop.permute.xlu0 %3209
        %3211 = vrot.lane.b32.xlu0 %v2912, 40
        %v3212 = vpop.permute.xlu0 %3211
        %3213 = vrot.lane.b32.xlu0 %v2916, 40
        %v3214 = vpop.permute.xlu0 %3213
        %3215 = vrot.lane.b32.xlu0 %v2920, 40
        %v3216 = vpop.permute.xlu0 %3215
        %3217 = vrot.lane.b32.xlu0 %v2924, 40
        %v3218 = vpop.permute.xlu0 %3217
        %3219 = vrot.lane.b32.xlu0 %v2928, 40
        %v3220 = vpop.permute.xlu0 %3219
        %3221 = vrot.lane.b32.xlu0 %v2932, 40
        %v3222 = vpop.permute.xlu0 %3221
        %3223 = vrot.lane.b32.xlu0 %v2936, 40
        %v3224 = vpop.permute.xlu0 %3223
        %3241 = vst.msk [vmem:[%s163 + $0xc] sm:$0x1] %vm1967, %v3194
        %3242 = vst.msk [vmem:[%s163 + $0x1c] sm:$0x1] %vm1967, %v3196
        %3243 = vst.msk [vmem:[%s163 + $0x2c] sm:$0x1] %vm1967, %v3198
        %3244 = vst.msk [vmem:[%s163 + $0x3c] sm:$0x1] %vm1967, %v3200
        %3245 = vst.msk [vmem:[%s163 + $0x4c] sm:$0x1] %vm1967, %v3202
        %3246 = vst.msk [vmem:[%s163 + $0x5c] sm:$0x1] %vm1967, %v3204
        %3247 = vst.msk [vmem:[%s163 + $0x6c] sm:$0x1] %vm1967, %v3206
        %3248 = vst.msk [vmem:[%s163 + $0x7c] sm:$0x1] %vm1967, %v3208
        %3249 = vst.msk [vmem:[%s163 + $0x8c] sm:$0x1] %vm1967, %v3210
        %3250 = vst.msk [vmem:[%s163 + $0x9c] sm:$0x1] %vm1967, %v3212
        %3251 = vst.msk [vmem:[%s163 + $0xac] sm:$0x1] %vm1967, %v3214
        %3252 = vst.msk [vmem:[%s163 + $0xbc] sm:$0x1] %vm1967, %v3216
        %3253 = vst.msk [vmem:[%s163 + $0xcc] sm:$0x1] %vm1967, %v3218
        %3254 = vst.msk [vmem:[%s163 + $0xdc] sm:$0x1] %vm1967, %v3220
        %3255 = vst.msk [vmem:[%s163 + $0xec] sm:$0x1] %vm1967, %v3222
        %3256 = vst.msk [vmem:[%s163 + $0xfc] sm:$0x1] %vm1967, %v3224
        %3257 = vrot.lane.b32.xlu0 %v2876, 22
        %v3258 = vpop.permute.xlu0 %3257
        %3259 = vrot.lane.b32.xlu0 %v2880, 22
        %v3260 = vpop.permute.xlu0 %3259
        %3261 = vrot.lane.b32.xlu0 %v2884, 22
        %v3262 = vpop.permute.xlu0 %3261
        %3263 = vrot.lane.b32.xlu0 %v2888, 22
        %v3264 = vpop.permute.xlu0 %3263
        %3265 = vrot.lane.b32.xlu0 %v2892, 22
        %v3266 = vpop.permute.xlu0 %3265
        %3267 = vrot.lane.b32.xlu0 %v2896, 22
        %v3268 = vpop.permute.xlu0 %3267
        %3269 = vrot.lane.b32.xlu0 %v2900, 22
        %v3270 = vpop.permute.xlu0 %3269
        %3271 = vrot.lane.b32.xlu0 %v2904, 22
        %v3272 = vpop.permute.xlu0 %3271
        %3273 = vrot.lane.b32.xlu0 %v2908, 22
        %v3274 = vpop.permute.xlu0 %3273
        %3275 = vrot.lane.b32.xlu0 %v2912, 22
        %v3276 = vpop.permute.xlu0 %3275
        %3277 = vrot.lane.b32.xlu0 %v2916, 22
        %v3278 = vpop.permute.xlu0 %3277
        %3279 = vrot.lane.b32.xlu0 %v2920, 22
        %v3280 = vpop.permute.xlu0 %3279
        %3281 = vrot.lane.b32.xlu0 %v2924, 22
        %v3282 = vpop.permute.xlu0 %3281
        %3283 = vrot.lane.b32.xlu0 %v2928, 22
        %v3284 = vpop.permute.xlu0 %3283
        %3285 = vrot.lane.b32.xlu0 %v2932, 22
        %v3286 = vpop.permute.xlu0 %3285
        %3287 = vrot.lane.b32.xlu0 %v2936, 22
        %v3288 = vpop.permute.xlu0 %3287
        %3305 = vst.msk [vmem:[%s163 + $0xd] sm:$0x1] %vm1967, %v3258
        %3306 = vst.msk [vmem:[%s163 + $0x1d] sm:$0x1] %vm1967, %v3260
        %3307 = vst.msk [vmem:[%s163 + $0x2d] sm:$0x1] %vm1967, %v3262
        %3308 = vst.msk [vmem:[%s163 + $0x3d] sm:$0x1] %vm1967, %v3264
        %3309 = vst.msk [vmem:[%s163 + $0x4d] sm:$0x1] %vm1967, %v3266
        %3310 = vst.msk [vmem:[%s163 + $0x5d] sm:$0x1] %vm1967, %v3268
        %3311 = vst.msk [vmem:[%s163 + $0x6d] sm:$0x1] %vm1967, %v3270
        %3312 = vst.msk [vmem:[%s163 + $0x7d] sm:$0x1] %vm1967, %v3272
        %3313 = vst.msk [vmem:[%s163 + $0x8d] sm:$0x1] %vm1967, %v3274
        %3314 = vst.msk [vmem:[%s163 + $0x9d] sm:$0x1] %vm1967, %v3276
        %3315 = vst.msk [vmem:[%s163 + $0xad] sm:$0x1] %vm1967, %v3278
        %3316 = vst.msk [vmem:[%s163 + $0xbd] sm:$0x1] %vm1967, %v3280
        %3317 = vst.msk [vmem:[%s163 + $0xcd] sm:$0x1] %vm1967, %v3282
        %3318 = vst.msk [vmem:[%s163 + $0xdd] sm:$0x1] %vm1967, %v3284
        %3319 = vst.msk [vmem:[%s163 + $0xed] sm:$0x1] %vm1967, %v3286
        %3320 = vst.msk [vmem:[%s163 + $0xfd] sm:$0x1] %vm1967, %v3288
        %v3323 = vcombine.low %v1846, %v1847
        %v3324 = vcombine.high %v1846, %v1847
        %v3326 = vunpack.c.l.s4 1966171168
        %v3327 = vunpack.c.0.s8 %v3326
        %v3328 = vlaneseq
        %v3329 = vshrl.u32 %v3328, 7
        %v3330 = vsub.s32 %v3327, %v3329
        %v3331 = vrot.slane %v3323, %v3330
        %v3333 = vunpack.c.l.s4 1966171168
        %v3334 = vunpack.c.0.s8 %v3333
        %v3335 = vlaneseq
        %v3336 = vshrl.u32 %v3335, 7
        %v3337 = vsub.s32 %v3334, %v3336
        %v3338 = vrot.slane %v3324, %v3337
        %v3339 = vcombine.high %v3331, %v3331
        %v3340 = vcombine.high %v3338, %v3338
        %v3342 = vunpack.c.l.s4 1966171168
        %v3343 = vunpack.c.0.s8 %v3342
        %v3344 = vlaneseq
        %v3345 = vshrl.u32 %v3344, 7
        %v3346 = vsub.s32 %v3343, %v3345
        %v3347 = vrot.slane %v3331, %v3346
        %v3349 = vunpack.c.l.s4 1966171168
        %v3350 = vunpack.c.0.s8 %v3349
        %v3351 = vlaneseq
        %v3352 = vshrl.u32 %v3351, 7
        %v3353 = vsub.s32 %v3350, %v3352
        %v3354 = vrot.slane %v3338, %v3353
        %v3356 = vunpack.c.l.s4 1966171168
        %v3357 = vunpack.c.0.s8 %v3356
        %v3358 = vlaneseq
        %v3359 = vshrl.u32 %v3358, 7
        %v3360 = vsub.s32 %v3357, %v3359
        %v3361 = vrot.slane %v3339, %v3360
        %v3363 = vunpack.c.l.s4 1966171168
        %v3364 = vunpack.c.0.s8 %v3363
        %v3365 = vlaneseq
        %v3366 = vshrl.u32 %v3365, 7
        %v3367 = vsub.s32 %v3364, %v3366
        %v3368 = vrot.slane %v3340, %v3367
        %v3369 = vcombine.high %v3347, %v3347
        %v3370 = vcombine.high %v3354, %v3354
        %v3371 = vcombine.high %v3361, %v3361
        %v3372 = vcombine.high %v3368, %v3368
        %v3373 = vcombine.low %v1849, %v1850
        %v3374 = vcombine.high %v1849, %v1850
        %v3376 = vunpack.c.l.s4 1966171168
        %v3377 = vunpack.c.0.s8 %v3376
        %v3378 = vlaneseq
        %v3379 = vshrl.u32 %v3378, 7
        %v3380 = vsub.s32 %v3377, %v3379
        %v3381 = vrot.slane %v3373, %v3380
        %v3383 = vunpack.c.l.s4 1966171168
        %v3384 = vunpack.c.0.s8 %v3383
        %v3385 = vlaneseq
        %v3386 = vshrl.u32 %v3385, 7
        %v3387 = vsub.s32 %v3384, %v3386
        %v3388 = vrot.slane %v3374, %v3387
        %v3389 = vcombine.high %v3381, %v3381
        %v3390 = vcombine.high %v3388, %v3388
        %v3392 = vunpack.c.l.s4 1966171168
        %v3393 = vunpack.c.0.s8 %v3392
        %v3394 = vlaneseq
        %v3395 = vshrl.u32 %v3394, 7
        %v3396 = vsub.s32 %v3393, %v3395
        %v3397 = vrot.slane %v3381, %v3396
        %v3399 = vunpack.c.l.s4 1966171168
        %v3400 = vunpack.c.0.s8 %v3399
        %v3401 = vlaneseq
        %v3402 = vshrl.u32 %v3401, 7
        %v3403 = vsub.s32 %v3400, %v3402
        %v3404 = vrot.slane %v3388, %v3403
        %v3406 = vunpack.c.l.s4 1966171168
        %v3407 = vunpack.c.0.s8 %v3406
        %v3408 = vlaneseq
        %v3409 = vshrl.u32 %v3408, 7
        %v3410 = vsub.s32 %v3407, %v3409
        %v3411 = vrot.slane %v3389, %v3410
        %v3413 = vunpack.c.l.s4 1966171168
        %v3414 = vunpack.c.0.s8 %v3413
        %v3415 = vlaneseq
        %v3416 = vshrl.u32 %v3415, 7
        %v3417 = vsub.s32 %v3414, %v3416
        %v3418 = vrot.slane %v3390, %v3417
        %v3419 = vcombine.high %v3397, %v3397
        %v3420 = vcombine.high %v3404, %v3404
        %v3421 = vcombine.high %v3411, %v3411
        %v3422 = vcombine.high %v3418, %v3418
        %v3423 = vlaneseq
        %v3424 = vshrl.u32 %v3423, 7
        %v3425 = vsub.s32 0, %v3424
        %v3426 = vrot.slane %v3347, %v3425
        %v3427 = vlaneseq
        %v3428 = vshrl.u32 %v3427, 7
        %v3429 = vsub.s32 1, %v3428
        %v3430 = vrot.slane %v3347, %v3429
        %v3431 = vlaneseq
        %v3432 = vshrl.u32 %v3431, 7
        %v3433 = vsub.s32 0, %v3432
        %v3434 = vrot.slane %v3361, %v3433
        %v3435 = vlaneseq
        %v3436 = vshrl.u32 %v3435, 7
        %v3437 = vsub.s32 1, %v3436
        %v3438 = vrot.slane %v3361, %v3437
        %v3439 = vlaneseq
        %v3440 = vshrl.u32 %v3439, 7
        %v3441 = vsub.s32 0, %v3440
        %v3442 = vrot.slane %v3369, %v3441
        %v3443 = vlaneseq
        %v3444 = vshrl.u32 %v3443, 7
        %v3445 = vsub.s32 1, %v3444
        %v3446 = vrot.slane %v3369, %v3445
        %v3447 = vlaneseq
        %v3448 = vshrl.u32 %v3447, 7
        %v3449 = vsub.s32 0, %v3448
        %v3450 = vrot.slane %v3371, %v3449
        %v3451 = vlaneseq
        %v3452 = vshrl.u32 %v3451, 7
        %v3453 = vsub.s32 1, %v3452
        %v3454 = vrot.slane %v3371, %v3453
        %v3455 = vlaneseq
        %v3456 = vshrl.u32 %v3455, 7
        %v3457 = vsub.s32 0, %v3456
        %v3458 = vrot.slane %v3354, %v3457
        %v3459 = vlaneseq
        %v3460 = vshrl.u32 %v3459, 7
        %v3461 = vsub.s32 1, %v3460
        %v3462 = vrot.slane %v3354, %v3461
        %v3463 = vlaneseq
        %v3464 = vshrl.u32 %v3463, 7
        %v3465 = vsub.s32 0, %v3464
        %v3466 = vrot.slane %v3368, %v3465
        %v3467 = vlaneseq
        %v3468 = vshrl.u32 %v3467, 7
        %v3469 = vsub.s32 1, %v3468
        %v3470 = vrot.slane %v3368, %v3469
        %v3471 = vlaneseq
        %v3472 = vshrl.u32 %v3471, 7
        %v3473 = vsub.s32 0, %v3472
        %v3474 = vrot.slane %v3370, %v3473
        %v3475 = vlaneseq
        %v3476 = vshrl.u32 %v3475, 7
        %v3477 = vsub.s32 1, %v3476
        %v3478 = vrot.slane %v3370, %v3477
        %v3479 = vlaneseq
        %v3480 = vshrl.u32 %v3479, 7
        %v3481 = vsub.s32 0, %v3480
        %v3482 = vrot.slane %v3372, %v3481
        %v3483 = vlaneseq
        %v3484 = vshrl.u32 %v3483, 7
        %v3485 = vsub.s32 1, %v3484
        %v3486 = vrot.slane %v3372, %v3485
        %v3487 = vlaneseq
        %v3488 = vshrl.u32 %v3487, 7
        %v3489 = vsub.s32 0, %v3488
        %v3490 = vrot.slane %v3397, %v3489
        %v3491 = vlaneseq
        %v3492 = vshrl.u32 %v3491, 7
        %v3493 = vsub.s32 1, %v3492
        %v3494 = vrot.slane %v3397, %v3493
        %v3495 = vlaneseq
        %v3496 = vshrl.u32 %v3495, 7
        %v3497 = vsub.s32 0, %v3496
        %v3498 = vrot.slane %v3411, %v3497
        %v3499 = vlaneseq
        %v3500 = vshrl.u32 %v3499, 7
        %v3501 = vsub.s32 1, %v3500
        %v3502 = vrot.slane %v3411, %v3501
        %v3503 = vlaneseq
        %v3504 = vshrl.u32 %v3503, 7
        %v3505 = vsub.s32 0, %v3504
        %v3506 = vrot.slane %v3419, %v3505
        %v3507 = vlaneseq
        %v3508 = vshrl.u32 %v3507, 7
        %v3509 = vsub.s32 1, %v3508
        %v3510 = vrot.slane %v3419, %v3509
        %v3511 = vlaneseq
        %v3512 = vshrl.u32 %v3511, 7
        %v3513 = vsub.s32 0, %v3512
        %v3514 = vrot.slane %v3421, %v3513
        %v3515 = vlaneseq
        %v3516 = vshrl.u32 %v3515, 7
        %v3517 = vsub.s32 1, %v3516
        %v3518 = vrot.slane %v3421, %v3517
        %v3519 = vlaneseq
        %v3520 = vshrl.u32 %v3519, 7
        %v3521 = vsub.s32 0, %v3520
        %v3522 = vrot.slane %v3404, %v3521
        %v3523 = vlaneseq
        %v3524 = vshrl.u32 %v3523, 7
        %v3525 = vsub.s32 1, %v3524
        %v3526 = vrot.slane %v3404, %v3525
        %v3527 = vlaneseq
        %v3528 = vshrl.u32 %v3527, 7
        %v3529 = vsub.s32 0, %v3528
        %v3530 = vrot.slane %v3418, %v3529
        %v3531 = vlaneseq
        %v3532 = vshrl.u32 %v3531, 7
        %v3533 = vsub.s32 1, %v3532
        %v3534 = vrot.slane %v3418, %v3533
        %v3535 = vlaneseq
        %v3536 = vshrl.u32 %v3535, 7
        %v3537 = vsub.s32 0, %v3536
        %v3538 = vrot.slane %v3420, %v3537
        %v3539 = vlaneseq
        %v3540 = vshrl.u32 %v3539, 7
        %v3541 = vsub.s32 1, %v3540
        %v3542 = vrot.slane %v3420, %v3541
        %v3543 = vlaneseq
        %v3544 = vshrl.u32 %v3543, 7
        %v3545 = vsub.s32 0, %v3544
        %v3546 = vrot.slane %v3422, %v3545
        %v3547 = vlaneseq
        %v3548 = vshrl.u32 %v3547, 7
        %v3549 = vsub.s32 1, %v3548
        %v3550 = vrot.slane %v3422, %v3549
        %3551 = vrot.lane.b32.xlu0 %v3426, 4
        %v3552 = vpop.permute.xlu0 %3551
        %3553 = vrot.lane.b32.xlu0 %v3430, 4
        %v3554 = vpop.permute.xlu0 %3553
        %3555 = vrot.lane.b32.xlu0 %v3434, 4
        %v3556 = vpop.permute.xlu0 %3555
        %3557 = vrot.lane.b32.xlu0 %v3438, 4
        %v3558 = vpop.permute.xlu0 %3557
        %3559 = vrot.lane.b32.xlu0 %v3442, 4
        %v3560 = vpop.permute.xlu0 %3559
        %3561 = vrot.lane.b32.xlu0 %v3446, 4
        %v3562 = vpop.permute.xlu0 %3561
        %3563 = vrot.lane.b32.xlu0 %v3450, 4
        %v3564 = vpop.permute.xlu0 %3563
        %3565 = vrot.lane.b32.xlu0 %v3454, 4
        %v3566 = vpop.permute.xlu0 %3565
        %3567 = vrot.lane.b32.xlu0 %v3458, 4
        %v3568 = vpop.permute.xlu0 %3567
        %3569 = vrot.lane.b32.xlu0 %v3462, 4
        %v3570 = vpop.permute.xlu0 %3569
        %3571 = vrot.lane.b32.xlu0 %v3466, 4
        %v3572 = vpop.permute.xlu0 %3571
        %3573 = vrot.lane.b32.xlu0 %v3470, 4
        %v3574 = vpop.permute.xlu0 %3573
        %3575 = vrot.lane.b32.xlu0 %v3474, 4
        %v3576 = vpop.permute.xlu0 %3575
        %3577 = vrot.lane.b32.xlu0 %v3478, 4
        %v3578 = vpop.permute.xlu0 %3577
        %3579 = vrot.lane.b32.xlu0 %v3482, 4
        %v3580 = vpop.permute.xlu0 %3579
        %3581 = vrot.lane.b32.xlu0 %v3486, 4
        %v3582 = vpop.permute.xlu0 %3581
        %3583 = vrot.lane.b32.xlu0 %v3490, 4
        %v3584 = vpop.permute.xlu0 %3583
        %3585 = vrot.lane.b32.xlu0 %v3494, 4
        %v3586 = vpop.permute.xlu0 %3585
        %3587 = vrot.lane.b32.xlu0 %v3498, 4
        %v3588 = vpop.permute.xlu0 %3587
        %3589 = vrot.lane.b32.xlu0 %v3502, 4
        %v3590 = vpop.permute.xlu0 %3589
        %3591 = vrot.lane.b32.xlu0 %v3506, 4
        %v3592 = vpop.permute.xlu0 %3591
        %3593 = vrot.lane.b32.xlu0 %v3510, 4
        %v3594 = vpop.permute.xlu0 %3593
        %3595 = vrot.lane.b32.xlu0 %v3514, 4
        %v3596 = vpop.permute.xlu0 %3595
        %3597 = vrot.lane.b32.xlu0 %v3518, 4
        %v3598 = vpop.permute.xlu0 %3597
        %3599 = vrot.lane.b32.xlu0 %v3522, 4
        %v3600 = vpop.permute.xlu0 %3599
        %3601 = vrot.lane.b32.xlu0 %v3526, 4
        %v3602 = vpop.permute.xlu0 %3601
        %3603 = vrot.lane.b32.xlu0 %v3530, 4
        %v3604 = vpop.permute.xlu0 %3603
        %3605 = vrot.lane.b32.xlu0 %v3534, 4
        %v3606 = vpop.permute.xlu0 %3605
        %3607 = vrot.lane.b32.xlu0 %v3538, 4
        %v3608 = vpop.permute.xlu0 %3607
        %3609 = vrot.lane.b32.xlu0 %v3542, 4
        %v3610 = vpop.permute.xlu0 %3609
        %3611 = vrot.lane.b32.xlu0 %v3546, 4
        %v3612 = vpop.permute.xlu0 %3611
        %3613 = vrot.lane.b32.xlu0 %v3550, 4
        %v3614 = vpop.permute.xlu0 %3613
        %v3615 = vsel %vm188, %v3552, %v3554
        %v3616 = vsel %vm188, %v3556, %v3558
        %v3617 = vsel %vm188, %v3560, %v3562
        %v3618 = vsel %vm188, %v3564, %v3566
        %v3619 = vsel %vm188, %v3568, %v3570
        %v3620 = vsel %vm188, %v3572, %v3574
        %v3621 = vsel %vm188, %v3576, %v3578
        %v3622 = vsel %vm188, %v3580, %v3582
        %v3623 = vsel %vm188, %v3584, %v3586
        %v3624 = vsel %vm188, %v3588, %v3590
        %v3625 = vsel %vm188, %v3592, %v3594
        %v3626 = vsel %vm188, %v3596, %v3598
        %v3627 = vsel %vm188, %v3600, %v3602
        %v3628 = vsel %vm188, %v3604, %v3606
        %v3629 = vsel %vm188, %v3608, %v3610
        %v3630 = vsel %vm188, %v3612, %v3614
        %3647 = vst.msk [vmem:[%s163 + $0xe] sm:$0x1] %vm1967, %v3615
        %3648 = vst.msk [vmem:[%s163 + $0x1e] sm:$0x1] %vm1967, %v3616
        %3649 = vst.msk [vmem:[%s163 + $0x2e] sm:$0x1] %vm1967, %v3617
        %3650 = vst.msk [vmem:[%s163 + $0x3e] sm:$0x1] %vm1967, %v3618
        %3651 = vst.msk [vmem:[%s163 + $0x4e] sm:$0x1] %vm1967, %v3619
        %3652 = vst.msk [vmem:[%s163 + $0x5e] sm:$0x1] %vm1967, %v3620
        %3653 = vst.msk [vmem:[%s163 + $0x6e] sm:$0x1] %vm1967, %v3621
        %3654 = vst.msk [vmem:[%s163 + $0x7e] sm:$0x1] %vm1967, %v3622
        %3655 = vst.msk [vmem:[%s163 + $0x8e] sm:$0x1] %vm1967, %v3623
        %3656 = vst.msk [vmem:[%s163 + $0x9e] sm:$0x1] %vm1967, %v3624
        %3657 = vst.msk [vmem:[%s163 + $0xae] sm:$0x1] %vm1967, %v3625
        %3658 = vst.msk [vmem:[%s163 + $0xbe] sm:$0x1] %vm1967, %v3626
        %3659 = vst.msk [vmem:[%s163 + $0xce] sm:$0x1] %vm1967, %v3627
        %3660 = vst.msk [vmem:[%s163 + $0xde] sm:$0x1] %vm1967, %v3628
        %3661 = vst.msk [vmem:[%s163 + $0xee] sm:$0x1] %vm1967, %v3629
        %3662 = vst.msk [vmem:[%s163 + $0xfe] sm:$0x1] %vm1967, %v3630
        %v3663 = vcombine.high %v1847, %v1847
        %v3665 = vunpack.c.l.s4 1966171168
        %v3666 = vunpack.c.0.s8 %v3665
        %v3667 = vlaneseq
        %v3668 = vshrl.u32 %v3667, 7
        %v3669 = vsub.s32 %v3666, %v3668
        %v3670 = vrot.slane %v1847, %v3669
        %v3672 = vunpack.c.l.s4 1966171168
        %v3673 = vunpack.c.0.s8 %v3672
        %v3674 = vlaneseq
        %v3675 = vshrl.u32 %v3674, 7
        %v3676 = vsub.s32 %v3673, %v3675
        %v3677 = vrot.slane %v3663, %v3676
        %v3678 = vcombine.high %v3670, %v3670
        %v3679 = vcombine.high %v3677, %v3677
        %v3681 = vunpack.c.l.s4 1966171168
        %v3682 = vunpack.c.0.s8 %v3681
        %v3683 = vlaneseq
        %v3684 = vshrl.u32 %v3683, 7
        %v3685 = vsub.s32 %v3682, %v3684
        %v3686 = vrot.slane %v3670, %v3685
        %v3688 = vunpack.c.l.s4 1966171168
        %v3689 = vunpack.c.0.s8 %v3688
        %v3690 = vlaneseq
        %v3691 = vshrl.u32 %v3690, 7
        %v3692 = vsub.s32 %v3689, %v3691
        %v3693 = vrot.slane %v3677, %v3692
        %v3695 = vunpack.c.l.s4 1966171168
        %v3696 = vunpack.c.0.s8 %v3695
        %v3697 = vlaneseq
        %v3698 = vshrl.u32 %v3697, 7
        %v3699 = vsub.s32 %v3696, %v3698
        %v3700 = vrot.slane %v3678, %v3699
        %v3702 = vunpack.c.l.s4 1966171168
        %v3703 = vunpack.c.0.s8 %v3702
        %v3704 = vlaneseq
        %v3705 = vshrl.u32 %v3704, 7
        %v3706 = vsub.s32 %v3703, %v3705
        %v3707 = vrot.slane %v3679, %v3706
        %v3708 = vcombine.high %v3686, %v3686
        %v3709 = vcombine.high %v3693, %v3693
        %v3710 = vcombine.high %v3700, %v3700
        %v3711 = vcombine.high %v3707, %v3707
        %v3712 = vcombine.high %v1850, %v1850
        %v3714 = vunpack.c.l.s4 1966171168
        %v3715 = vunpack.c.0.s8 %v3714
        %v3716 = vlaneseq
        %v3717 = vshrl.u32 %v3716, 7
        %v3718 = vsub.s32 %v3715, %v3717
        %v3719 = vrot.slane %v1850, %v3718
        %v3721 = vunpack.c.l.s4 1966171168
        %v3722 = vunpack.c.0.s8 %v3721
        %v3723 = vlaneseq
        %v3724 = vshrl.u32 %v3723, 7
        %v3725 = vsub.s32 %v3722, %v3724
        %v3726 = vrot.slane %v3712, %v3725
        %v3727 = vcombine.high %v3719, %v3719
        %v3728 = vcombine.high %v3726, %v3726
        %v3730 = vunpack.c.l.s4 1966171168
        %v3731 = vunpack.c.0.s8 %v3730
        %v3732 = vlaneseq
        %v3733 = vshrl.u32 %v3732, 7
        %v3734 = vsub.s32 %v3731, %v3733
        %v3735 = vrot.slane %v3719, %v3734
        %v3737 = vunpack.c.l.s4 1966171168
        %v3738 = vunpack.c.0.s8 %v3737
        %v3739 = vlaneseq
        %v3740 = vshrl.u32 %v3739, 7
        %v3741 = vsub.s32 %v3738, %v3740
        %v3742 = vrot.slane %v3726, %v3741
        %v3744 = vunpack.c.l.s4 1966171168
        %v3745 = vunpack.c.0.s8 %v3744
        %v3746 = vlaneseq
        %v3747 = vshrl.u32 %v3746, 7
        %v3748 = vsub.s32 %v3745, %v3747
        %v3749 = vrot.slane %v3727, %v3748
        %v3751 = vunpack.c.l.s4 1966171168
        %v3752 = vunpack.c.0.s8 %v3751
        %v3753 = vlaneseq
        %v3754 = vshrl.u32 %v3753, 7
        %v3755 = vsub.s32 %v3752, %v3754
        %v3756 = vrot.slane %v3728, %v3755
        %v3757 = vcombine.high %v3735, %v3735
        %v3758 = vcombine.high %v3742, %v3742
        %v3759 = vcombine.high %v3749, %v3749
        %v3760 = vcombine.high %v3756, %v3756
        %v3761 = vlaneseq
        %v3762 = vshrl.u32 %v3761, 7
        %v3763 = vsub.s32 0, %v3762
        %v3764 = vrot.slane %v3686, %v3763
        %v3765 = vlaneseq
        %v3766 = vshrl.u32 %v3765, 7
        %v3767 = vsub.s32 0, %v3766
        %v3768 = vrot.slane %v3700, %v3767
        %v3769 = vlaneseq
        %v3770 = vshrl.u32 %v3769, 7
        %v3771 = vsub.s32 0, %v3770
        %v3772 = vrot.slane %v3708, %v3771
        %v3773 = vlaneseq
        %v3774 = vshrl.u32 %v3773, 7
        %v3775 = vsub.s32 0, %v3774
        %v3776 = vrot.slane %v3710, %v3775
        %v3777 = vlaneseq
        %v3778 = vshrl.u32 %v3777, 7
        %v3779 = vsub.s32 0, %v3778
        %v3780 = vrot.slane %v3693, %v3779
        %v3781 = vlaneseq
        %v3782 = vshrl.u32 %v3781, 7
        %v3783 = vsub.s32 0, %v3782
        %v3784 = vrot.slane %v3707, %v3783
        %v3785 = vlaneseq
        %v3786 = vshrl.u32 %v3785, 7
        %v3787 = vsub.s32 0, %v3786
        %v3788 = vrot.slane %v3709, %v3787
        %v3789 = vlaneseq
        %v3790 = vshrl.u32 %v3789, 7
        %v3791 = vsub.s32 0, %v3790
        %v3792 = vrot.slane %v3711, %v3791
        %v3793 = vlaneseq
        %v3794 = vshrl.u32 %v3793, 7
        %v3795 = vsub.s32 0, %v3794
        %v3796 = vrot.slane %v3735, %v3795
        %v3797 = vlaneseq
        %v3798 = vshrl.u32 %v3797, 7
        %v3799 = vsub.s32 0, %v3798
        %v3800 = vrot.slane %v3749, %v3799
        %v3801 = vlaneseq
        %v3802 = vshrl.u32 %v3801, 7
        %v3803 = vsub.s32 0, %v3802
        %v3804 = vrot.slane %v3757, %v3803
        %v3805 = vlaneseq
        %v3806 = vshrl.u32 %v3805, 7
        %v3807 = vsub.s32 0, %v3806
        %v3808 = vrot.slane %v3759, %v3807
        %v3809 = vlaneseq
        %v3810 = vshrl.u32 %v3809, 7
        %v3811 = vsub.s32 0, %v3810
        %v3812 = vrot.slane %v3742, %v3811
        %v3813 = vlaneseq
        %v3814 = vshrl.u32 %v3813, 7
        %v3815 = vsub.s32 0, %v3814
        %v3816 = vrot.slane %v3756, %v3815
        %v3817 = vlaneseq
        %v3818 = vshrl.u32 %v3817, 7
        %v3819 = vsub.s32 0, %v3818
        %v3820 = vrot.slane %v3758, %v3819
        %v3821 = vlaneseq
        %v3822 = vshrl.u32 %v3821, 7
        %v3823 = vsub.s32 0, %v3822
        %v3824 = vrot.slane %v3760, %v3823
        %3825 = vrot.lane.b32.xlu0 %v3764, 114
        %v3826 = vpop.permute.xlu0 %3825
        %3827 = vrot.lane.b32.xlu0 %v3768, 114
        %v3828 = vpop.permute.xlu0 %3827
        %3829 = vrot.lane.b32.xlu0 %v3772, 114
        %v3830 = vpop.permute.xlu0 %3829
        %3831 = vrot.lane.b32.xlu0 %v3776, 114
        %v3832 = vpop.permute.xlu0 %3831
        %3833 = vrot.lane.b32.xlu0 %v3780, 114
        %v3834 = vpop.permute.xlu0 %3833
        %3835 = vrot.lane.b32.xlu0 %v3784, 114
        %v3836 = vpop.permute.xlu0 %3835
        %3837 = vrot.lane.b32.xlu0 %v3788, 114
        %v3838 = vpop.permute.xlu0 %3837
        %3839 = vrot.lane.b32.xlu0 %v3792, 114
        %v3840 = vpop.permute.xlu0 %3839
        %3841 = vrot.lane.b32.xlu0 %v3796, 114
        %v3842 = vpop.permute.xlu0 %3841
        %3843 = vrot.lane.b32.xlu0 %v3800, 114
        %v3844 = vpop.permute.xlu0 %3843
        %3845 = vrot.lane.b32.xlu0 %v3804, 114
        %v3846 = vpop.permute.xlu0 %3845
        %3847 = vrot.lane.b32.xlu0 %v3808, 114
        %v3848 = vpop.permute.xlu0 %3847
        %3849 = vrot.lane.b32.xlu0 %v3812, 114
        %v3850 = vpop.permute.xlu0 %3849
        %3851 = vrot.lane.b32.xlu0 %v3816, 114
        %v3852 = vpop.permute.xlu0 %3851
        %3853 = vrot.lane.b32.xlu0 %v3820, 114
        %v3854 = vpop.permute.xlu0 %3853
        %3855 = vrot.lane.b32.xlu0 %v3824, 114
        %v3856 = vpop.permute.xlu0 %3855
        %3873 = vst.msk [vmem:[%s163 + $0xf] sm:$0x1] %vm1967, %v3826
        %3874 = vst.msk [vmem:[%s163 + $0x1f] sm:$0x1] %vm1967, %v3828
        %3875 = vst.msk [vmem:[%s163 + $0x2f] sm:$0x1] %vm1967, %v3830
        %3876 = vst.msk [vmem:[%s163 + $0x3f] sm:$0x1] %vm1967, %v3832
        %3877 = vst.msk [vmem:[%s163 + $0x4f] sm:$0x1] %vm1967, %v3834
        %3878 = vst.msk [vmem:[%s163 + $0x5f] sm:$0x1] %vm1967, %v3836
        %3879 = vst.msk [vmem:[%s163 + $0x6f] sm:$0x1] %vm1967, %v3838
        %3880 = vst.msk [vmem:[%s163 + $0x7f] sm:$0x1] %vm1967, %v3840
        %3881 = vst.msk [vmem:[%s163 + $0x8f] sm:$0x1] %vm1967, %v3842
        %3882 = vst.msk [vmem:[%s163 + $0x9f] sm:$0x1] %vm1967, %v3844
        %3883 = vst.msk [vmem:[%s163 + $0xaf] sm:$0x1] %vm1967, %v3846
        %3884 = vst.msk [vmem:[%s163 + $0xbf] sm:$0x1] %vm1967, %v3848
        %3885 = vst.msk [vmem:[%s163 + $0xcf] sm:$0x1] %vm1967, %v3850
        %3886 = vst.msk [vmem:[%s163 + $0xdf] sm:$0x1] %vm1967, %v3852
        %3887 = vst.msk [vmem:[%s163 + $0xef] sm:$0x1] %vm1967, %v3854
        %3888 = vst.msk [vmem:[%s163 + $0xff] sm:$0x1] %vm1967, %v3856
        %s3889 = sand.u32 %s93, 1
        %s3890 = scalar_lea.sflag [#allocation3], %s3889
        %s3891 = sand.u32 %s93, 1
        %s3892 = smul.addr %s3891, 256
        %s3893 = scalar_lea.vmem [#allocation2], %s3892
        // Predicated region
        $region33: #{tpu_custom_call.1} parent=31 // pred_check
          %p3894 = pneg %p103
        $region34: #{tpu_custom_call.1} parent=31 // pred_check_branch
          %3896 = sbr.rel (%p3894) target = $region36
        $region35: #{tpu_custom_call.1} parent=31 // pred_region
          %s3898 = ssub.s32 4096, 4096
          %3899 = vsyncadd %s3890, %s3898
          %s3900 = smul.addr %s17, 32
          %s3901 = smul.addr %s3900, 128
          %s3902 = scalar_lea.hbm %s3, %s3901
          %s3903 = sshll.u32 %s3893, 4
          %s3904 = int_to_ptr.vmem [resolvable:$true] %s3903
          %3909 = dma.vmem_to_hbm [thread:$0]  %s3904, 4096, %s3902, %s3890, 128, 128, 8
        $region36: #{tpu_custom_call.1} parent=31 // pred_fallthru
          _
      $region32: #{tpu_custom_call.1} parent=5 // pred_fallthru
        _
      %p3910 = scmp.le.s32.totalorder 2, %s12
      // Predicated region
      $region37: #{tpu_custom_call.1} parent=5 // pred_check
        %p3911 = pneg %p3910
      $region38: #{tpu_custom_call.1} parent=5 // pred_check_branch
        %3913 = sbr.rel (%p3911) target = $region40
      $region39: #{tpu_custom_call.1} parent=5 // pred_region
        %s3914 = ssub.s32 %s12, 2
        // Predicated region
        $region41: #{tpu_custom_call.1} parent=39 // pred_check
          %p3915 = pneg %p109
        $region42: #{tpu_custom_call.1} parent=39 // pred_check_branch
          %3917 = sbr.rel (%p3915) target = $region44
        $region43: #{tpu_custom_call.1} parent=39 // pred_region
          %s3918 = sand.u32 %s94, 1
          %s3919 = scalar_lea.sflag [#allocation3], %s3918
          %s3920 = sand.u32 %s94, 1
          %s3921 = smul.addr %s3920, 256
          %s3922 = scalar_lea.vmem [#allocation2], %s3921
          %3923 = dma.done %s3919, 4096
        $region44: #{tpu_custom_call.1} parent=39 // pred_fallthru
          _
      $region40: #{tpu_custom_call.1} parent=5 // pred_fallthru
        _
    $region6: #{tpu_custom_call.1} parent=1 // loop_footer
      %s16 = sadd.s32 1, %s12
    $region7: #{tpu_custom_call.1} parent=1 // loop_footer_branch
      %11 = sbr.rel target = $region3
    $region8: #{tpu_custom_call.1} parent=1 // loop_exit
      _
    %3924 = vsyncpa [#allocation3], 1
    %s3925 = scalar_lea.sflag [#allocation3], 1
    %3926 = vsyncpa %s3925, 1

</llo_original>
